<compile_context>
chip_gen: v7x
topology: tpu7x:2x2x1
jax: 0.10.0
libtpu: 0.0.40
codegen_flags: <defaults>
</compile_context>

<pallas_src>
import functools

import jax
import jax.numpy as jnp
from jax import lax
from jax.experimental import pallas as pl
from jax.experimental.pallas import tpu as pltpu

EPS = 1e-5  # nn.BatchNorm2d default


def _basic_block_kernel(p1_ref, r_ref, w1_ref, w2_ref,
                        s1_ref, t1_ref, s2_ref, t2_ref, *rest,
                        bblk, ho, wo, cout, has_downsample):
    """Fused BasicBlock for one batch-block.

    p1_ref: (Bblk, Ho*Wo, 9*Cin)  im2col patches of x for conv1
    r_ref : (Bblk, Ho*Wo, Cr)     residual input (x itself, or strided x for 1x1 ds)
    w1_ref: (9*Cin, C)            conv1 weights (im2col layout)
    w2_ref: (3, 3*C, C)           conv2 weights, one row per ky, (kx, cin) flattened
    s*_ref/t*_ref: (1, C)         folded BatchNorm scale / shift
    rest  : [wds (Cr,C), sds (1,C), tds (1,C)] if downsample, then o_ref
    o_ref : (Bblk, Ho*Wo, C)
    """
    if has_downsample:
        wds_ref, sds_ref, tds_ref, o_ref = rest
    else:
        (o_ref,) = rest

    hw = ho * wo
    m = bblk * hw
    hp = ho + 2

    # ---- conv1 (single im2col matmul) + BN1 + ReLU ----
    y1 = jnp.dot(p1_ref[...].reshape(m, -1), w1_ref[...],
                 preferred_element_type=jnp.float32)          # [M, C] f32
    y1 = jnp.maximum(y1 * s1_ref[...] + t1_ref[...], 0.0)

    # ---- pad H with zero rows (W border handled below with roll + mask) ----
    zrow = jnp.zeros((bblk, 1, wo, cout), jnp.float32)
    ypad = jnp.concatenate([zrow, y1.reshape(bblk, ho, wo, cout), zrow], axis=1)
    ypad3 = ypad.reshape(bblk * hp, wo, cout)                 # merge major dims (free)

    # ---- three kx-shifted views (dx = kx-1) via sublane roll + border mask ----
    col = lax.broadcasted_iota(jnp.int32, (1, wo, 1), 1)
    shifted = []
    for dx in (-1, 0, 1):
        if dx == 0:
            ysh3 = ypad3
        else:
            rolled = pltpu.roll(ypad3, (-dx) % wo, axis=1)    # rolled[w] = ypad3[w+dx]
            valid = jnp.logical_and(col + dx >= 0, col + dx < wo)
            ysh3 = jnp.where(valid, rolled, 0.0)
        shifted.append(ysh3.reshape(bblk, hp, wo, cout))

    # ---- conv2: one matmul per kernel row ky, contraction over (kx, channel) ----
    cdt = w2_ref.dtype
    acc = jnp.zeros((m, cout), jnp.float32)
    for ky in range(3):
        row = jnp.concatenate(
            [ysh[:, ky:ky + ho, :, :].reshape(m, cout) for ysh in shifted],
            axis=-1)                                          # [M, 3*C]
        acc = acc + jnp.dot(row.astype(cdt), w2_ref[ky],
                            preferred_element_type=jnp.float32)

    # ---- BN2 (folded affine) ----
    y2 = acc * s2_ref[...] + t2_ref[...]

    # ---- residual ----
    if has_downsample:
        res = jnp.dot(r_ref[...].reshape(m, -1), wds_ref[...],
                      preferred_element_type=jnp.float32)
        res = res * sds_ref[...] + tds_ref[...]
    else:
        res = r_ref[...].reshape(m, cout).astype(jnp.float32)

    out = jnp.maximum(y2 + res, 0.0)
    o_ref[...] = out.reshape(bblk, hw, cout).astype(o_ref.dtype)


def basic_block_forward(x_nchw, params, *, stride=1, block_batch=None,
                        compute_dtype=jnp.float32):
    """Fused BasicBlock forward. x: [N, Cin, H, W] (NCHW). Returns [N, C, Ho, Wo] f32.

    params:
      "w1": [C, Cin, 3, 3] (PyTorch OIHW), "bn1": (gamma, beta, mean, var),
      "w2": [C, C, 3, 3],                  "bn2": (...),
      optional downsample: "wds": [C, Cin, 1, 1], "bnds": (...).
    """
    has_ds = "wds" in params
    n, cin, h, w = x_nchw.shape
    cout = params["w1"].shape[0]
    ho = (h + 2 - 3) // stride + 1
    wo = (w + 2 - 3) // stride + 1
    hw = ho * wo

    x = jnp.transpose(x_nchw, (0, 2, 3, 1)).astype(jnp.float32)   # NCHW -> NHWC

    # ---- wrapper-side im2col for conv1 (stride folded in; K = 9*Cin) ----
    xpad = jnp.pad(x, ((0, 0), (1, 1), (1, 1), (0, 0)))
    cols = []
    for ky in range(3):
        for kx in range(3):
            cols.append(xpad[:, ky:ky + (ho - 1) * stride + 1:stride,
                             kx:kx + (wo - 1) * stride + 1:stride, :])
    p1 = jnp.concatenate(cols, axis=-1).reshape(n, hw, 9 * cin).astype(compute_dtype)

    # ---- weights: OIHW -> HWIO, flattened for the kernel matmuls ----
    w1 = jnp.transpose(params["w1"], (2, 3, 1, 0)).reshape(9 * cin, cout)
    w1 = w1.astype(compute_dtype)
    w2 = jnp.transpose(params["w2"], (2, 3, 1, 0)).reshape(3, 3 * cout, cout)
    w2 = w2.astype(compute_dtype)

    # ---- fold inference-mode BatchNorm into per-channel scale/shift ----
    def fold(bn):
        gamma, beta, mean, var = bn
        s = gamma * lax.rsqrt(var.astype(jnp.float32) + EPS)
        return (s.reshape(1, cout).astype(jnp.float32),
                (beta - mean * s).reshape(1, cout).astype(jnp.float32))

    s1, t1 = fold(params["bn1"])
    s2, t2 = fold(params["bn2"])

    # ---- residual input ----
    if has_ds:
        r = x[:, ::stride, ::stride, :][:, :ho, :wo, :].reshape(n, hw, cin)
        r = r.astype(compute_dtype)
        wds = jnp.transpose(params["wds"], (2, 3, 1, 0)).reshape(cin, cout)
        wds = wds.astype(compute_dtype)
        sds, tds = fold(params["bnds"])
    else:
        assert stride == 1 and cin == cout, "identity residual needs matching shapes"
        r = x.reshape(n, hw, cout)                       # f32: exact identity residual

    # ---- batch blocking: M = Bblk*hw ~ 256..512, keep >=2 grid steps when possible ----
    if block_batch is None:
        target = max(1, 512 // hw)
        if n >= 2:
            target = max(1, min(target, n // 2))
        block_batch = max(d for d in range(1, n + 1) if n % d == 0 and d <= target)
    bblk = block_batch
    assert n % bblk == 0
    grid = (n // bblk,)

    in_arrays = [p1, r, w1, w2, s1, t1, s2, t2]
    in_specs = [
        pl.BlockSpec((bblk, hw, 9 * cin), lambda b: (b, 0, 0)),
        pl.BlockSpec((bblk, hw, r.shape[-1]), lambda b: (b, 0, 0)),
        pl.BlockSpec((9 * cin, cout), lambda b: (0, 0)),
        pl.BlockSpec((3, 3 * cout, cout), lambda b: (0, 0, 0)),
        pl.BlockSpec((1, cout), lambda b: (0, 0)),
        pl.BlockSpec((1, cout), lambda b: (0, 0)),
        pl.BlockSpec((1, cout), lambda b: (0, 0)),
        pl.BlockSpec((1, cout), lambda b: (0, 0)),
    ]
    if has_ds:
        in_arrays += [wds, sds, tds]
        in_specs += [
            pl.BlockSpec((cin, cout), lambda b: (0, 0)),
            pl.BlockSpec((1, cout), lambda b: (0, 0)),
            pl.BlockSpec((1, cout), lambda b: (0, 0)),
        ]

    kernel = functools.partial(_basic_block_kernel, bblk=bblk, ho=ho, wo=wo,
                               cout=cout, has_downsample=has_ds)

    out = pl.pallas_call(
        kernel,
        out_shape=jax.ShapeDtypeStruct((n, hw, cout), jnp.float32),
        grid=grid,
        in_specs=in_specs,
        out_specs=pl.BlockSpec((bblk, hw, cout), lambda b: (b, 0, 0)),
        compiler_params=pltpu.CompilerParams(dimension_semantics=("parallel",)),
    )(*in_arrays)

    return jnp.transpose(out.reshape(n, ho, wo, cout), (0, 3, 1, 2))   # -> NCHW


# ---------------- pure-JAX reference (f32, eval-mode BN) ----------------
def _bn_ref(y, bn):
    gamma, beta, mean, var = bn
    return (y - mean) * lax.rsqrt(var + EPS) * gamma + beta


def reference_basic_block(x_nchw, params, *, stride=1):
    dn = ("NHWC", "HWIO", "NHWC")
    hp = lax.Precision.HIGHEST
    x = jnp.transpose(x_nchw, (0, 2, 3, 1)).astype(jnp.float32)
    w1 = jnp.transpose(params["w1"], (2, 3, 1, 0))
    y = lax.conv_general_dilated(x, w1, (stride, stride), ((1, 1), (1, 1)),
                                 dimension_numbers=dn, precision=hp)
    y = jnp.maximum(_bn_ref(y, params["bn1"]), 0.0)
    w2 = jnp.transpose(params["w2"], (2, 3, 1, 0))
    y = lax.conv_general_dilated(y, w2, (1, 1), ((1, 1), (1, 1)),
                                 dimension_numbers=dn, precision=hp)
    y = _bn_ref(y, params["bn2"])
    if "wds" in params:
        wds = jnp.transpose(params["wds"], (2, 3, 1, 0))
        res = lax.conv_general_dilated(x, wds, (stride, stride), ((0, 0), (0, 0)),
                                       dimension_numbers=dn, precision=hp)
        res = _bn_ref(res, params["bnds"])
    else:
        res = x
    out = jnp.maximum(y + res, 0.0)
    return jnp.transpose(out, (0, 3, 1, 2))


if __name__ == "__main__":
    key = jax.random.PRNGKey(0)

    def conv_w(k, cout, cin, ksz):
        fan_in = jnp.float32(cin * ksz * ksz)
        return jax.random.normal(k, (cout, cin, ksz, ksz), jnp.float32) / jnp.sqrt(fan_in)

    def bn_p(k, c):
        k1, k2, k3, k4 = jax.random.split(k, 4)
        gamma = 1.0 + 0.1 * jax.random.normal(k1, (c,), jnp.float32)
        beta = 0.1 * jax.random.normal(k2, (c,), jnp.float32)
        mean = 0.1 * jax.random.normal(k3, (c,), jnp.float32)
        var = jax.random.uniform(k4, (c,), jnp.float32, minval=0.5, maxval=1.5)
        return (gamma, beta, mean, var)

    keys = jax.random.split(key, 12)

    # --- Config A: identity residual (inplanes = planes = 64, stride = 1) ---
    N, Cin, H, W = 4, 64, 16, 16
    C = 64
    xA = jax.random.normal(keys[0], (N, Cin, H, W), jnp.float32)
    pA = dict(w1=conv_w(keys[1], C, Cin, 3), bn1=bn_p(keys[2], C),
              w2=conv_w(keys[3], C, C, 3), bn2=bn_p(keys[4], C))
    outA = jax.block_until_ready(basic_block_forward(xA, pA, stride=1))
    refA = reference_basic_block(xA, pA, stride=1)
    assert outA.shape == (N, C, H, W), outA.shape
    errA = float(jnp.max(jnp.abs(outA - refA)))
    assert jnp.allclose(outA, refA, atol=5e-3, rtol=5e-3), errA

    # --- Config B: downsample residual (64 -> 128, stride = 2, 1x1 conv + BN) ---
    CinB, CB, strideB = 64, 128, 2
    xB = jax.random.normal(keys[5], (N, CinB, H, W), jnp.float32)
    pB = dict(w1=conv_w(keys[6], CB, CinB, 3), bn1=bn_p(keys[7], CB),
              w2=conv_w(keys[8], CB, CB, 3), bn2=bn_p(keys[9], CB),
              wds=conv_w(keys[10], CB, CinB, 1), bnds=bn_p(keys[11], CB))
    refB = reference_basic_block(xB, pB, stride=strideB)

    outB = jax.block_until_ready(basic_block_forward(xB, pB, stride=strideB))
    assert outB.shape == (N, CB, H // 2, W // 2), outB.shape
    errB = float(jnp.max(jnp.abs(outB - refB)))
    assert jnp.allclose(outB, refB, atol=5e-3, rtol=5e-3), errB

    # --- Config B with bf16 MXU operands (f32 accumulation / f32 epilogue) ---
    outB16 = jax.block_until_ready(
        basic_block_forward(xB, pB, stride=strideB, compute_dtype=jnp.bfloat16))
    errB16 = float(jnp.max(jnp.abs(outB16 - refB)))
    assert jnp.allclose(outB16, refB, atol=5e-2, rtol=5e-2), errB16

    print("KERNEL_OK")
</pallas_src>

<mosaic_0001>
module attributes {stable_mosaic.version = 11 : i64} {
  func.func @_basic_block_kernel(%arg0: i32, %arg1: memref<2x256x576xf32, #tpu.memory_space<vmem>>, %arg2: memref<2x256x64xf32, #tpu.memory_space<vmem>>, %arg3: memref<576x64xf32, #tpu.memory_space<vmem>>, %arg4: memref<3x192x64xf32, #tpu.memory_space<vmem>>, %arg5: memref<1x64xf32, #tpu.memory_space<vmem>>, %arg6: memref<1x64xf32, #tpu.memory_space<vmem>>, %arg7: memref<1x64xf32, #tpu.memory_space<vmem>>, %arg8: memref<1x64xf32, #tpu.memory_space<vmem>>, %arg9: memref<2x256x64xf32, #tpu.memory_space<vmem>>) attributes {dimension_semantics = [#tpu.dimension_semantics<parallel>], iteration_bounds = array<i64: 2>, scalar_prefetch = 0 : i64, scratch_operands = 0 : i64, tpu.core_type = #tpu.core_type<tc>, window_params = [{transform_indices = @transform_0, window_bounds = array<i64: 2, 256, 576>}, {transform_indices = @transform_1, window_bounds = array<i64: 2, 256, 64>}, {pipeline_mode = #tpu.pipeline_mode<synchronous>, transform_indices = @transform_2, window_bounds = array<i64: 576, 64>}, {pipeline_mode = #tpu.pipeline_mode<synchronous>, transform_indices = @transform_3, window_bounds = array<i64: 3, 192, 64>}, {pipeline_mode = #tpu.pipeline_mode<synchronous>, transform_indices = @transform_4, window_bounds = array<i64: 1, 64>}, {pipeline_mode = #tpu.pipeline_mode<synchronous>, transform_indices = @transform_5, window_bounds = array<i64: 1, 64>}, {pipeline_mode = #tpu.pipeline_mode<synchronous>, transform_indices = @transform_6, window_bounds = array<i64: 1, 64>}, {pipeline_mode = #tpu.pipeline_mode<synchronous>, transform_indices = @transform_7, window_bounds = array<i64: 1, 64>}, {transform_indices = @transform_8, window_bounds = array<i64: 2, 256, 64>}]} {
    %c0 = arith.constant 0 : index
    %c0_0 = arith.constant 0 : index
    %c0_1 = arith.constant 0 : index
    %0 = vector.load %arg1[%c0, %c0_0, %c0_1] : memref<2x256x576xf32, #tpu.memory_space<vmem>>, vector<2x256x576xf32>
    %1 = vector.shape_cast %0 : vector<2x256x576xf32> to vector<512x576xf32>
    %c0_2 = arith.constant 0 : index
    %c0_3 = arith.constant 0 : index
    %2 = vector.load %arg3[%c0_2, %c0_3] : memref<576x64xf32, #tpu.memory_space<vmem>>, vector<576x64xf32>
    %cst = arith.constant dense<0.000000e+00> : vector<512x64xf32>
    %3 = tpu.matmul %1, %2, %cst {dimension_numbers = #tpu.dot_dimension_numbers<[1], [0], [0], [1], [0, 0, 1, 1], [], []>} : vector<512x576xf32>, vector<576x64xf32>, vector<512x64xf32> -> vector<512x64xf32>
    %c0_4 = arith.constant 0 : index
    %c0_5 = arith.constant 0 : index
    %4 = vector.load %arg5[%c0_4, %c0_5] : memref<1x64xf32, #tpu.memory_space<vmem>>, vector<1x64xf32>
    %5 = vector.broadcast %4 : vector<1x64xf32> to vector<512x64xf32>
    %6 = arith.mulf %3, %5 : vector<512x64xf32>
    %c0_6 = arith.constant 0 : index
    %c0_7 = arith.constant 0 : index
    %7 = vector.load %arg6[%c0_6, %c0_7] : memref<1x64xf32, #tpu.memory_space<vmem>>, vector<1x64xf32>
    %8 = vector.broadcast %7 : vector<1x64xf32> to vector<512x64xf32>
    %9 = arith.addf %6, %8 : vector<512x64xf32>
    %cst_8 = arith.constant 0.000000e+00 : f32
    %10 = vector.broadcast %cst_8 : f32 to vector<512x64xf32>
    %11 = arith.maximumf %9, %10 : vector<512x64xf32>
    %cst_9 = arith.constant 0.000000e+00 : f32
    %12 = vector.broadcast %cst_9 : f32 to vector<2x1x16x64xf32>
    %13 = vector.shape_cast %11 : vector<512x64xf32> to vector<2x16x16x64xf32>
    %14 = tpu.concatenate %12, %13, %12 in 1 : vector<2x1x16x64xf32>, vector<2x16x16x64xf32>, vector<2x1x16x64xf32> -> vector<2x18x16x64xf32>
    %15 = vector.shape_cast %14 : vector<2x18x16x64xf32> to vector<36x16x64xf32>
    %16 = tpu.iota {dimensions = array<i32: 1>} : vector<1x16x1xi32>
    %c1_i32 = arith.constant 1 : i32
    %17 = tpu.dynamic_rotate %15 by %c1_i32 dim 1 : vector<36x16x64xf32>, i32 -> vector<36x16x64xf32>
    %c-1_i32 = arith.constant -1 : i32
    %18 = vector.broadcast %c-1_i32 : i32 to vector<1x16x1xi32>
    %19 = arith.addi %16, %18 : vector<1x16x1xi32>
    %c0_i32 = arith.constant 0 : i32
    %20 = vector.broadcast %c0_i32 : i32 to vector<1x16x1xi32>
    %21 = arith.cmpi sge, %19, %20 : vector<1x16x1xi32>
    %c-1_i32_10 = arith.constant -1 : i32
    %22 = vector.broadcast %c-1_i32_10 : i32 to vector<1x16x1xi32>
    %23 = arith.addi %16, %22 : vector<1x16x1xi32>
    %c16_i32 = arith.constant 16 : i32
    %24 = vector.broadcast %c16_i32 : i32 to vector<1x16x1xi32>
    %25 = arith.cmpi slt, %23, %24 : vector<1x16x1xi32>
    %26 = arith.andi %21, %25 : vector<1x16x1xi1>
    %cst_11 = arith.constant 0.000000e+00 : f32
    %27 = vector.shape_cast %26 : vector<1x16x1xi1> to vector<1x16x1xi1>
    %28 = vector.broadcast %27 : vector<1x16x1xi1> to vector<36x16x64xi1>
    %29 = vector.broadcast %cst_11 : f32 to vector<36x16x64xf32>
    %30 = arith.select %28, %17, %29 : vector<36x16x64xi1>, vector<36x16x64xf32>
    %31 = vector.shape_cast %30 : vector<36x16x64xf32> to vector<2x18x16x64xf32>
    %32 = vector.shape_cast %15 : vector<36x16x64xf32> to vector<2x18x16x64xf32>
    %c15_i32 = arith.constant 15 : i32
    %33 = tpu.dynamic_rotate %15 by %c15_i32 dim 1 : vector<36x16x64xf32>, i32 -> vector<36x16x64xf32>
    %c1_i32_12 = arith.constant 1 : i32
    %34 = vector.broadcast %c1_i32_12 : i32 to vector<1x16x1xi32>
    %35 = arith.addi %16, %34 : vector<1x16x1xi32>
    %c0_i32_13 = arith.constant 0 : i32
    %36 = vector.broadcast %c0_i32_13 : i32 to vector<1x16x1xi32>
    %37 = arith.cmpi sge, %35, %36 : vector<1x16x1xi32>
    %c1_i32_14 = arith.constant 1 : i32
    %38 = vector.broadcast %c1_i32_14 : i32 to vector<1x16x1xi32>
    %39 = arith.addi %16, %38 : vector<1x16x1xi32>
    %c16_i32_15 = arith.constant 16 : i32
    %40 = vector.broadcast %c16_i32_15 : i32 to vector<1x16x1xi32>
    %41 = arith.cmpi slt, %39, %40 : vector<1x16x1xi32>
    %42 = arith.andi %37, %41 : vector<1x16x1xi1>
    %cst_16 = arith.constant 0.000000e+00 : f32
    %43 = vector.shape_cast %42 : vector<1x16x1xi1> to vector<1x16x1xi1>
    %44 = vector.broadcast %43 : vector<1x16x1xi1> to vector<36x16x64xi1>
    %45 = vector.broadcast %cst_16 : f32 to vector<36x16x64xf32>
    %46 = arith.select %44, %33, %45 : vector<36x16x64xi1>, vector<36x16x64xf32>
    %47 = vector.shape_cast %46 : vector<36x16x64xf32> to vector<2x18x16x64xf32>
    %cst_17 = arith.constant 0.000000e+00 : f32
    %48 = vector.broadcast %cst_17 : f32 to vector<512x64xf32>
    %49 = vector.extract_strided_slice %31 {offsets = [0, 0, 0, 0], sizes = [2, 16, 16, 64], strides = [1, 1, 1, 1]} : vector<2x18x16x64xf32> to vector<2x16x16x64xf32>
    %50 = vector.shape_cast %49 : vector<2x16x16x64xf32> to vector<512x64xf32>
    %51 = vector.extract_strided_slice %32 {offsets = [0, 0, 0, 0], sizes = [2, 16, 16, 64], strides = [1, 1, 1, 1]} : vector<2x18x16x64xf32> to vector<2x16x16x64xf32>
    %52 = vector.shape_cast %51 : vector<2x16x16x64xf32> to vector<512x64xf32>
    %53 = vector.extract_strided_slice %47 {offsets = [0, 0, 0, 0], sizes = [2, 16, 16, 64], strides = [1, 1, 1, 1]} : vector<2x18x16x64xf32> to vector<2x16x16x64xf32>
    %54 = vector.shape_cast %53 : vector<2x16x16x64xf32> to vector<512x64xf32>
    %55 = tpu.concatenate %50, %52, %54 in 1 : vector<512x64xf32>, vector<512x64xf32>, vector<512x64xf32> -> vector<512x192xf32>
    %c0_18 = arith.constant 0 : index
    %c0_19 = arith.constant 0 : index
    %c0_20 = arith.constant 0 : index
    %56 = vector.load %arg4[%c0_18, %c0_19, %c0_20] : memref<3x192x64xf32, #tpu.memory_space<vmem>>, vector<1x192x64xf32>
    %57 = vector.shape_cast %56 : vector<1x192x64xf32> to vector<192x64xf32>
    %cst_21 = arith.constant dense<0.000000e+00> : vector<512x64xf32>
    %58 = tpu.matmul %55, %57, %cst_21 {dimension_numbers = #tpu.dot_dimension_numbers<[1], [0], [0], [1], [0, 0, 1, 1], [], []>} : vector<512x192xf32>, vector<192x64xf32>, vector<512x64xf32> -> vector<512x64xf32>
    %59 = arith.addf %48, %58 : vector<512x64xf32>
    %60 = vector.extract_strided_slice %31 {offsets = [0, 1, 0, 0], sizes = [2, 16, 16, 64], strides = [1, 1, 1, 1]} : vector<2x18x16x64xf32> to vector<2x16x16x64xf32>
    %61 = vector.shape_cast %60 : vector<2x16x16x64xf32> to vector<512x64xf32>
    %62 = vector.extract_strided_slice %32 {offsets = [0, 1, 0, 0], sizes = [2, 16, 16, 64], strides = [1, 1, 1, 1]} : vector<2x18x16x64xf32> to vector<2x16x16x64xf32>
    %63 = vector.shape_cast %62 : vector<2x16x16x64xf32> to vector<512x64xf32>
    %64 = vector.extract_strided_slice %47 {offsets = [0, 1, 0, 0], sizes = [2, 16, 16, 64], strides = [1, 1, 1, 1]} : vector<2x18x16x64xf32> to vector<2x16x16x64xf32>
    %65 = vector.shape_cast %64 : vector<2x16x16x64xf32> to vector<512x64xf32>
    %66 = tpu.concatenate %61, %63, %65 in 1 : vector<512x64xf32>, vector<512x64xf32>, vector<512x64xf32> -> vector<512x192xf32>
    %c1 = arith.constant 1 : index
    %c0_22 = arith.constant 0 : index
    %c0_23 = arith.constant 0 : index
    %67 = vector.load %arg4[%c1, %c0_22, %c0_23] : memref<3x192x64xf32, #tpu.memory_space<vmem>>, vector<1x192x64xf32>
    %68 = vector.shape_cast %67 : vector<1x192x64xf32> to vector<192x64xf32>
    %cst_24 = arith.constant dense<0.000000e+00> : vector<512x64xf32>
    %69 = tpu.matmul %66, %68, %cst_24 {dimension_numbers = #tpu.dot_dimension_numbers<[1], [0], [0], [1], [0, 0, 1, 1], [], []>} : vector<512x192xf32>, vector<192x64xf32>, vector<512x64xf32> -> vector<512x64xf32>
    %70 = arith.addf %59, %69 : vector<512x64xf32>
    %71 = vector.extract_strided_slice %31 {offsets = [0, 2, 0, 0], sizes = [2, 16, 16, 64], strides = [1, 1, 1, 1]} : vector<2x18x16x64xf32> to vector<2x16x16x64xf32>
    %72 = vector.shape_cast %71 : vector<2x16x16x64xf32> to vector<512x64xf32>
    %73 = vector.extract_strided_slice %32 {offsets = [0, 2, 0, 0], sizes = [2, 16, 16, 64], strides = [1, 1, 1, 1]} : vector<2x18x16x64xf32> to vector<2x16x16x64xf32>
    %74 = vector.shape_cast %73 : vector<2x16x16x64xf32> to vector<512x64xf32>
    %75 = vector.extract_strided_slice %47 {offsets = [0, 2, 0, 0], sizes = [2, 16, 16, 64], strides = [1, 1, 1, 1]} : vector<2x18x16x64xf32> to vector<2x16x16x64xf32>
    %76 = vector.shape_cast %75 : vector<2x16x16x64xf32> to vector<512x64xf32>
    %77 = tpu.concatenate %72, %74, %76 in 1 : vector<512x64xf32>, vector<512x64xf32>, vector<512x64xf32> -> vector<512x192xf32>
    %c2 = arith.constant 2 : index
    %c0_25 = arith.constant 0 : index
    %c0_26 = arith.constant 0 : index
    %78 = vector.load %arg4[%c2, %c0_25, %c0_26] : memref<3x192x64xf32, #tpu.memory_space<vmem>>, vector<1x192x64xf32>
    %79 = vector.shape_cast %78 : vector<1x192x64xf32> to vector<192x64xf32>
    %cst_27 = arith.constant dense<0.000000e+00> : vector<512x64xf32>
    %80 = tpu.matmul %77, %79, %cst_27 {dimension_numbers = #tpu.dot_dimension_numbers<[1], [0], [0], [1], [0, 0, 1, 1], [], []>} : vector<512x192xf32>, vector<192x64xf32>, vector<512x64xf32> -> vector<512x64xf32>
    %81 = arith.addf %70, %80 : vector<512x64xf32>
    %c0_28 = arith.constant 0 : index
    %c0_29 = arith.constant 0 : index
    %82 = vector.load %arg7[%c0_28, %c0_29] : memref<1x64xf32, #tpu.memory_space<vmem>>, vector<1x64xf32>
    %83 = vector.broadcast %82 : vector<1x64xf32> to vector<512x64xf32>
    %84 = arith.mulf %81, %83 : vector<512x64xf32>
    %c0_30 = arith.constant 0 : index
    %c0_31 = arith.constant 0 : index
    %85 = vector.load %arg8[%c0_30, %c0_31] : memref<1x64xf32, #tpu.memory_space<vmem>>, vector<1x64xf32>
    %86 = vector.broadcast %85 : vector<1x64xf32> to vector<512x64xf32>
    %87 = arith.addf %84, %86 : vector<512x64xf32>
    %c0_32 = arith.constant 0 : index
    %c0_33 = arith.constant 0 : index
    %c0_34 = arith.constant 0 : index
    %88 = vector.load %arg2[%c0_32, %c0_33, %c0_34] : memref<2x256x64xf32, #tpu.memory_space<vmem>>, vector<2x256x64xf32>
    %89 = vector.shape_cast %88 : vector<2x256x64xf32> to vector<512x64xf32>
    %90 = arith.addf %87, %89 : vector<512x64xf32>
    %cst_35 = arith.constant 0.000000e+00 : f32
    %91 = vector.broadcast %cst_35 : f32 to vector<512x64xf32>
    %92 = arith.maximumf %90, %91 : vector<512x64xf32>
    %93 = vector.shape_cast %92 : vector<512x64xf32> to vector<2x256x64xf32>
    %c0_36 = arith.constant 0 : index
    %c0_37 = arith.constant 0 : index
    %c0_38 = arith.constant 0 : index
    %94 = vector.load %arg9[%c0_36, %c0_37, %c0_38] : memref<2x256x64xf32, #tpu.memory_space<vmem>>, vector<2x256x64xf32>
    tpu.vector_store %arg9[%c0_36, %c0_37, %c0_38], %93 {strides = array<i32>} : memref<2x256x64xf32, #tpu.memory_space<vmem>>, vector<2x256x64xf32>,
    return
  }
  func.func @transform_0(%arg0: i32) -> (i32, i32, i32) {
    %c0_i32 = arith.constant 0 : i32
    %c0_i32_0 = arith.constant 0 : i32
    %c0_i32_1 = arith.constant 0 : i32
    return %arg0, %c0_i32, %c0_i32_0 : i32, i32, i32
  }
  func.func @transform_1(%arg0: i32) -> (i32, i32, i32) {
    %c0_i32 = arith.constant 0 : i32
    %c0_i32_0 = arith.constant 0 : i32
    %c0_i32_1 = arith.constant 0 : i32
    return %arg0, %c0_i32, %c0_i32_0 : i32, i32, i32
  }
  func.func @transform_2(%arg0: i32) -> (i32, i32) {
    %c0_i32 = arith.constant 0 : i32
    %c0_i32_0 = arith.constant 0 : i32
    %c0_i32_1 = arith.constant 0 : i32
    return %c0_i32, %c0_i32_0 : i32, i32
  }
  func.func @transform_3(%arg0: i32) -> (i32, i32, i32) {
    %c0_i32 = arith.constant 0 : i32
    %c0_i32_0 = arith.constant 0 : i32
    %c0_i32_1 = arith.constant 0 : i32
    %c0_i32_2 = arith.constant 0 : i32
    return %c0_i32, %c0_i32_0, %c0_i32_1 : i32, i32, i32
  }
  func.func @transform_4(%arg0: i32) -> (i32, i32) {
    %c0_i32 = arith.constant 0 : i32
    %c0_i32_0 = arith.constant 0 : i32
    %c0_i32_1 = arith.constant 0 : i32
    return %c0_i32, %c0_i32_0 : i32, i32
  }
  func.func @transform_5(%arg0: i32) -> (i32, i32) {
    %c0_i32 = arith.constant 0 : i32
    %c0_i32_0 = arith.constant 0 : i32
    %c0_i32_1 = arith.constant 0 : i32
    return %c0_i32, %c0_i32_0 : i32, i32
  }
  func.func @transform_6(%arg0: i32) -> (i32, i32) {
    %c0_i32 = arith.constant 0 : i32
    %c0_i32_0 = arith.constant 0 : i32
    %c0_i32_1 = arith.constant 0 : i32
    return %c0_i32, %c0_i32_0 : i32, i32
  }
  func.func @transform_7(%arg0: i32) -> (i32, i32) {
    %c0_i32 = arith.constant 0 : i32
    %c0_i32_0 = arith.constant 0 : i32
    %c0_i32_1 = arith.constant 0 : i32
    return %c0_i32, %c0_i32_0 : i32, i32
  }
  func.func @transform_8(%arg0: i32) -> (i32, i32, i32) {
    %c0_i32 = arith.constant 0 : i32
    %c0_i32_0 = arith.constant 0 : i32
    %c0_i32_1 = arith.constant 0 : i32
    return %arg0, %c0_i32, %c0_i32_0 : i32, i32, i32
  }
}

</mosaic_0001>

<llo_original>
// kernel: tpu_custom_call.1
$region0: #{tpu_custom_call.1}
  #allocation0 [shape = 'u32[]', space=smem, size = 0x4, offset = 0x4, fixed_abs, tag = 'smem constant byte address 0x4 - core index']
  #allocation1 [shape = 'u32[144,128]{1,0:T(1,128)}', space=vmem, size = 0x12000, scoped, tag = 'internal scratch']
  %s0 = inlined_call_operand.vmem [shape: f32[4,256,576], index: 0, kind: input, shape index: {}]
  %s1 = inlined_call_operand.vmem [shape: f32[4,256,64], index: 1, kind: input, shape index: {}]
  %s2 = inlined_call_operand.vmem [shape: f32[576,64], index: 2, kind: input, shape index: {}]
  %s3 = inlined_call_operand.vmem [shape: f32[3,192,64], index: 3, kind: input, shape index: {}]
  %s4 = inlined_call_operand.vmem [shape: f32[1,64], index: 4, kind: input, shape index: {}]
  %s5 = inlined_call_operand.vmem [shape: f32[1,64], index: 5, kind: input, shape index: {}]
  %s6 = inlined_call_operand.vmem [shape: f32[1,64], index: 6, kind: input, shape index: {}]
  %s7 = inlined_call_operand.vmem [shape: f32[1,64], index: 7, kind: input, shape index: {}]
  %s8 = inlined_call_operand.vmem [shape: f32[4,256,64], index: 8, kind: output, shape index: {}]
  %s9 = sld [smem:[#allocation0]]
  $region65: #{tpu_custom_call.1} parent=0
    _
  %s11 = ssub.s32 1, %s9
  %s12 = scalar_select 0, %s11, %s9
  loop: start=0, step=1, limit=4
  $region2: #{tpu_custom_call.1} parent=0 // loop_pre_header
    _
  $region3: #{tpu_custom_call.1} parent=0 // loop_header
    %s14 = sphi 0, %s18
    %p15 = scmp.ge.s32.totalorder %s14, 4
    %s24 = sphi 0, %s26
    %s27 = sphi 0, %s24
    %s28 = sphi 0, %s27
    %s44 = sphi 0, %s28
    %s50 = sphi 0, %s52
    %s53 = sphi 0, %s50
    %s54 = sphi 0, %s53
    %s70 = sphi 0, %s54
    %s74 = sphi 0, %s74
    %s76 = sphi 0, %s74
    %s77 = sphi 0, %s76
    %s91 = sphi 0, %s77
    %s95 = sphi 0, %s95
    %s97 = sphi 0, %s95
    %s98 = sphi 0, %s97
    %s112 = sphi 0, %s98
    %s116 = sphi 0, %s116
    %s118 = sphi 0, %s116
    %s119 = sphi 0, %s118
    %s133 = sphi 0, %s119
    %s137 = sphi 0, %s137
    %s139 = sphi 0, %s137
    %s140 = sphi 0, %s139
    %s154 = sphi 0, %s140
    %s158 = sphi 0, %s158
    %s160 = sphi 0, %s158
    %s161 = sphi 0, %s160
    %s175 = sphi 0, %s161
    %s179 = sphi 0, %s179
    %s181 = sphi 0, %s179
    %s182 = sphi 0, %s181
    %s196 = sphi 0, %s182
    %s202 = sphi 0, %s204
    %s205 = sphi 0, %s202
    %s206 = sphi 0, %s205
    %s222 = sphi 0, %s206
  $region4: #{tpu_custom_call.1} parent=0 // loop_header_branch
    %17 = sbr.rel (%p15) target = $region8
  $region5: #{tpu_custom_call.1} parent=0 // loop_body
    %s19 = ssub.s32 %s14, 1
    %s20 = ssub.s32 %s14, 2
    %s21 = sadd.s32 %s14, 1
    %s22 = ssub.s32 %s14, %s21
    %p23 = scmp.eq.s32.totalorder %s22, 0
    %s25 = sadd.s32 %s24, 1
    %s26 = scalar_select %p23, %s24, %s25
    %p29 = pneg %p23
    %p30 = scmp.eq.s32.totalorder %s14, 1
    %p31 = por %p29, %p30
    %p32 = scmp.ne.s32.totalorder %s24, %s27
    %p33 = scmp.eq.s32.totalorder %s14, 0
    %p34 = por %p32, %p33
    %p35 = scmp.ne.s32.totalorder %s24, %s27
    %p36 = scmp.eq.s32.totalorder %s19, 1
    %p37 = por %p35, %p36
    %p38 = scmp.ne.s32.totalorder %s27, %s28
    %p39 = scmp.eq.s32.totalorder %s19, 0
    %p40 = por %p38, %p39
    %p41 = scmp.ne.s32.totalorder %s27, %s28
    %p42 = scmp.eq.s32.totalorder %s20, 1
    %p43 = por %p41, %p42
    %p45 = scmp.ne.s32.totalorder %s28, %s44
    %p46 = scmp.eq.s32.totalorder %s20, 0
    %p47 = por %p45, %p46
    %s48 = ssub.s32 %s14, %s21
    %p49 = scmp.eq.s32.totalorder %s48, 0
    %s51 = sadd.s32 %s50, 1
    %s52 = scalar_select %p49, %s50, %s51
    %p55 = pneg %p49
    %p56 = scmp.eq.s32.totalorder %s14, 1
    %p57 = por %p55, %p56
    %p58 = scmp.ne.s32.totalorder %s50, %s53
    %p59 = scmp.eq.s32.totalorder %s14, 0
    %p60 = por %p58, %p59
    %p61 = scmp.ne.s32.totalorder %s50, %s53
    %p62 = scmp.eq.s32.totalorder %s19, 1
    %p63 = por %p61, %p62
    %p64 = scmp.ne.s32.totalorder %s53, %s54
    %p65 = scmp.eq.s32.totalorder %s19, 0
    %p66 = por %p64, %p65
    %p67 = scmp.ne.s32.totalorder %s53, %s54
    %p68 = scmp.eq.s32.totalorder %s20, 1
    %p69 = por %p67, %p68
    %p71 = scmp.ne.s32.totalorder %s54, %s70
    %p72 = scmp.eq.s32.totalorder %s20, 0
    %p73 = por %p71, %p72
    %s75 = sadd.s32 %s74, 1
    %p78 = scmp.eq.s32.totalorder %s14, 1
    %p79 = scmp.ne.s32.totalorder %s74, %s76
    %p80 = scmp.eq.s32.totalorder %s14, 0
    %p81 = por %p79, %p80
    %p82 = scmp.ne.s32.totalorder %s74, %s76
    %p83 = scmp.eq.s32.totalorder %s19, 1
    %p84 = por %p82, %p83
    %p85 = scmp.ne.s32.totalorder %s76, %s77
    %p86 = scmp.eq.s32.totalorder %s19, 0
    %p87 = por %p85, %p86
    %p88 = scmp.ne.s32.totalorder %s76, %s77
    %p89 = scmp.eq.s32.totalorder %s20, 1
    %p90 = por %p88, %p89
    %p92 = scmp.ne.s32.totalorder %s77, %s91
    %p93 = scmp.eq.s32.totalorder %s20, 0
    %p94 = por %p92, %p93
    %s96 = sadd.s32 %s95, 1
    %p99 = scmp.eq.s32.totalorder %s14, 1
    %p100 = scmp.ne.s32.totalorder %s95, %s97
    %p101 = scmp.eq.s32.totalorder %s14, 0
    %p102 = por %p100, %p101
    %p103 = scmp.ne.s32.totalorder %s95, %s97
    %p104 = scmp.eq.s32.totalorder %s19, 1
    %p105 = por %p103, %p104
    %p106 = scmp.ne.s32.totalorder %s97, %s98
    %p107 = scmp.eq.s32.totalorder %s19, 0
    %p108 = por %p106, %p107
    %p109 = scmp.ne.s32.totalorder %s97, %s98
    %p110 = scmp.eq.s32.totalorder %s20, 1
    %p111 = por %p109, %p110
    %p113 = scmp.ne.s32.totalorder %s98, %s112
    %p114 = scmp.eq.s32.totalorder %s20, 0
    %p115 = por %p113, %p114
    %s117 = sadd.s32 %s116, 1
    %p120 = scmp.eq.s32.totalorder %s14, 1
    %p121 = scmp.ne.s32.totalorder %s116, %s118
    %p122 = scmp.eq.s32.totalorder %s14, 0
    %p123 = por %p121, %p122
    %p124 = scmp.ne.s32.totalorder %s116, %s118
    %p125 = scmp.eq.s32.totalorder %s19, 1
    %p126 = por %p124, %p125
    %p127 = scmp.ne.s32.totalorder %s118, %s119
    %p128 = scmp.eq.s32.totalorder %s19, 0
    %p129 = por %p127, %p128
    %p130 = scmp.ne.s32.totalorder %s118, %s119
    %p131 = scmp.eq.s32.totalorder %s20, 1
    %p132 = por %p130, %p131
    %p134 = scmp.ne.s32.totalorder %s119, %s133
    %p135 = scmp.eq.s32.totalorder %s20, 0
    %p136 = por %p134, %p135
    %s138 = sadd.s32 %s137, 1
    %p141 = scmp.eq.s32.totalorder %s14, 1
    %p142 = scmp.ne.s32.totalorder %s137, %s139
    %p143 = scmp.eq.s32.totalorder %s14, 0
    %p144 = por %p142, %p143
    %p145 = scmp.ne.s32.totalorder %s137, %s139
    %p146 = scmp.eq.s32.totalorder %s19, 1
    %p147 = por %p145, %p146
    %p148 = scmp.ne.s32.totalorder %s139, %s140
    %p149 = scmp.eq.s32.totalorder %s19, 0
    %p150 = por %p148, %p149
    %p151 = scmp.ne.s32.totalorder %s139, %s140
    %p152 = scmp.eq.s32.totalorder %s20, 1
    %p153 = por %p151, %p152
    %p155 = scmp.ne.s32.totalorder %s140, %s154
    %p156 = scmp.eq.s32.totalorder %s20, 0
    %p157 = por %p155, %p156
    %s159 = sadd.s32 %s158, 1
    %p162 = scmp.eq.s32.totalorder %s14, 1
    %p163 = scmp.ne.s32.totalorder %s158, %s160
    %p164 = scmp.eq.s32.totalorder %s14, 0
    %p165 = por %p163, %p164
    %p166 = scmp.ne.s32.totalorder %s158, %s160
    %p167 = scmp.eq.s32.totalorder %s19, 1
    %p168 = por %p166, %p167
    %p169 = scmp.ne.s32.totalorder %s160, %s161
    %p170 = scmp.eq.s32.totalorder %s19, 0
    %p171 = por %p169, %p170
    %p172 = scmp.ne.s32.totalorder %s160, %s161
    %p173 = scmp.eq.s32.totalorder %s20, 1
    %p174 = por %p172, %p173
    %p176 = scmp.ne.s32.totalorder %s161, %s175
    %p177 = scmp.eq.s32.totalorder %s20, 0
    %p178 = por %p176, %p177
    %s180 = sadd.s32 %s179, 1
    %p183 = scmp.eq.s32.totalorder %s14, 1
    %p184 = scmp.ne.s32.totalorder %s179, %s181
    %p185 = scmp.eq.s32.totalorder %s14, 0
    %p186 = por %p184, %p185
    %p187 = scmp.ne.s32.totalorder %s179, %s181
    %p188 = scmp.eq.s32.totalorder %s19, 1
    %p189 = por %p187, %p188
    %p190 = scmp.ne.s32.totalorder %s181, %s182
    %p191 = scmp.eq.s32.totalorder %s19, 0
    %p192 = por %p190, %p191
    %p193 = scmp.ne.s32.totalorder %s181, %s182
    %p194 = scmp.eq.s32.totalorder %s20, 1
    %p195 = por %p193, %p194
    %p197 = scmp.ne.s32.totalorder %s182, %s196
    %p198 = scmp.eq.s32.totalorder %s20, 0
    %p199 = por %p197, %p198
    %s200 = ssub.s32 %s14, %s21
    %p201 = scmp.eq.s32.totalorder %s200, 0
    %s203 = sadd.s32 %s202, 1
    %s204 = scalar_select %p201, %s202, %s203
    %p207 = pneg %p201
    %p208 = scmp.eq.s32.totalorder %s14, 1
    %p209 = por %p207, %p208
    %p210 = scmp.ne.s32.totalorder %s202, %s205
    %p211 = scmp.eq.s32.totalorder %s14, 0
    %p212 = por %p210, %p211
    %p213 = scmp.ne.s32.totalorder %s202, %s205
    %p214 = scmp.eq.s32.totalorder %s19, 1
    %p215 = por %p213, %p214
    %p216 = scmp.ne.s32.totalorder %s205, %s206
    %p217 = scmp.eq.s32.totalorder %s19, 0
    %p218 = por %p216, %p217
    %p219 = scmp.ne.s32.totalorder %s205, %s206
    %p220 = scmp.eq.s32.totalorder %s20, 1
    %p221 = por %p219, %p220
    %p223 = scmp.ne.s32.totalorder %s206, %s222
    %p224 = scmp.eq.s32.totalorder %s20, 0
    %p225 = por %p223, %p224
    %p226 = scmp.le.s32.totalorder 1, %s14
    %p227 = scmp.lt.s32.totalorder %s14, 3
    %p228 = pnand %p226, %p227
    %p229 = pneg %p228
    // Predicated region
    $region9: #{tpu_custom_call.1} parent=5 // pred_check
      _
    $region10: #{tpu_custom_call.1} parent=5 // pred_check_branch
      %231 = sbr.rel (%p228) target = $region12
    $region11: #{tpu_custom_call.1} parent=5 // pred_region
      %s232 = ssub.s32 %s14, 1
      // Predicated region
      $region13: #{tpu_custom_call.1} parent=11 // pred_check
        %p233 = pneg %p87
      $region14: #{tpu_custom_call.1} parent=11 // pred_check_branch
        %235 = sbr.rel (%p233) target = $region16
      $region15: #{tpu_custom_call.1} parent=11 // pred_region
        _
      $region16: #{tpu_custom_call.1} parent=11 // pred_fallthru
        _
      // Predicated region
      $region17: #{tpu_custom_call.1} parent=11 // pred_check
        %p236 = pneg %p108
      $region18: #{tpu_custom_call.1} parent=11 // pred_check_branch
        %238 = sbr.rel (%p236) target = $region20
      $region19: #{tpu_custom_call.1} parent=11 // pred_region
        _
      $region20: #{tpu_custom_call.1} parent=11 // pred_fallthru
        _
      // Predicated region
      $region21: #{tpu_custom_call.1} parent=11 // pred_check
        %p239 = pneg %p129
      $region22: #{tpu_custom_call.1} parent=11 // pred_check_branch
        %241 = sbr.rel (%p239) target = $region24
      $region23: #{tpu_custom_call.1} parent=11 // pred_region
        _
      $region24: #{tpu_custom_call.1} parent=11 // pred_fallthru
        _
      // Predicated region
      $region25: #{tpu_custom_call.1} parent=11 // pred_check
        %p242 = pneg %p150
      $region26: #{tpu_custom_call.1} parent=11 // pred_check_branch
        %244 = sbr.rel (%p242) target = $region28
      $region27: #{tpu_custom_call.1} parent=11 // pred_region
        _
      $region28: #{tpu_custom_call.1} parent=11 // pred_fallthru
        _
      // Predicated region
      $region29: #{tpu_custom_call.1} parent=11 // pred_check
        %p245 = pneg %p171
      $region30: #{tpu_custom_call.1} parent=11 // pred_check_branch
        %247 = sbr.rel (%p245) target = $region32
      $region31: #{tpu_custom_call.1} parent=11 // pred_region
        _
      $region32: #{tpu_custom_call.1} parent=11 // pred_fallthru
        _
      // Predicated region
      $region33: #{tpu_custom_call.1} parent=11 // pred_check
        %p248 = pneg %p192
      $region34: #{tpu_custom_call.1} parent=11 // pred_check_branch
        %250 = sbr.rel (%p248) target = $region36
      $region35: #{tpu_custom_call.1} parent=11 // pred_region
        _
      $region36: #{tpu_custom_call.1} parent=11 // pred_fallthru
        _
    $region12: #{tpu_custom_call.1} parent=5 // pred_fallthru
      _
    %p251 = scmp.lt.s32.totalorder %s14, 2
    // Predicated region
    $region37: #{tpu_custom_call.1} parent=5 // pred_check
      %p252 = pneg %p251
    $region38: #{tpu_custom_call.1} parent=5 // pred_check_branch
      %254 = sbr.rel (%p252) target = $region40
    $region39: #{tpu_custom_call.1} parent=5 // pred_region
      // Predicated region
      $region41: #{tpu_custom_call.1} parent=39 // pred_check
        %p255 = pneg %p34
      $region42: #{tpu_custom_call.1} parent=39 // pred_check_branch
        %257 = sbr.rel (%p255) target = $region44
      $region43: #{tpu_custom_call.1} parent=39 // pred_region
        %s258 = smul.u32 2, %s14
        %p259 = scmp.lt.s32.totalorder %s258, 3
        %s260 = scalar_select %p259, %s258, 3
        %s261 = smul.addr %s260, 160
        %s262 = smul.addr %s261, 8
        %s263 = scalar_lea.vmem %s0, %s262
        %s264 = smul.u32 2, %s14
      $region44: #{tpu_custom_call.1} parent=39 // pred_fallthru
        _
      // Predicated region
      $region45: #{tpu_custom_call.1} parent=39 // pred_check
        %p265 = pneg %p60
      $region46: #{tpu_custom_call.1} parent=39 // pred_check_branch
        %267 = sbr.rel (%p265) target = $region48
      $region47: #{tpu_custom_call.1} parent=39 // pred_region
        %s268 = smul.u32 2, %s14
        %p269 = scmp.lt.s32.totalorder %s268, 3
        %s270 = scalar_select %p269, %s268, 3
        %s271 = smul.addr %s270, 32
        %s272 = smul.addr %s271, 8
        %s273 = scalar_lea.vmem %s1, %s272
        %s274 = smul.u32 2, %s14
      $region48: #{tpu_custom_call.1} parent=39 // pred_fallthru
        _
    $region40: #{tpu_custom_call.1} parent=5 // pred_fallthru
      _
    %p275 = scmp.le.s32.totalorder 1, %s14
    %p276 = scmp.lt.s32.totalorder %s14, 3
    %p277 = pnand %p275, %p276
    %p278 = pneg %p277
    // Predicated region
    $region49: #{tpu_custom_call.1} parent=5 // pred_check
      _
    $region50: #{tpu_custom_call.1} parent=5 // pred_check_branch
      %280 = sbr.rel (%p277) target = $region52
    $region51: #{tpu_custom_call.1} parent=5 // pred_region
      %s281 = ssub.s32 %s14, 1
      %s282 = smul.u32 2, %s19
      %p283 = scmp.lt.s32.totalorder %s282, 3
      %s284 = scalar_select %p283, %s282, 3
      %s285 = smul.addr %s284, 160
      %s286 = smul.addr %s285, 8
      %s287 = scalar_lea.vmem %s0, %s286
      %p288 = pneg %p40
      %p289 = pneg %p37
      %s290 = smul.u32 2, %s19
      %p291 = scmp.lt.s32.totalorder %s290, 3
      %s292 = scalar_select %p291, %s290, 3
      %s293 = smul.addr %s292, 32
      %s294 = smul.addr %s293, 8
      %s295 = scalar_lea.vmem %s1, %s294
      %p296 = pneg %p66
      %p297 = pneg %p63
      %p298 = pneg %p87
      %p299 = pneg %p84
      %p300 = pneg %p108
      %p301 = pneg %p105
      %p302 = pneg %p129
      %p303 = pneg %p126
      %p304 = pneg %p150
      %p305 = pneg %p147
      %p306 = pneg %p171
      %p307 = pneg %p168
      %p308 = pneg %p192
      %p309 = pneg %p189
      %p310 = pneg %p218
      %p311 = pneg %p215
      %s312 = smul.u32 2, %s19
      %p313 = scmp.lt.s32.totalorder %s312, 3
      %s314 = scalar_select %p313, %s312, 3
      %s315 = smul.addr %s314, 32
      %s316 = smul.addr %s315, 8
      %s317 = scalar_lea.vmem %s8, %s316
      %s318 = smul.u32 2, %s19
      %p319 = scmp.lt.s32.totalorder %s318, 3
      %s320 = scalar_select %p319, %s318, 3
      %s321 = smul.addr %s320, 160
      %s322 = smul.addr %s321, 8
      %s323 = scalar_lea.vmem %s0, %s322
      %s324 = smul.u32 2, %s19
      %s325 = smul.u32 2, %s19
      %p326 = scmp.lt.s32.totalorder %s325, 3
      %s327 = scalar_select %p326, %s325, 3
      %s328 = smul.addr %s327, 32
      %s329 = smul.addr %s328, 8
      %s330 = scalar_lea.vmem %s1, %s329
      %s331 = smul.u32 2, %s19
      %s332 = smul.u32 2, %s19
      %p333 = scmp.lt.s32.totalorder %s332, 3
      %s334 = scalar_select %p333, %s332, 3
      %s335 = smul.addr %s334, 32
      %s336 = smul.addr %s335, 8
      %s337 = scalar_lea.vmem %s8, %s336
      %s338 = smul.u32 2, %s19
      %v339 = vld [vmem:[%s323] sm:$0xff]
      %v340 = vld [vmem:[%s323 + $0x8] sm:$0xff]
      %v341 = vld [vmem:[%s323 + $0x10] sm:$0xff]
      %v342 = vld [vmem:[%s323 + $0x18] sm:$0xff]
      %v343 = vld [vmem:[%s323 + $0x20] sm:$0xff]
      %v344 = vld [vmem:[%s323 + $0x28] sm:$0xff]
      %v345 = vld [vmem:[%s323 + $0x30] sm:$0xff]
      %v346 = vld [vmem:[%s323 + $0x38] sm:$0xff]
      %v347 = vld [vmem:[%s323 + $0x40] sm:$0xff]
      %v348 = vld [vmem:[%s323 + $0x48] sm:$0xff]
      %v349 = vld [vmem:[%s323 + $0x50] sm:$0xff]
      %v350 = vld [vmem:[%s323 + $0x58] sm:$0xff]
      %v351 = vld [vmem:[%s323 + $0x60] sm:$0xff]
      %v352 = vld [vmem:[%s323 + $0x68] sm:$0xff]
      %v353 = vld [vmem:[%s323 + $0x70] sm:$0xff]
      %v354 = vld [vmem:[%s323 + $0x78] sm:$0xff]
      %v355 = vld [vmem:[%s323 + $0x80] sm:$0xff]
      %v356 = vld [vmem:[%s323 + $0x88] sm:$0xff]
      %v357 = vld [vmem:[%s323 + $0x90] sm:$0xff]
      %v358 = vld [vmem:[%s323 + $0x98] sm:$0xff]
      %v359 = vld [vmem:[%s323 + $0xa0] sm:$0xff]
      %v360 = vld [vmem:[%s323 + $0xa8] sm:$0xff]
      %v361 = vld [vmem:[%s323 + $0xb0] sm:$0xff]
      %v362 = vld [vmem:[%s323 + $0xb8] sm:$0xff]
      %v363 = vld [vmem:[%s323 + $0xc0] sm:$0xff]
      %v364 = vld [vmem:[%s323 + $0xc8] sm:$0xff]
      %v365 = vld [vmem:[%s323 + $0xd0] sm:$0xff]
      %v366 = vld [vmem:[%s323 + $0xd8] sm:$0xff]
      %v367 = vld [vmem:[%s323 + $0xe0] sm:$0xff]
      %v368 = vld [vmem:[%s323 + $0xe8] sm:$0xff]
      %v369 = vld [vmem:[%s323 + $0xf0] sm:$0xff]
      %v370 = vld [vmem:[%s323 + $0xf8] sm:$0xff]
      %v371 = vld [vmem:[%s323 + $0x100] sm:$0xff]
      %v372 = vld [vmem:[%s323 + $0x108] sm:$0xff]
      %v373 = vld [vmem:[%s323 + $0x110] sm:$0xff]
      %v374 = vld [vmem:[%s323 + $0x118] sm:$0xff]
      %v375 = vld [vmem:[%s323 + $0x120] sm:$0xff]
      %v376 = vld [vmem:[%s323 + $0x128] sm:$0xff]
      %v377 = vld [vmem:[%s323 + $0x130] sm:$0xff]
      %v378 = vld [vmem:[%s323 + $0x138] sm:$0xff]
      %v379 = vld [vmem:[%s323 + $0x140] sm:$0xff]
      %v380 = vld [vmem:[%s323 + $0x148] sm:$0xff]
      %v381 = vld [vmem:[%s323 + $0x150] sm:$0xff]
      %v382 = vld [vmem:[%s323 + $0x158] sm:$0xff]
      %v383 = vld [vmem:[%s323 + $0x160] sm:$0xff]
      %v384 = vld [vmem:[%s323 + $0x168] sm:$0xff]
      %v385 = vld [vmem:[%s323 + $0x170] sm:$0xff]
      %v386 = vld [vmem:[%s323 + $0x178] sm:$0xff]
      %v387 = vld [vmem:[%s323 + $0x180] sm:$0xff]
      %v388 = vld [vmem:[%s323 + $0x188] sm:$0xff]
      %v389 = vld [vmem:[%s323 + $0x190] sm:$0xff]
      %v390 = vld [vmem:[%s323 + $0x198] sm:$0xff]
      %v391 = vld [vmem:[%s323 + $0x1a0] sm:$0xff]
      %v392 = vld [vmem:[%s323 + $0x1a8] sm:$0xff]
      %v393 = vld [vmem:[%s323 + $0x1b0] sm:$0xff]
      %v394 = vld [vmem:[%s323 + $0x1b8] sm:$0xff]
      %v395 = vld [vmem:[%s323 + $0x1c0] sm:$0xff]
      %v396 = vld [vmem:[%s323 + $0x1c8] sm:$0xff]
      %v397 = vld [vmem:[%s323 + $0x1d0] sm:$0xff]
      %v398 = vld [vmem:[%s323 + $0x1d8] sm:$0xff]
      %v399 = vld [vmem:[%s323 + $0x1e0] sm:$0xff]
      %v400 = vld [vmem:[%s323 + $0x1e8] sm:$0xff]
      %v401 = vld [vmem:[%s323 + $0x1f0] sm:$0xff]
      %v402 = vld [vmem:[%s323 + $0x1f8] sm:$0xff]
      %v403 = vld [vmem:[%s323 + $0x200] sm:$0xff]
      %v404 = vld [vmem:[%s323 + $0x208] sm:$0xff]
      %v405 = vld [vmem:[%s323 + $0x210] sm:$0xff]
      %v406 = vld [vmem:[%s323 + $0x218] sm:$0xff]
      %v407 = vld [vmem:[%s323 + $0x220] sm:$0xff]
      %v408 = vld [vmem:[%s323 + $0x228] sm:$0xff]
      %v409 = vld [vmem:[%s323 + $0x230] sm:$0xff]
      %v410 = vld [vmem:[%s323 + $0x238] sm:$0xff]
      %v411 = vld [vmem:[%s323 + $0x240] sm:$0xff]
      %v412 = vld [vmem:[%s323 + $0x248] sm:$0xff]
      %v413 = vld [vmem:[%s323 + $0x250] sm:$0xff]
      %v414 = vld [vmem:[%s323 + $0x258] sm:$0xff]
      %v415 = vld [vmem:[%s323 + $0x260] sm:$0xff]
      %v416 = vld [vmem:[%s323 + $0x268] sm:$0xff]
      %v417 = vld [vmem:[%s323 + $0x270] sm:$0xff]
      %v418 = vld [vmem:[%s323 + $0x278] sm:$0xff]
      %v419 = vld [vmem:[%s323 + $0x280] sm:$0xff]
      %v420 = vld [vmem:[%s323 + $0x288] sm:$0xff]
      %v421 = vld [vmem:[%s323 + $0x290] sm:$0xff]
      %v422 = vld [vmem:[%s323 + $0x298] sm:$0xff]
      %v423 = vld [vmem:[%s323 + $0x2a0] sm:$0xff]
      %v424 = vld [vmem:[%s323 + $0x2a8] sm:$0xff]
      %v425 = vld [vmem:[%s323 + $0x2b0] sm:$0xff]
      %v426 = vld [vmem:[%s323 + $0x2b8] sm:$0xff]
      %v427 = vld [vmem:[%s323 + $0x2c0] sm:$0xff]
      %v428 = vld [vmem:[%s323 + $0x2c8] sm:$0xff]
      %v429 = vld [vmem:[%s323 + $0x2d0] sm:$0xff]
      %v430 = vld [vmem:[%s323 + $0x2d8] sm:$0xff]
      %v431 = vld [vmem:[%s323 + $0x2e0] sm:$0xff]
      %v432 = vld [vmem:[%s323 + $0x2e8] sm:$0xff]
      %v433 = vld [vmem:[%s323 + $0x2f0] sm:$0xff]
      %v434 = vld [vmem:[%s323 + $0x2f8] sm:$0xff]
      %v435 = vld [vmem:[%s323 + $0x300] sm:$0xff]
      %v436 = vld [vmem:[%s323 + $0x308] sm:$0xff]
      %v437 = vld [vmem:[%s323 + $0x310] sm:$0xff]
      %v438 = vld [vmem:[%s323 + $0x318] sm:$0xff]
      %v439 = vld [vmem:[%s323 + $0x320] sm:$0xff]
      %v440 = vld [vmem:[%s323 + $0x328] sm:$0xff]
      %v441 = vld [vmem:[%s323 + $0x330] sm:$0xff]
      %v442 = vld [vmem:[%s323 + $0x338] sm:$0xff]
      %v443 = vld [vmem:[%s323 + $0x340] sm:$0xff]
      %v444 = vld [vmem:[%s323 + $0x348] sm:$0xff]
      %v445 = vld [vmem:[%s323 + $0x350] sm:$0xff]
      %v446 = vld [vmem:[%s323 + $0x358] sm:$0xff]
      %v447 = vld [vmem:[%s323 + $0x360] sm:$0xff]
      %v448 = vld [vmem:[%s323 + $0x368] sm:$0xff]
      %v449 = vld [vmem:[%s323 + $0x370] sm:$0xff]
      %v450 = vld [vmem:[%s323 + $0x378] sm:$0xff]
      %v451 = vld [vmem:[%s323 + $0x380] sm:$0xff]
      %v452 = vld [vmem:[%s323 + $0x388] sm:$0xff]
      %v453 = vld [vmem:[%s323 + $0x390] sm:$0xff]
      %v454 = vld [vmem:[%s323 + $0x398] sm:$0xff]
      %v455 = vld [vmem:[%s323 + $0x3a0] sm:$0xff]
      %v456 = vld [vmem:[%s323 + $0x3a8] sm:$0xff]
      %v457 = vld [vmem:[%s323 + $0x3b0] sm:$0xff]
      %v458 = vld [vmem:[%s323 + $0x3b8] sm:$0xff]
      %v459 = vld [vmem:[%s323 + $0x3c0] sm:$0xff]
      %v460 = vld [vmem:[%s323 + $0x3c8] sm:$0xff]
      %v461 = vld [vmem:[%s323 + $0x3d0] sm:$0xff]
      %v462 = vld [vmem:[%s323 + $0x3d8] sm:$0xff]
      %v463 = vld [vmem:[%s323 + $0x3e0] sm:$0xff]
      %v464 = vld [vmem:[%s323 + $0x3e8] sm:$0xff]
      %v465 = vld [vmem:[%s323 + $0x3f0] sm:$0xff]
      %v466 = vld [vmem:[%s323 + $0x3f8] sm:$0xff]
      %v467 = vld [vmem:[%s323 + $0x400] sm:$0xff]
      %v468 = vld [vmem:[%s323 + $0x408] sm:$0xff]
      %v469 = vld [vmem:[%s323 + $0x410] sm:$0xff]
      %v470 = vld [vmem:[%s323 + $0x418] sm:$0xff]
      %v471 = vld [vmem:[%s323 + $0x420] sm:$0xff]
      %v472 = vld [vmem:[%s323 + $0x428] sm:$0xff]
      %v473 = vld [vmem:[%s323 + $0x430] sm:$0xff]
      %v474 = vld [vmem:[%s323 + $0x438] sm:$0xff]
      %v475 = vld [vmem:[%s323 + $0x440] sm:$0xff]
      %v476 = vld [vmem:[%s323 + $0x448] sm:$0xff]
      %v477 = vld [vmem:[%s323 + $0x450] sm:$0xff]
      %v478 = vld [vmem:[%s323 + $0x458] sm:$0xff]
      %v479 = vld [vmem:[%s323 + $0x460] sm:$0xff]
      %v480 = vld [vmem:[%s323 + $0x468] sm:$0xff]
      %v481 = vld [vmem:[%s323 + $0x470] sm:$0xff]
      %v482 = vld [vmem:[%s323 + $0x478] sm:$0xff]
      %v483 = vld [vmem:[%s323 + $0x480] sm:$0xff]
      %v484 = vld [vmem:[%s323 + $0x488] sm:$0xff]
      %v485 = vld [vmem:[%s323 + $0x490] sm:$0xff]
      %v486 = vld [vmem:[%s323 + $0x498] sm:$0xff]
      %v487 = vld [vmem:[%s323 + $0x4a0] sm:$0xff]
      %v488 = vld [vmem:[%s323 + $0x4a8] sm:$0xff]
      %v489 = vld [vmem:[%s323 + $0x4b0] sm:$0xff]
      %v490 = vld [vmem:[%s323 + $0x4b8] sm:$0xff]
      %v491 = vld [vmem:[%s323 + $0x4c0] sm:$0xff]
      %v492 = vld [vmem:[%s323 + $0x4c8] sm:$0xff]
      %v493 = vld [vmem:[%s323 + $0x4d0] sm:$0xff]
      %v494 = vld [vmem:[%s323 + $0x4d8] sm:$0xff]
      %v495 = vld [vmem:[%s323 + $0x4e0] sm:$0xff]
      %v496 = vld [vmem:[%s323 + $0x4e8] sm:$0xff]
      %v497 = vld [vmem:[%s323 + $0x4f0] sm:$0xff]
      %v498 = vld [vmem:[%s323 + $0x4f8] sm:$0xff]
      %v499 = vld [vmem:[%s323 + $0x500] sm:$0xff]
      %v500 = vld [vmem:[%s323 + $0x508] sm:$0xff]
      %v501 = vld [vmem:[%s323 + $0x510] sm:$0xff]
      %v502 = vld [vmem:[%s323 + $0x518] sm:$0xff]
      %v503 = vld [vmem:[%s323 + $0x520] sm:$0xff]
      %v504 = vld [vmem:[%s323 + $0x528] sm:$0xff]
      %v505 = vld [vmem:[%s323 + $0x530] sm:$0xff]
      %v506 = vld [vmem:[%s323 + $0x538] sm:$0xff]
      %v507 = vld [vmem:[%s323 + $0x540] sm:$0xff]
      %v508 = vld [vmem:[%s323 + $0x548] sm:$0xff]
      %v509 = vld [vmem:[%s323 + $0x550] sm:$0xff]
      %v510 = vld [vmem:[%s323 + $0x558] sm:$0xff]
      %v511 = vld [vmem:[%s323 + $0x560] sm:$0xff]
      %v512 = vld [vmem:[%s323 + $0x568] sm:$0xff]
      %v513 = vld [vmem:[%s323 + $0x570] sm:$0xff]
      %v514 = vld [vmem:[%s323 + $0x578] sm:$0xff]
      %v515 = vld [vmem:[%s323 + $0x580] sm:$0xff]
      %v516 = vld [vmem:[%s323 + $0x588] sm:$0xff]
      %v517 = vld [vmem:[%s323 + $0x590] sm:$0xff]
      %v518 = vld [vmem:[%s323 + $0x598] sm:$0xff]
      %v519 = vld [vmem:[%s323 + $0x5a0] sm:$0xff]
      %v520 = vld [vmem:[%s323 + $0x5a8] sm:$0xff]
      %v521 = vld [vmem:[%s323 + $0x5b0] sm:$0xff]
      %v522 = vld [vmem:[%s323 + $0x5b8] sm:$0xff]
      %v523 = vld [vmem:[%s323 + $0x5c0] sm:$0xff]
      %v524 = vld [vmem:[%s323 + $0x5c8] sm:$0xff]
      %v525 = vld [vmem:[%s323 + $0x5d0] sm:$0xff]
      %v526 = vld [vmem:[%s323 + $0x5d8] sm:$0xff]
      %v527 = vld [vmem:[%s323 + $0x5e0] sm:$0xff]
      %v528 = vld [vmem:[%s323 + $0x5e8] sm:$0xff]
      %v529 = vld [vmem:[%s323 + $0x5f0] sm:$0xff]
      %v530 = vld [vmem:[%s323 + $0x5f8] sm:$0xff]
      %v531 = vld [vmem:[%s323 + $0x600] sm:$0xff]
      %v532 = vld [vmem:[%s323 + $0x608] sm:$0xff]
      %v533 = vld [vmem:[%s323 + $0x610] sm:$0xff]
      %v534 = vld [vmem:[%s323 + $0x618] sm:$0xff]
      %v535 = vld [vmem:[%s323 + $0x620] sm:$0xff]
      %v536 = vld [vmem:[%s323 + $0x628] sm:$0xff]
      %v537 = vld [vmem:[%s323 + $0x630] sm:$0xff]
      %v538 = vld [vmem:[%s323 + $0x638] sm:$0xff]
      %v539 = vld [vmem:[%s323 + $0x640] sm:$0xff]
      %v540 = vld [vmem:[%s323 + $0x648] sm:$0xff]
      %v541 = vld [vmem:[%s323 + $0x650] sm:$0xff]
      %v542 = vld [vmem:[%s323 + $0x658] sm:$0xff]
      %v543 = vld [vmem:[%s323 + $0x660] sm:$0xff]
      %v544 = vld [vmem:[%s323 + $0x668] sm:$0xff]
      %v545 = vld [vmem:[%s323 + $0x670] sm:$0xff]
      %v546 = vld [vmem:[%s323 + $0x678] sm:$0xff]
      %v547 = vld [vmem:[%s323 + $0x680] sm:$0xff]
      %v548 = vld [vmem:[%s323 + $0x688] sm:$0xff]
      %v549 = vld [vmem:[%s323 + $0x690] sm:$0xff]
      %v550 = vld [vmem:[%s323 + $0x698] sm:$0xff]
      %v551 = vld [vmem:[%s323 + $0x6a0] sm:$0xff]
      %v552 = vld [vmem:[%s323 + $0x6a8] sm:$0xff]
      %v553 = vld [vmem:[%s323 + $0x6b0] sm:$0xff]
      %v554 = vld [vmem:[%s323 + $0x6b8] sm:$0xff]
      %v555 = vld [vmem:[%s323 + $0x6c0] sm:$0xff]
      %v556 = vld [vmem:[%s323 + $0x6c8] sm:$0xff]
      %v557 = vld [vmem:[%s323 + $0x6d0] sm:$0xff]
      %v558 = vld [vmem:[%s323 + $0x6d8] sm:$0xff]
      %v559 = vld [vmem:[%s323 + $0x6e0] sm:$0xff]
      %v560 = vld [vmem:[%s323 + $0x6e8] sm:$0xff]
      %v561 = vld [vmem:[%s323 + $0x6f0] sm:$0xff]
      %v562 = vld [vmem:[%s323 + $0x6f8] sm:$0xff]
      %v563 = vld [vmem:[%s323 + $0x700] sm:$0xff]
      %v564 = vld [vmem:[%s323 + $0x708] sm:$0xff]
      %v565 = vld [vmem:[%s323 + $0x710] sm:$0xff]
      %v566 = vld [vmem:[%s323 + $0x718] sm:$0xff]
      %v567 = vld [vmem:[%s323 + $0x720] sm:$0xff]
      %v568 = vld [vmem:[%s323 + $0x728] sm:$0xff]
      %v569 = vld [vmem:[%s323 + $0x730] sm:$0xff]
      %v570 = vld [vmem:[%s323 + $0x738] sm:$0xff]
      %v571 = vld [vmem:[%s323 + $0x740] sm:$0xff]
      %v572 = vld [vmem:[%s323 + $0x748] sm:$0xff]
      %v573 = vld [vmem:[%s323 + $0x750] sm:$0xff]
      %v574 = vld [vmem:[%s323 + $0x758] sm:$0xff]
      %v575 = vld [vmem:[%s323 + $0x760] sm:$0xff]
      %v576 = vld [vmem:[%s323 + $0x768] sm:$0xff]
      %v577 = vld [vmem:[%s323 + $0x770] sm:$0xff]
      %v578 = vld [vmem:[%s323 + $0x778] sm:$0xff]
      %v579 = vld [vmem:[%s323 + $0x780] sm:$0xff]
      %v580 = vld [vmem:[%s323 + $0x788] sm:$0xff]
      %v581 = vld [vmem:[%s323 + $0x790] sm:$0xff]
      %v582 = vld [vmem:[%s323 + $0x798] sm:$0xff]
      %v583 = vld [vmem:[%s323 + $0x7a0] sm:$0xff]
      %v584 = vld [vmem:[%s323 + $0x7a8] sm:$0xff]
      %v585 = vld [vmem:[%s323 + $0x7b0] sm:$0xff]
      %v586 = vld [vmem:[%s323 + $0x7b8] sm:$0xff]
      %v587 = vld [vmem:[%s323 + $0x7c0] sm:$0xff]
      %v588 = vld [vmem:[%s323 + $0x7c8] sm:$0xff]
      %v589 = vld [vmem:[%s323 + $0x7d0] sm:$0xff]
      %v590 = vld [vmem:[%s323 + $0x7d8] sm:$0xff]
      %v591 = vld [vmem:[%s323 + $0x7e0] sm:$0xff]
      %v592 = vld [vmem:[%s323 + $0x7e8] sm:$0xff]
      %v593 = vld [vmem:[%s323 + $0x7f0] sm:$0xff]
      %v594 = vld [vmem:[%s323 + $0x7f8] sm:$0xff]
      %v595 = vld [vmem:[%s323 + $0x800] sm:$0xff]
      %v596 = vld [vmem:[%s323 + $0x808] sm:$0xff]
      %v597 = vld [vmem:[%s323 + $0x810] sm:$0xff]
      %v598 = vld [vmem:[%s323 + $0x818] sm:$0xff]
      %v599 = vld [vmem:[%s323 + $0x820] sm:$0xff]
      %v600 = vld [vmem:[%s323 + $0x828] sm:$0xff]
      %v601 = vld [vmem:[%s323 + $0x830] sm:$0xff]
      %v602 = vld [vmem:[%s323 + $0x838] sm:$0xff]
      %v603 = vld [vmem:[%s323 + $0x840] sm:$0xff]
      %v604 = vld [vmem:[%s323 + $0x848] sm:$0xff]
      %v605 = vld [vmem:[%s323 + $0x850] sm:$0xff]
      %v606 = vld [vmem:[%s323 + $0x858] sm:$0xff]
      %v607 = vld [vmem:[%s323 + $0x860] sm:$0xff]
      %v608 = vld [vmem:[%s323 + $0x868] sm:$0xff]
      %v609 = vld [vmem:[%s323 + $0x870] sm:$0xff]
      %v610 = vld [vmem:[%s323 + $0x878] sm:$0xff]
      %v611 = vld [vmem:[%s323 + $0x880] sm:$0xff]
      %v612 = vld [vmem:[%s323 + $0x888] sm:$0xff]
      %v613 = vld [vmem:[%s323 + $0x890] sm:$0xff]
      %v614 = vld [vmem:[%s323 + $0x898] sm:$0xff]
      %v615 = vld [vmem:[%s323 + $0x8a0] sm:$0xff]
      %v616 = vld [vmem:[%s323 + $0x8a8] sm:$0xff]
      %v617 = vld [vmem:[%s323 + $0x8b0] sm:$0xff]
      %v618 = vld [vmem:[%s323 + $0x8b8] sm:$0xff]
      %v619 = vld [vmem:[%s323 + $0x8c0] sm:$0xff]
      %v620 = vld [vmem:[%s323 + $0x8c8] sm:$0xff]
      %v621 = vld [vmem:[%s323 + $0x8d0] sm:$0xff]
      %v622 = vld [vmem:[%s323 + $0x8d8] sm:$0xff]
      %v623 = vld [vmem:[%s323 + $0x8e0] sm:$0xff]
      %v624 = vld [vmem:[%s323 + $0x8e8] sm:$0xff]
      %v625 = vld [vmem:[%s323 + $0x8f0] sm:$0xff]
      %v626 = vld [vmem:[%s323 + $0x8f8] sm:$0xff]
      %v627 = vld [vmem:[%s323 + $0x900] sm:$0xff]
      %v628 = vld [vmem:[%s323 + $0x908] sm:$0xff]
      %v629 = vld [vmem:[%s323 + $0x910] sm:$0xff]
      %v630 = vld [vmem:[%s323 + $0x918] sm:$0xff]
      %v631 = vld [vmem:[%s323 + $0x920] sm:$0xff]
      %v632 = vld [vmem:[%s323 + $0x928] sm:$0xff]
      %v633 = vld [vmem:[%s323 + $0x930] sm:$0xff]
      %v634 = vld [vmem:[%s323 + $0x938] sm:$0xff]
      %v635 = vld [vmem:[%s323 + $0x940] sm:$0xff]
      %v636 = vld [vmem:[%s323 + $0x948] sm:$0xff]
      %v637 = vld [vmem:[%s323 + $0x950] sm:$0xff]
      %v638 = vld [vmem:[%s323 + $0x958] sm:$0xff]
      %v639 = vld [vmem:[%s323 + $0x960] sm:$0xff]
      %v640 = vld [vmem:[%s323 + $0x968] sm:$0xff]
      %v641 = vld [vmem:[%s323 + $0x970] sm:$0xff]
      %v642 = vld [vmem:[%s323 + $0x978] sm:$0xff]
      %v643 = vld [vmem:[%s323 + $0x980] sm:$0xff]
      %v644 = vld [vmem:[%s323 + $0x988] sm:$0xff]
      %v645 = vld [vmem:[%s323 + $0x990] sm:$0xff]
      %v646 = vld [vmem:[%s323 + $0x998] sm:$0xff]
      %v647 = vld [vmem:[%s323 + $0x9a0] sm:$0xff]
      %v648 = vld [vmem:[%s323 + $0x9a8] sm:$0xff]
      %v649 = vld [vmem:[%s323 + $0x9b0] sm:$0xff]
      %v650 = vld [vmem:[%s323 + $0x9b8] sm:$0xff]
      %v651 = vld [vmem:[%s323 + $0x9c0] sm:$0xff]
      %v652 = vld [vmem:[%s323 + $0x9c8] sm:$0xff]
      %v653 = vld [vmem:[%s323 + $0x9d0] sm:$0xff]
      %v654 = vld [vmem:[%s323 + $0x9d8] sm:$0xff]
      %v655 = vld [vmem:[%s323 + $0x9e0] sm:$0xff]
      %v656 = vld [vmem:[%s323 + $0x9e8] sm:$0xff]
      %v657 = vld [vmem:[%s323 + $0x9f0] sm:$0xff]
      %v658 = vld [vmem:[%s323 + $0x9f8] sm:$0xff]
      %v659 = vld [vmem:[%s2] sm:$0xff]
      %v660 = vld [vmem:[%s2 + $0x8] sm:$0xff]
      %v661 = vld [vmem:[%s2 + $0x10] sm:$0xff]
      %v662 = vld [vmem:[%s2 + $0x18] sm:$0xff]
      %v663 = vld [vmem:[%s2 + $0x20] sm:$0xff]
      %v664 = vld [vmem:[%s2 + $0x28] sm:$0xff]
      %v665 = vld [vmem:[%s2 + $0x30] sm:$0xff]
      %v666 = vld [vmem:[%s2 + $0x38] sm:$0xff]
      %v667 = vld [vmem:[%s2 + $0x40] sm:$0xff]
      %v668 = vld [vmem:[%s2 + $0x48] sm:$0xff]
      %v669 = vld [vmem:[%s2 + $0x50] sm:$0xff]
      %v670 = vld [vmem:[%s2 + $0x58] sm:$0xff]
      %v671 = vld [vmem:[%s2 + $0x60] sm:$0xff]
      %v672 = vld [vmem:[%s2 + $0x68] sm:$0xff]
      %v673 = vld [vmem:[%s2 + $0x70] sm:$0xff]
      %v674 = vld [vmem:[%s2 + $0x78] sm:$0xff]
      %v675 = vld [vmem:[%s2 + $0x80] sm:$0xff]
      %v676 = vld [vmem:[%s2 + $0x88] sm:$0xff]
      %v677 = vld [vmem:[%s2 + $0x90] sm:$0xff]
      %v678 = vld [vmem:[%s2 + $0x98] sm:$0xff]
      %v679 = vld [vmem:[%s2 + $0xa0] sm:$0xff]
      %v680 = vld [vmem:[%s2 + $0xa8] sm:$0xff]
      %v681 = vld [vmem:[%s2 + $0xb0] sm:$0xff]
      %v682 = vld [vmem:[%s2 + $0xb8] sm:$0xff]
      %v683 = vld [vmem:[%s2 + $0xc0] sm:$0xff]
      %v684 = vld [vmem:[%s2 + $0xc8] sm:$0xff]
      %v685 = vld [vmem:[%s2 + $0xd0] sm:$0xff]
      %v686 = vld [vmem:[%s2 + $0xd8] sm:$0xff]
      %v687 = vld [vmem:[%s2 + $0xe0] sm:$0xff]
      %v688 = vld [vmem:[%s2 + $0xe8] sm:$0xff]
      %v689 = vld [vmem:[%s2 + $0xf0] sm:$0xff]
      %v690 = vld [vmem:[%s2 + $0xf8] sm:$0xff]
      %v691 = vld [vmem:[%s2 + $0x100] sm:$0xff]
      %v692 = vld [vmem:[%s2 + $0x108] sm:$0xff]
      %v693 = vld [vmem:[%s2 + $0x110] sm:$0xff]
      %v694 = vld [vmem:[%s2 + $0x118] sm:$0xff]
      %v695 = vld [vmem:[%s2 + $0x120] sm:$0xff]
      %v696 = vld [vmem:[%s2 + $0x128] sm:$0xff]
      %v697 = vld [vmem:[%s2 + $0x130] sm:$0xff]
      %v698 = vld [vmem:[%s2 + $0x138] sm:$0xff]
      %v699 = vld [vmem:[%s2 + $0x140] sm:$0xff]
      %v700 = vld [vmem:[%s2 + $0x148] sm:$0xff]
      %v701 = vld [vmem:[%s2 + $0x150] sm:$0xff]
      %v702 = vld [vmem:[%s2 + $0x158] sm:$0xff]
      %v703 = vld [vmem:[%s2 + $0x160] sm:$0xff]
      %v704 = vld [vmem:[%s2 + $0x168] sm:$0xff]
      %v705 = vld [vmem:[%s2 + $0x170] sm:$0xff]
      %v706 = vld [vmem:[%s2 + $0x178] sm:$0xff]
      %v707 = vld [vmem:[%s2 + $0x180] sm:$0xff]
      %v708 = vld [vmem:[%s2 + $0x188] sm:$0xff]
      %v709 = vld [vmem:[%s2 + $0x190] sm:$0xff]
      %v710 = vld [vmem:[%s2 + $0x198] sm:$0xff]
      %v711 = vld [vmem:[%s2 + $0x1a0] sm:$0xff]
      %v712 = vld [vmem:[%s2 + $0x1a8] sm:$0xff]
      %v713 = vld [vmem:[%s2 + $0x1b0] sm:$0xff]
      %v714 = vld [vmem:[%s2 + $0x1b8] sm:$0xff]
      %v715 = vld [vmem:[%s2 + $0x1c0] sm:$0xff]
      %v716 = vld [vmem:[%s2 + $0x1c8] sm:$0xff]
      %v717 = vld [vmem:[%s2 + $0x1d0] sm:$0xff]
      %v718 = vld [vmem:[%s2 + $0x1d8] sm:$0xff]
      %v719 = vld [vmem:[%s2 + $0x1e0] sm:$0xff]
      %v720 = vld [vmem:[%s2 + $0x1e8] sm:$0xff]
      %v721 = vld [vmem:[%s2 + $0x1f0] sm:$0xff]
      %v722 = vld [vmem:[%s2 + $0x1f8] sm:$0xff]
      %v723 = vld [vmem:[%s2 + $0x200] sm:$0xff]
      %v724 = vld [vmem:[%s2 + $0x208] sm:$0xff]
      %v725 = vld [vmem:[%s2 + $0x210] sm:$0xff]
      %v726 = vld [vmem:[%s2 + $0x218] sm:$0xff]
      %v727 = vld [vmem:[%s2 + $0x220] sm:$0xff]
      %v728 = vld [vmem:[%s2 + $0x228] sm:$0xff]
      %v729 = vld [vmem:[%s2 + $0x230] sm:$0xff]
      %v730 = vld [vmem:[%s2 + $0x238] sm:$0xff]
      %vm731 = vcmask 523264
      %v733 = vsel %vm731, %v343, 0
      %v736 = vsel %vm731, %v348, 0
      %v739 = vsel %vm731, %v353, 0
      %v742 = vsel %vm731, %v358, 0
      %v745 = vsel %vm731, %v363, 0
      %v748 = vsel %vm731, %v368, 0
      %v751 = vsel %vm731, %v373, 0
      %v754 = vsel %vm731, %v378, 0
      %v757 = vsel %vm731, %v383, 0
      %v760 = vsel %vm731, %v388, 0
      %v763 = vsel %vm731, %v393, 0
      %v766 = vsel %vm731, %v398, 0
      %v769 = vsel %vm731, %v403, 0
      %v772 = vsel %vm731, %v408, 0
      %v775 = vsel %vm731, %v413, 0
      %v778 = vsel %vm731, %v418, 0
      %v781 = vsel %vm731, %v423, 0
      %v784 = vsel %vm731, %v428, 0
      %v787 = vsel %vm731, %v433, 0
      %v790 = vsel %vm731, %v438, 0
      %v793 = vsel %vm731, %v443, 0
      %v796 = vsel %vm731, %v448, 0
      %v799 = vsel %vm731, %v453, 0
      %v802 = vsel %vm731, %v458, 0
      %v805 = vsel %vm731, %v463, 0
      %v808 = vsel %vm731, %v468, 0
      %v811 = vsel %vm731, %v473, 0
      %v814 = vsel %vm731, %v478, 0
      %v817 = vsel %vm731, %v483, 0
      %v820 = vsel %vm731, %v488, 0
      %v823 = vsel %vm731, %v493, 0
      %v826 = vsel %vm731, %v498, 0
      %v829 = vsel %vm731, %v503, 0
      %v832 = vsel %vm731, %v508, 0
      %v835 = vsel %vm731, %v513, 0
      %v838 = vsel %vm731, %v518, 0
      %v841 = vsel %vm731, %v523, 0
      %v844 = vsel %vm731, %v528, 0
      %v847 = vsel %vm731, %v533, 0
      %v850 = vsel %vm731, %v538, 0
      %v853 = vsel %vm731, %v543, 0
      %v856 = vsel %vm731, %v548, 0
      %v859 = vsel %vm731, %v553, 0
      %v862 = vsel %vm731, %v558, 0
      %v865 = vsel %vm731, %v563, 0
      %v868 = vsel %vm731, %v568, 0
      %v871 = vsel %vm731, %v573, 0
      %v874 = vsel %vm731, %v578, 0
      %v877 = vsel %vm731, %v583, 0
      %v880 = vsel %vm731, %v588, 0
      %v883 = vsel %vm731, %v593, 0
      %v886 = vsel %vm731, %v598, 0
      %v889 = vsel %vm731, %v603, 0
      %v892 = vsel %vm731, %v608, 0
      %v895 = vsel %vm731, %v613, 0
      %v898 = vsel %vm731, %v618, 0
      %v901 = vsel %vm731, %v623, 0
      %v904 = vsel %vm731, %v628, 0
      %v907 = vsel %vm731, %v633, 0
      %v910 = vsel %vm731, %v638, 0
      %v913 = vsel %vm731, %v643, 0
      %v916 = vsel %vm731, %v648, 0
      %v919 = vsel %vm731, %v653, 0
      %v922 = vsel %vm731, %v658, 0
      %924 = vmatprep.subr.mxu0 0.0
      %925 = vmatpush1.msra.mxu0 %v659
      %926 = vmatprep.subr.mxu0 0.0
      %927 = vmatpush1.msra.mxu0 %v660
      %928 = vmatprep.subr.mxu0 0.0
      %929 = vmatpush1.msra.mxu0 %v661
      %930 = vmatprep.subr.mxu0 0.0
      %931 = vmatpush1.msra.mxu0 %v662
      %932 = vmatprep.subr.mxu0 0.0
      %933 = vmatpush1.msra.mxu0 %v663
      %934 = vmatprep.subr.mxu0 0.0
      %935 = vmatpush1.msra.mxu0 %v664
      %936 = vmatprep.subr.mxu0 0.0
      %937 = vmatpush1.msra.mxu0 %v665
      %938 = vmatprep.subr.mxu0 0.0
      %939 = vmatpush1.msra.mxu0 %v666
      %940 = vmatprep.subr.mxu0 0.0
      %941 = vmatpush1.msra.mxu0 %v667
      %942 = vmatprep.subr.mxu0 0.0
      %943 = vmatpush1.msra.mxu0 %v668
      %944 = vmatprep.subr.mxu0 0.0
      %945 = vmatpush1.msra.mxu0 %v669
      %946 = vmatprep.subr.mxu0 0.0
      %947 = vmatpush1.msra.mxu0 %v670
      %948 = vmatprep.subr.mxu0 0.0
      %949 = vmatpush1.msra.mxu0 %v671
      %950 = vmatprep.subr.mxu0 0.0
      %951 = vmatpush1.msra.mxu0 %v672
      %952 = vmatprep.subr.mxu0 0.0
      %953 = vmatpush1.msra.mxu0 %v673
      %954 = vmatprep.subr.mxu0 0.0
      %955 = vmatpush1.msra.mxu0 %v674
      %956 = vmatprep.subr.mxu0 0.0
      %957 = vmatpush1.msra.mxu0 %v675
      %958 = vmatprep.subr.mxu0 0.0
      %959 = vmatpush1.msra.mxu0 %v676
      %960 = vmatprep.subr.mxu0 0.0
      %961 = vmatpush1.msra.mxu0 %v677
      %962 = vmatprep.subr.mxu0 0.0
      %963 = vmatpush1.msra.mxu0 %v678
      %964 = vmatprep.subr.mxu0 0.0
      %965 = vmatpush1.msra.mxu0 %v679
      %966 = vmatprep.subr.mxu0 0.0
      %967 = vmatpush1.msra.mxu0 %v680
      %968 = vmatprep.subr.mxu0 0.0
      %969 = vmatpush1.msra.mxu0 %v681
      %970 = vmatprep.subr.mxu0 0.0
      %971 = vmatpush1.msra.mxu0 %v682
      %972 = vmatprep.subr.mxu0 0.0
      %973 = vmatpush1.msra.mxu0 %v683
      %974 = vmatprep.subr.mxu0 0.0
      %975 = vmatpush1.msra.mxu0 %v684
      %976 = vmatprep.subr.mxu0 0.0
      %977 = vmatpush1.msra.mxu0 %v685
      %978 = vmatprep.subr.mxu0 0.0
      %979 = vmatpush1.msra.mxu0 %v686
      %980 = vmatprep.subr.mxu0 0.0
      %981 = vmatpush1.msra.mxu0 %v687
      %982 = vmatprep.subr.mxu0 0.0
      %983 = vmatpush1.msra.mxu0 %v688
      %984 = vmatprep.subr.mxu0 0.0
      %985 = vmatpush1.msra.mxu0 %v689
      %986 = vmatprep.subr.mxu0 0.0
      %987 = vmatpush1.msra.mxu0 %v690
      %988 = vmatprep.mubr.f32.mxu0 %v340
      %989 = vmatmul.mubr.f32.gmra.mrb[0].mxu0 %v339
      %v990 = vpop.f32.mrb[0].mxu0
      %v991 = vadd.f32 0.0, %v990
      %v992 = vpop.f32.mrb[0].mxu0
      %993 = vmatprep.mubr.f32.mxu0 %v345
      %994 = vmatmul.mubr.f32.gmra.mrb[0].mxu0 %v344
      %v995 = vpop.f32.mrb[0].mxu0
      %v996 = vadd.f32 0.0, %v995
      %v997 = vpop.f32.mrb[0].mxu0
      %998 = vmatprep.mubr.f32.mxu0 %v350
      %999 = vmatmul.mubr.f32.gmra.mrb[0].mxu0 %v349
      %v1000 = vpop.f32.mrb[0].mxu0
      %v1001 = vadd.f32 0.0, %v1000
      %v1002 = vpop.f32.mrb[0].mxu0
      %1003 = vmatprep.mubr.f32.mxu0 %v355
      %1004 = vmatmul.mubr.f32.gmra.mrb[0].mxu0 %v354
      %v1005 = vpop.f32.mrb[0].mxu0
      %v1006 = vadd.f32 0.0, %v1005
      %v1007 = vpop.f32.mrb[0].mxu0
      %1008 = vmatprep.mubr.f32.mxu0 %v360
      %1009 = vmatmul.mubr.f32.gmra.mrb[0].mxu0 %v359
      %v1010 = vpop.f32.mrb[0].mxu0
      %v1011 = vadd.f32 0.0, %v1010
      %v1012 = vpop.f32.mrb[0].mxu0
      %1013 = vmatprep.mubr.f32.mxu0 %v365
      %1014 = vmatmul.mubr.f32.gmra.mrb[0].mxu0 %v364
      %v1015 = vpop.f32.mrb[0].mxu0
      %v1016 = vadd.f32 0.0, %v1015
      %v1017 = vpop.f32.mrb[0].mxu0
      %1018 = vmatprep.mubr.f32.mxu0 %v370
      %1019 = vmatmul.mubr.f32.gmra.mrb[0].mxu0 %v369
      %v1020 = vpop.f32.mrb[0].mxu0
      %v1021 = vadd.f32 0.0, %v1020
      %v1022 = vpop.f32.mrb[0].mxu0
      %1023 = vmatprep.mubr.f32.mxu0 %v375
      %1024 = vmatmul.mubr.f32.gmra.mrb[0].mxu0 %v374
      %v1025 = vpop.f32.mrb[0].mxu0
      %v1026 = vadd.f32 0.0, %v1025
      %v1027 = vpop.f32.mrb[0].mxu0
      %1028 = vmatprep.mubr.f32.mxu0 %v380
      %1029 = vmatmul.mubr.f32.gmra.mrb[0].mxu0 %v379
      %v1030 = vpop.f32.mrb[0].mxu0
      %v1031 = vadd.f32 0.0, %v1030
      %v1032 = vpop.f32.mrb[0].mxu0
      %1033 = vmatprep.mubr.f32.mxu0 %v385
      %1034 = vmatmul.mubr.f32.gmra.mrb[0].mxu0 %v384
      %v1035 = vpop.f32.mrb[0].mxu0
      %v1036 = vadd.f32 0.0, %v1035
      %v1037 = vpop.f32.mrb[0].mxu0
      %1038 = vmatprep.mubr.f32.mxu0 %v390
      %1039 = vmatmul.mubr.f32.gmra.mrb[0].mxu0 %v389
      %v1040 = vpop.f32.mrb[0].mxu0
      %v1041 = vadd.f32 0.0, %v1040
      %v1042 = vpop.f32.mrb[0].mxu0
      %1043 = vmatprep.mubr.f32.mxu0 %v395
      %1044 = vmatmul.mubr.f32.gmra.mrb[0].mxu0 %v394
      %v1045 = vpop.f32.mrb[0].mxu0
      %v1046 = vadd.f32 0.0, %v1045
      %v1047 = vpop.f32.mrb[0].mxu0
      %1048 = vmatprep.mubr.f32.mxu0 %v400
      %1049 = vmatmul.mubr.f32.gmra.mrb[0].mxu0 %v399
      %v1050 = vpop.f32.mrb[0].mxu0
      %v1051 = vadd.f32 0.0, %v1050
      %v1052 = vpop.f32.mrb[0].mxu0
      %1053 = vmatprep.mubr.f32.mxu0 %v405
      %1054 = vmatmul.mubr.f32.gmra.mrb[0].mxu0 %v404
      %v1055 = vpop.f32.mrb[0].mxu0
      %v1056 = vadd.f32 0.0, %v1055
      %v1057 = vpop.f32.mrb[0].mxu0
      %1058 = vmatprep.mubr.f32.mxu0 %v410
      %1059 = vmatmul.mubr.f32.gmra.mrb[0].mxu0 %v409
      %v1060 = vpop.f32.mrb[0].mxu0
      %v1061 = vadd.f32 0.0, %v1060
      %v1062 = vpop.f32.mrb[0].mxu0
      %1063 = vmatprep.mubr.f32.mxu0 %v415
      %1064 = vmatmul.mubr.f32.gmra.mrb[0].mxu0 %v414
      %v1065 = vpop.f32.mrb[0].mxu0
      %v1066 = vadd.f32 0.0, %v1065
      %v1067 = vpop.f32.mrb[0].mxu0
      %1068 = vmatprep.mubr.f32.mxu0 %v420
      %1069 = vmatmul.mubr.f32.gmra.mrb[0].mxu0 %v419
      %v1070 = vpop.f32.mrb[0].mxu0
      %v1071 = vadd.f32 0.0, %v1070
      %v1072 = vpop.f32.mrb[0].mxu0
      %1073 = vmatprep.mubr.f32.mxu0 %v425
      %1074 = vmatmul.mubr.f32.gmra.mrb[0].mxu0 %v424
      %v1075 = vpop.f32.mrb[0].mxu0
      %v1076 = vadd.f32 0.0, %v1075
      %v1077 = vpop.f32.mrb[0].mxu0
      %1078 = vmatprep.mubr.f32.mxu0 %v430
      %1079 = vmatmul.mubr.f32.gmra.mrb[0].mxu0 %v429
      %v1080 = vpop.f32.mrb[0].mxu0
      %v1081 = vadd.f32 0.0, %v1080
      %v1082 = vpop.f32.mrb[0].mxu0
      %1083 = vmatprep.mubr.f32.mxu0 %v435
      %1084 = vmatmul.mubr.f32.gmra.mrb[0].mxu0 %v434
      %v1085 = vpop.f32.mrb[0].mxu0
      %v1086 = vadd.f32 0.0, %v1085
      %v1087 = vpop.f32.mrb[0].mxu0
      %1088 = vmatprep.mubr.f32.mxu0 %v440
      %1089 = vmatmul.mubr.f32.gmra.mrb[0].mxu0 %v439
      %v1090 = vpop.f32.mrb[0].mxu0
      %v1091 = vadd.f32 0.0, %v1090
      %v1092 = vpop.f32.mrb[0].mxu0
      %1093 = vmatprep.mubr.f32.mxu0 %v445
      %1094 = vmatmul.mubr.f32.gmra.mrb[0].mxu0 %v444
      %v1095 = vpop.f32.mrb[0].mxu0
      %v1096 = vadd.f32 0.0, %v1095
      %v1097 = vpop.f32.mrb[0].mxu0
      %1098 = vmatprep.mubr.f32.mxu0 %v450
      %1099 = vmatmul.mubr.f32.gmra.mrb[0].mxu0 %v449
      %v1100 = vpop.f32.mrb[0].mxu0
      %v1101 = vadd.f32 0.0, %v1100
      %v1102 = vpop.f32.mrb[0].mxu0
      %1103 = vmatprep.mubr.f32.mxu0 %v455
      %1104 = vmatmul.mubr.f32.gmra.mrb[0].mxu0 %v454
      %v1105 = vpop.f32.mrb[0].mxu0
      %v1106 = vadd.f32 0.0, %v1105
      %v1107 = vpop.f32.mrb[0].mxu0
      %1108 = vmatprep.mubr.f32.mxu0 %v460
      %1109 = vmatmul.mubr.f32.gmra.mrb[0].mxu0 %v459
      %v1110 = vpop.f32.mrb[0].mxu0
      %v1111 = vadd.f32 0.0, %v1110
      %v1112 = vpop.f32.mrb[0].mxu0
      %1113 = vmatprep.mubr.f32.mxu0 %v465
      %1114 = vmatmul.mubr.f32.gmra.mrb[0].mxu0 %v464
      %v1115 = vpop.f32.mrb[0].mxu0
      %v1116 = vadd.f32 0.0, %v1115
      %v1117 = vpop.f32.mrb[0].mxu0
      %1118 = vmatprep.mubr.f32.mxu0 %v470
      %1119 = vmatmul.mubr.f32.gmra.mrb[0].mxu0 %v469
      %v1120 = vpop.f32.mrb[0].mxu0
      %v1121 = vadd.f32 0.0, %v1120
      %v1122 = vpop.f32.mrb[0].mxu0
      %1123 = vmatprep.mubr.f32.mxu0 %v475
      %1124 = vmatmul.mubr.f32.gmra.mrb[0].mxu0 %v474
      %v1125 = vpop.f32.mrb[0].mxu0
      %v1126 = vadd.f32 0.0, %v1125
      %v1127 = vpop.f32.mrb[0].mxu0
      %1128 = vmatprep.mubr.f32.mxu0 %v480
      %1129 = vmatmul.mubr.f32.gmra.mrb[0].mxu0 %v479
      %v1130 = vpop.f32.mrb[0].mxu0
      %v1131 = vadd.f32 0.0, %v1130
      %v1132 = vpop.f32.mrb[0].mxu0
      %1133 = vmatprep.mubr.f32.mxu0 %v485
      %1134 = vmatmul.mubr.f32.gmra.mrb[0].mxu0 %v484
      %v1135 = vpop.f32.mrb[0].mxu0
      %v1136 = vadd.f32 0.0, %v1135
      %v1137 = vpop.f32.mrb[0].mxu0
      %1138 = vmatprep.mubr.f32.mxu0 %v490
      %1139 = vmatmul.mubr.f32.gmra.mrb[0].mxu0 %v489
      %v1140 = vpop.f32.mrb[0].mxu0
      %v1141 = vadd.f32 0.0, %v1140
      %v1142 = vpop.f32.mrb[0].mxu0
      %1143 = vmatprep.mubr.f32.mxu0 %v495
      %1144 = vmatmul.mubr.f32.gmra.mrb[0].mxu0 %v494
      %v1145 = vpop.f32.mrb[0].mxu0
      %v1146 = vadd.f32 0.0, %v1145
      %v1147 = vpop.f32.mrb[0].mxu0
      %1148 = vmatprep.mubr.f32.mxu0 %v500
      %1149 = vmatmul.mubr.f32.gmra.mrb[0].mxu0 %v499
      %v1150 = vpop.f32.mrb[0].mxu0
      %v1151 = vadd.f32 0.0, %v1150
      %v1152 = vpop.f32.mrb[0].mxu0
      %1153 = vmatprep.mubr.f32.mxu0 %v505
      %1154 = vmatmul.mubr.f32.gmra.mrb[0].mxu0 %v504
      %v1155 = vpop.f32.mrb[0].mxu0
      %v1156 = vadd.f32 0.0, %v1155
      %v1157 = vpop.f32.mrb[0].mxu0
      %1158 = vmatprep.mubr.f32.mxu0 %v510
      %1159 = vmatmul.mubr.f32.gmra.mrb[0].mxu0 %v509
      %v1160 = vpop.f32.mrb[0].mxu0
      %v1161 = vadd.f32 0.0, %v1160
      %v1162 = vpop.f32.mrb[0].mxu0
      %1163 = vmatprep.mubr.f32.mxu0 %v515
      %1164 = vmatmul.mubr.f32.gmra.mrb[0].mxu0 %v514
      %v1165 = vpop.f32.mrb[0].mxu0
      %v1166 = vadd.f32 0.0, %v1165
      %v1167 = vpop.f32.mrb[0].mxu0
      %1168 = vmatprep.mubr.f32.mxu0 %v520
      %1169 = vmatmul.mubr.f32.gmra.mrb[0].mxu0 %v519
      %v1170 = vpop.f32.mrb[0].mxu0
      %v1171 = vadd.f32 0.0, %v1170
      %v1172 = vpop.f32.mrb[0].mxu0
      %1173 = vmatprep.mubr.f32.mxu0 %v525
      %1174 = vmatmul.mubr.f32.gmra.mrb[0].mxu0 %v524
      %v1175 = vpop.f32.mrb[0].mxu0
      %v1176 = vadd.f32 0.0, %v1175
      %v1177 = vpop.f32.mrb[0].mxu0
      %1178 = vmatprep.mubr.f32.mxu0 %v530
      %1179 = vmatmul.mubr.f32.gmra.mrb[0].mxu0 %v529
      %v1180 = vpop.f32.mrb[0].mxu0
      %v1181 = vadd.f32 0.0, %v1180
      %v1182 = vpop.f32.mrb[0].mxu0
      %1183 = vmatprep.mubr.f32.mxu0 %v535
      %1184 = vmatmul.mubr.f32.gmra.mrb[0].mxu0 %v534
      %v1185 = vpop.f32.mrb[0].mxu0
      %v1186 = vadd.f32 0.0, %v1185
      %v1187 = vpop.f32.mrb[0].mxu0
      %1188 = vmatprep.mubr.f32.mxu0 %v540
      %1189 = vmatmul.mubr.f32.gmra.mrb[0].mxu0 %v539
      %v1190 = vpop.f32.mrb[0].mxu0
      %v1191 = vadd.f32 0.0, %v1190
      %v1192 = vpop.f32.mrb[0].mxu0
      %1193 = vmatprep.mubr.f32.mxu0 %v545
      %1194 = vmatmul.mubr.f32.gmra.mrb[0].mxu0 %v544
      %v1195 = vpop.f32.mrb[0].mxu0
      %v1196 = vadd.f32 0.0, %v1195
      %v1197 = vpop.f32.mrb[0].mxu0
      %1198 = vmatprep.mubr.f32.mxu0 %v550
      %1199 = vmatmul.mubr.f32.gmra.mrb[0].mxu0 %v549
      %v1200 = vpop.f32.mrb[0].mxu0
      %v1201 = vadd.f32 0.0, %v1200
      %v1202 = vpop.f32.mrb[0].mxu0
      %1203 = vmatprep.mubr.f32.mxu0 %v555
      %1204 = vmatmul.mubr.f32.gmra.mrb[0].mxu0 %v554
      %v1205 = vpop.f32.mrb[0].mxu0
      %v1206 = vadd.f32 0.0, %v1205
      %v1207 = vpop.f32.mrb[0].mxu0
      %1208 = vmatprep.mubr.f32.mxu0 %v560
      %1209 = vmatmul.mubr.f32.gmra.mrb[0].mxu0 %v559
      %v1210 = vpop.f32.mrb[0].mxu0
      %v1211 = vadd.f32 0.0, %v1210
      %v1212 = vpop.f32.mrb[0].mxu0
      %1213 = vmatprep.mubr.f32.mxu0 %v565
      %1214 = vmatmul.mubr.f32.gmra.mrb[0].mxu0 %v564
      %v1215 = vpop.f32.mrb[0].mxu0
      %v1216 = vadd.f32 0.0, %v1215
      %v1217 = vpop.f32.mrb[0].mxu0
      %1218 = vmatprep.mubr.f32.mxu0 %v570
      %1219 = vmatmul.mubr.f32.gmra.mrb[0].mxu0 %v569
      %v1220 = vpop.f32.mrb[0].mxu0
      %v1221 = vadd.f32 0.0, %v1220
      %v1222 = vpop.f32.mrb[0].mxu0
      %1223 = vmatprep.mubr.f32.mxu0 %v575
      %1224 = vmatmul.mubr.f32.gmra.mrb[0].mxu0 %v574
      %v1225 = vpop.f32.mrb[0].mxu0
      %v1226 = vadd.f32 0.0, %v1225
      %v1227 = vpop.f32.mrb[0].mxu0
      %1228 = vmatprep.mubr.f32.mxu0 %v580
      %1229 = vmatmul.mubr.f32.gmra.mrb[0].mxu0 %v579
      %v1230 = vpop.f32.mrb[0].mxu0
      %v1231 = vadd.f32 0.0, %v1230
      %v1232 = vpop.f32.mrb[0].mxu0
      %1233 = vmatprep.mubr.f32.mxu0 %v585
      %1234 = vmatmul.mubr.f32.gmra.mrb[0].mxu0 %v584
      %v1235 = vpop.f32.mrb[0].mxu0
      %v1236 = vadd.f32 0.0, %v1235
      %v1237 = vpop.f32.mrb[0].mxu0
      %1238 = vmatprep.mubr.f32.mxu0 %v590
      %1239 = vmatmul.mubr.f32.gmra.mrb[0].mxu0 %v589
      %v1240 = vpop.f32.mrb[0].mxu0
      %v1241 = vadd.f32 0.0, %v1240
      %v1242 = vpop.f32.mrb[0].mxu0
      %1243 = vmatprep.mubr.f32.mxu0 %v595
      %1244 = vmatmul.mubr.f32.gmra.mrb[0].mxu0 %v594
      %v1245 = vpop.f32.mrb[0].mxu0
      %v1246 = vadd.f32 0.0, %v1245
      %v1247 = vpop.f32.mrb[0].mxu0
      %1248 = vmatprep.mubr.f32.mxu0 %v600
      %1249 = vmatmul.mubr.f32.gmra.mrb[0].mxu0 %v599
      %v1250 = vpop.f32.mrb[0].mxu0
      %v1251 = vadd.f32 0.0, %v1250
      %v1252 = vpop.f32.mrb[0].mxu0
      %1253 = vmatprep.mubr.f32.mxu0 %v605
      %1254 = vmatmul.mubr.f32.gmra.mrb[0].mxu0 %v604
      %v1255 = vpop.f32.mrb[0].mxu0
      %v1256 = vadd.f32 0.0, %v1255
      %v1257 = vpop.f32.mrb[0].mxu0
      %1258 = vmatprep.mubr.f32.mxu0 %v610
      %1259 = vmatmul.mubr.f32.gmra.mrb[0].mxu0 %v609
      %v1260 = vpop.f32.mrb[0].mxu0
      %v1261 = vadd.f32 0.0, %v1260
      %v1262 = vpop.f32.mrb[0].mxu0
      %1263 = vmatprep.mubr.f32.mxu0 %v615
      %1264 = vmatmul.mubr.f32.gmra.mrb[0].mxu0 %v614
      %v1265 = vpop.f32.mrb[0].mxu0
      %v1266 = vadd.f32 0.0, %v1265
      %v1267 = vpop.f32.mrb[0].mxu0
      %1268 = vmatprep.mubr.f32.mxu0 %v620
      %1269 = vmatmul.mubr.f32.gmra.mrb[0].mxu0 %v619
      %v1270 = vpop.f32.mrb[0].mxu0
      %v1271 = vadd.f32 0.0, %v1270
      %v1272 = vpop.f32.mrb[0].mxu0
      %1273 = vmatprep.mubr.f32.mxu0 %v625
      %1274 = vmatmul.mubr.f32.gmra.mrb[0].mxu0 %v624
      %v1275 = vpop.f32.mrb[0].mxu0
      %v1276 = vadd.f32 0.0, %v1275
      %v1277 = vpop.f32.mrb[0].mxu0
      %1278 = vmatprep.mubr.f32.mxu0 %v630
      %1279 = vmatmul.mubr.f32.gmra.mrb[0].mxu0 %v629
      %v1280 = vpop.f32.mrb[0].mxu0
      %v1281 = vadd.f32 0.0, %v1280
      %v1282 = vpop.f32.mrb[0].mxu0
      %1283 = vmatprep.mubr.f32.mxu0 %v635
      %1284 = vmatmul.mubr.f32.gmra.mrb[0].mxu0 %v634
      %v1285 = vpop.f32.mrb[0].mxu0
      %v1286 = vadd.f32 0.0, %v1285
      %v1287 = vpop.f32.mrb[0].mxu0
      %1288 = vmatprep.mubr.f32.mxu0 %v640
      %1289 = vmatmul.mubr.f32.gmra.mrb[0].mxu0 %v639
      %v1290 = vpop.f32.mrb[0].mxu0
      %v1291 = vadd.f32 0.0, %v1290
      %v1292 = vpop.f32.mrb[0].mxu0
      %1293 = vmatprep.mubr.f32.mxu0 %v645
      %1294 = vmatmul.mubr.f32.gmra.mrb[0].mxu0 %v644
      %v1295 = vpop.f32.mrb[0].mxu0
      %v1296 = vadd.f32 0.0, %v1295
      %v1297 = vpop.f32.mrb[0].mxu0
      %1298 = vmatprep.mubr.f32.mxu0 %v650
      %1299 = vmatmul.mubr.f32.gmra.mrb[0].mxu0 %v649
      %v1300 = vpop.f32.mrb[0].mxu0
      %v1301 = vadd.f32 0.0, %v1300
      %v1302 = vpop.f32.mrb[0].mxu0
      %1303 = vmatprep.mubr.f32.mxu0 %v655
      %1304 = vmatmul.mubr.f32.gmra.mrb[0].mxu0 %v654
      %v1305 = vpop.f32.mrb[0].mxu0
      %v1306 = vadd.f32 0.0, %v1305
      %v1307 = vpop.f32.mrb[0].mxu0
      %1308 = vdwg.mxu0
      %1309 = vmatprep.subr.mxu0 0.0
      %1310 = vmatpush1.msra.mxu0 %v691
      %1311 = vmatprep.subr.mxu0 0.0
      %1312 = vmatpush1.msra.mxu0 %v692
      %1313 = vmatprep.subr.mxu0 0.0
      %1314 = vmatpush1.msra.mxu0 %v693
      %1315 = vmatprep.subr.mxu0 0.0
      %1316 = vmatpush1.msra.mxu0 %v694
      %1317 = vmatprep.subr.mxu0 0.0
      %1318 = vmatpush1.msra.mxu0 %v695
      %1319 = vmatprep.subr.mxu0 0.0
      %1320 = vmatpush1.msra.mxu0 %v696
      %1321 = vmatprep.subr.mxu0 0.0
      %1322 = vmatpush1.msra.mxu0 %v697
      %1323 = vmatprep.subr.mxu0 0.0
      %1324 = vmatpush1.msra.mxu0 %v698
      %1325 = vmatprep.subr.mxu0 0.0
      %1326 = vmatpush1.msra.mxu0 %v699
      %1327 = vmatprep.subr.mxu0 0.0
      %1328 = vmatpush1.msra.mxu0 %v700
      %1329 = vmatprep.subr.mxu0 0.0
      %1330 = vmatpush1.msra.mxu0 %v701
      %1331 = vmatprep.subr.mxu0 0.0
      %1332 = vmatpush1.msra.mxu0 %v702
      %1333 = vmatprep.subr.mxu0 0.0
      %1334 = vmatpush1.msra.mxu0 %v703
      %1335 = vmatprep.subr.mxu0 0.0
      %1336 = vmatpush1.msra.mxu0 %v704
      %1337 = vmatprep.subr.mxu0 0.0
      %1338 = vmatpush1.msra.mxu0 %v705
      %1339 = vmatprep.subr.mxu0 0.0
      %1340 = vmatpush1.msra.mxu0 %v706
      %1341 = vmatprep.subr.mxu0 0.0
      %1342 = vmatpush1.msra.mxu0 %v707
      %1343 = vmatprep.subr.mxu0 0.0
      %1344 = vmatpush1.msra.mxu0 %v708
      %1345 = vmatprep.subr.mxu0 0.0
      %1346 = vmatpush1.msra.mxu0 %v709
      %1347 = vmatprep.subr.mxu0 0.0
      %1348 = vmatpush1.msra.mxu0 %v710
      %1349 = vmatprep.subr.mxu0 0.0
      %1350 = vmatpush1.msra.mxu0 %v711
      %1351 = vmatprep.subr.mxu0 0.0
      %1352 = vmatpush1.msra.mxu0 %v712
      %1353 = vmatprep.subr.mxu0 0.0
      %1354 = vmatpush1.msra.mxu0 %v713
      %1355 = vmatprep.subr.mxu0 0.0
      %1356 = vmatpush1.msra.mxu0 %v714
      %1357 = vmatprep.subr.mxu0 0.0
      %1358 = vmatpush1.msra.mxu0 %v715
      %1359 = vmatprep.subr.mxu0 0.0
      %1360 = vmatpush1.msra.mxu0 %v716
      %1361 = vmatprep.subr.mxu0 0.0
      %1362 = vmatpush1.msra.mxu0 %v717
      %1363 = vmatprep.subr.mxu0 0.0
      %1364 = vmatpush1.msra.mxu0 %v718
      %1365 = vmatprep.subr.mxu0 0.0
      %1366 = vmatpush1.msra.mxu0 %v719
      %1367 = vmatprep.subr.mxu0 0.0
      %1368 = vmatpush1.msra.mxu0 %v720
      %1369 = vmatprep.subr.mxu0 0.0
      %1370 = vmatpush1.msra.mxu0 %v721
      %1371 = vmatprep.subr.mxu0 0.0
      %1372 = vmatpush1.msra.mxu0 %v722
      %1373 = vmatprep.mubr.f32.mxu0 %v342
      %1374 = vmatmul.mubr.f32.gmra.mrb[0].mxu0 %v341
      %v1375 = vpop.f32.mrb[0].mxu0
      %v1376 = vadd.f32 %v991, %v1375
      %v1377 = vpop.f32.mrb[0].mxu0
      %1378 = vmatprep.mubr.f32.mxu0 %v347
      %1379 = vmatmul.mubr.f32.gmra.mrb[0].mxu0 %v346
      %v1380 = vpop.f32.mrb[0].mxu0
      %v1381 = vadd.f32 %v996, %v1380
      %v1382 = vpop.f32.mrb[0].mxu0
      %1383 = vmatprep.mubr.f32.mxu0 %v352
      %1384 = vmatmul.mubr.f32.gmra.mrb[0].mxu0 %v351
      %v1385 = vpop.f32.mrb[0].mxu0
      %v1386 = vadd.f32 %v1001, %v1385
      %v1387 = vpop.f32.mrb[0].mxu0
      %1388 = vmatprep.mubr.f32.mxu0 %v357
      %1389 = vmatmul.mubr.f32.gmra.mrb[0].mxu0 %v356
      %v1390 = vpop.f32.mrb[0].mxu0
      %v1391 = vadd.f32 %v1006, %v1390
      %v1392 = vpop.f32.mrb[0].mxu0
      %1393 = vmatprep.mubr.f32.mxu0 %v362
      %1394 = vmatmul.mubr.f32.gmra.mrb[0].mxu0 %v361
      %v1395 = vpop.f32.mrb[0].mxu0
      %v1396 = vadd.f32 %v1011, %v1395
      %v1397 = vpop.f32.mrb[0].mxu0
      %1398 = vmatprep.mubr.f32.mxu0 %v367
      %1399 = vmatmul.mubr.f32.gmra.mrb[0].mxu0 %v366
      %v1400 = vpop.f32.mrb[0].mxu0
      %v1401 = vadd.f32 %v1016, %v1400
      %v1402 = vpop.f32.mrb[0].mxu0
      %1403 = vmatprep.mubr.f32.mxu0 %v372
      %1404 = vmatmul.mubr.f32.gmra.mrb[0].mxu0 %v371
      %v1405 = vpop.f32.mrb[0].mxu0
      %v1406 = vadd.f32 %v1021, %v1405
      %v1407 = vpop.f32.mrb[0].mxu0
      %1408 = vmatprep.mubr.f32.mxu0 %v377
      %1409 = vmatmul.mubr.f32.gmra.mrb[0].mxu0 %v376
      %v1410 = vpop.f32.mrb[0].mxu0
      %v1411 = vadd.f32 %v1026, %v1410
      %v1412 = vpop.f32.mrb[0].mxu0
      %1413 = vmatprep.mubr.f32.mxu0 %v382
      %1414 = vmatmul.mubr.f32.gmra.mrb[0].mxu0 %v381
      %v1415 = vpop.f32.mrb[0].mxu0
      %v1416 = vadd.f32 %v1031, %v1415
      %v1417 = vpop.f32.mrb[0].mxu0
      %1418 = vmatprep.mubr.f32.mxu0 %v387
      %1419 = vmatmul.mubr.f32.gmra.mrb[0].mxu0 %v386
      %v1420 = vpop.f32.mrb[0].mxu0
      %v1421 = vadd.f32 %v1036, %v1420
      %v1422 = vpop.f32.mrb[0].mxu0
      %1423 = vmatprep.mubr.f32.mxu0 %v392
      %1424 = vmatmul.mubr.f32.gmra.mrb[0].mxu0 %v391
      %v1425 = vpop.f32.mrb[0].mxu0
      %v1426 = vadd.f32 %v1041, %v1425
      %v1427 = vpop.f32.mrb[0].mxu0
      %1428 = vmatprep.mubr.f32.mxu0 %v397
      %1429 = vmatmul.mubr.f32.gmra.mrb[0].mxu0 %v396
      %v1430 = vpop.f32.mrb[0].mxu0
      %v1431 = vadd.f32 %v1046, %v1430
      %v1432 = vpop.f32.mrb[0].mxu0
      %1433 = vmatprep.mubr.f32.mxu0 %v402
      %1434 = vmatmul.mubr.f32.gmra.mrb[0].mxu0 %v401
      %v1435 = vpop.f32.mrb[0].mxu0
      %v1436 = vadd.f32 %v1051, %v1435
      %v1437 = vpop.f32.mrb[0].mxu0
      %1438 = vmatprep.mubr.f32.mxu0 %v407
      %1439 = vmatmul.mubr.f32.gmra.mrb[0].mxu0 %v406
      %v1440 = vpop.f32.mrb[0].mxu0
      %v1441 = vadd.f32 %v1056, %v1440
      %v1442 = vpop.f32.mrb[0].mxu0
      %1443 = vmatprep.mubr.f32.mxu0 %v412
      %1444 = vmatmul.mubr.f32.gmra.mrb[0].mxu0 %v411
      %v1445 = vpop.f32.mrb[0].mxu0
      %v1446 = vadd.f32 %v1061, %v1445
      %v1447 = vpop.f32.mrb[0].mxu0
      %1448 = vmatprep.mubr.f32.mxu0 %v417
      %1449 = vmatmul.mubr.f32.gmra.mrb[0].mxu0 %v416
      %v1450 = vpop.f32.mrb[0].mxu0
      %v1451 = vadd.f32 %v1066, %v1450
      %v1452 = vpop.f32.mrb[0].mxu0
      %1453 = vmatprep.mubr.f32.mxu0 %v422
      %1454 = vmatmul.mubr.f32.gmra.mrb[0].mxu0 %v421
      %v1455 = vpop.f32.mrb[0].mxu0
      %v1456 = vadd.f32 %v1071, %v1455
      %v1457 = vpop.f32.mrb[0].mxu0
      %1458 = vmatprep.mubr.f32.mxu0 %v427
      %1459 = vmatmul.mubr.f32.gmra.mrb[0].mxu0 %v426
      %v1460 = vpop.f32.mrb[0].mxu0
      %v1461 = vadd.f32 %v1076, %v1460
      %v1462 = vpop.f32.mrb[0].mxu0
      %1463 = vmatprep.mubr.f32.mxu0 %v432
      %1464 = vmatmul.mubr.f32.gmra.mrb[0].mxu0 %v431
      %v1465 = vpop.f32.mrb[0].mxu0
      %v1466 = vadd.f32 %v1081, %v1465
      %v1467 = vpop.f32.mrb[0].mxu0
      %1468 = vmatprep.mubr.f32.mxu0 %v437
      %1469 = vmatmul.mubr.f32.gmra.mrb[0].mxu0 %v436
      %v1470 = vpop.f32.mrb[0].mxu0
      %v1471 = vadd.f32 %v1086, %v1470
      %v1472 = vpop.f32.mrb[0].mxu0
      %1473 = vmatprep.mubr.f32.mxu0 %v442
      %1474 = vmatmul.mubr.f32.gmra.mrb[0].mxu0 %v441
      %v1475 = vpop.f32.mrb[0].mxu0
      %v1476 = vadd.f32 %v1091, %v1475
      %v1477 = vpop.f32.mrb[0].mxu0
      %1478 = vmatprep.mubr.f32.mxu0 %v447
      %1479 = vmatmul.mubr.f32.gmra.mrb[0].mxu0 %v446
      %v1480 = vpop.f32.mrb[0].mxu0
      %v1481 = vadd.f32 %v1096, %v1480
      %v1482 = vpop.f32.mrb[0].mxu0
      %1483 = vmatprep.mubr.f32.mxu0 %v452
      %1484 = vmatmul.mubr.f32.gmra.mrb[0].mxu0 %v451
      %v1485 = vpop.f32.mrb[0].mxu0
      %v1486 = vadd.f32 %v1101, %v1485
      %v1487 = vpop.f32.mrb[0].mxu0
      %1488 = vmatprep.mubr.f32.mxu0 %v457
      %1489 = vmatmul.mubr.f32.gmra.mrb[0].mxu0 %v456
      %v1490 = vpop.f32.mrb[0].mxu0
      %v1491 = vadd.f32 %v1106, %v1490
      %v1492 = vpop.f32.mrb[0].mxu0
      %1493 = vmatprep.mubr.f32.mxu0 %v462
      %1494 = vmatmul.mubr.f32.gmra.mrb[0].mxu0 %v461
      %v1495 = vpop.f32.mrb[0].mxu0
      %v1496 = vadd.f32 %v1111, %v1495
      %v1497 = vpop.f32.mrb[0].mxu0
      %1498 = vmatprep.mubr.f32.mxu0 %v467
      %1499 = vmatmul.mubr.f32.gmra.mrb[0].mxu0 %v466
      %v1500 = vpop.f32.mrb[0].mxu0
      %v1501 = vadd.f32 %v1116, %v1500
      %v1502 = vpop.f32.mrb[0].mxu0
      %1503 = vmatprep.mubr.f32.mxu0 %v472
      %1504 = vmatmul.mubr.f32.gmra.mrb[0].mxu0 %v471
      %v1505 = vpop.f32.mrb[0].mxu0
      %v1506 = vadd.f32 %v1121, %v1505
      %v1507 = vpop.f32.mrb[0].mxu0
      %1508 = vmatprep.mubr.f32.mxu0 %v477
      %1509 = vmatmul.mubr.f32.gmra.mrb[0].mxu0 %v476
      %v1510 = vpop.f32.mrb[0].mxu0
      %v1511 = vadd.f32 %v1126, %v1510
      %v1512 = vpop.f32.mrb[0].mxu0
      %1513 = vmatprep.mubr.f32.mxu0 %v482
      %1514 = vmatmul.mubr.f32.gmra.mrb[0].mxu0 %v481
      %v1515 = vpop.f32.mrb[0].mxu0
      %v1516 = vadd.f32 %v1131, %v1515
      %v1517 = vpop.f32.mrb[0].mxu0
      %1518 = vmatprep.mubr.f32.mxu0 %v487
      %1519 = vmatmul.mubr.f32.gmra.mrb[0].mxu0 %v486
      %v1520 = vpop.f32.mrb[0].mxu0
      %v1521 = vadd.f32 %v1136, %v1520
      %v1522 = vpop.f32.mrb[0].mxu0
      %1523 = vmatprep.mubr.f32.mxu0 %v492
      %1524 = vmatmul.mubr.f32.gmra.mrb[0].mxu0 %v491
      %v1525 = vpop.f32.mrb[0].mxu0
      %v1526 = vadd.f32 %v1141, %v1525
      %v1527 = vpop.f32.mrb[0].mxu0
      %1528 = vmatprep.mubr.f32.mxu0 %v497
      %1529 = vmatmul.mubr.f32.gmra.mrb[0].mxu0 %v496
      %v1530 = vpop.f32.mrb[0].mxu0
      %v1531 = vadd.f32 %v1146, %v1530
      %v1532 = vpop.f32.mrb[0].mxu0
      %1533 = vmatprep.mubr.f32.mxu0 %v502
      %1534 = vmatmul.mubr.f32.gmra.mrb[0].mxu0 %v501
      %v1535 = vpop.f32.mrb[0].mxu0
      %v1536 = vadd.f32 %v1151, %v1535
      %v1537 = vpop.f32.mrb[0].mxu0
      %1538 = vmatprep.mubr.f32.mxu0 %v507
      %1539 = vmatmul.mubr.f32.gmra.mrb[0].mxu0 %v506
      %v1540 = vpop.f32.mrb[0].mxu0
      %v1541 = vadd.f32 %v1156, %v1540
      %v1542 = vpop.f32.mrb[0].mxu0
      %1543 = vmatprep.mubr.f32.mxu0 %v512
      %1544 = vmatmul.mubr.f32.gmra.mrb[0].mxu0 %v511
      %v1545 = vpop.f32.mrb[0].mxu0
      %v1546 = vadd.f32 %v1161, %v1545
      %v1547 = vpop.f32.mrb[0].mxu0
      %1548 = vmatprep.mubr.f32.mxu0 %v517
      %1549 = vmatmul.mubr.f32.gmra.mrb[0].mxu0 %v516
      %v1550 = vpop.f32.mrb[0].mxu0
      %v1551 = vadd.f32 %v1166, %v1550
      %v1552 = vpop.f32.mrb[0].mxu0
      %1553 = vmatprep.mubr.f32.mxu0 %v522
      %1554 = vmatmul.mubr.f32.gmra.mrb[0].mxu0 %v521
      %v1555 = vpop.f32.mrb[0].mxu0
      %v1556 = vadd.f32 %v1171, %v1555
      %v1557 = vpop.f32.mrb[0].mxu0
      %1558 = vmatprep.mubr.f32.mxu0 %v527
      %1559 = vmatmul.mubr.f32.gmra.mrb[0].mxu0 %v526
      %v1560 = vpop.f32.mrb[0].mxu0
      %v1561 = vadd.f32 %v1176, %v1560
      %v1562 = vpop.f32.mrb[0].mxu0
      %1563 = vmatprep.mubr.f32.mxu0 %v532
      %1564 = vmatmul.mubr.f32.gmra.mrb[0].mxu0 %v531
      %v1565 = vpop.f32.mrb[0].mxu0
      %v1566 = vadd.f32 %v1181, %v1565
      %v1567 = vpop.f32.mrb[0].mxu0
      %1568 = vmatprep.mubr.f32.mxu0 %v537
      %1569 = vmatmul.mubr.f32.gmra.mrb[0].mxu0 %v536
      %v1570 = vpop.f32.mrb[0].mxu0
      %v1571 = vadd.f32 %v1186, %v1570
      %v1572 = vpop.f32.mrb[0].mxu0
      %1573 = vmatprep.mubr.f32.mxu0 %v542
      %1574 = vmatmul.mubr.f32.gmra.mrb[0].mxu0 %v541
      %v1575 = vpop.f32.mrb[0].mxu0
      %v1576 = vadd.f32 %v1191, %v1575
      %v1577 = vpop.f32.mrb[0].mxu0
      %1578 = vmatprep.mubr.f32.mxu0 %v547
      %1579 = vmatmul.mubr.f32.gmra.mrb[0].mxu0 %v546
      %v1580 = vpop.f32.mrb[0].mxu0
      %v1581 = vadd.f32 %v1196, %v1580
      %v1582 = vpop.f32.mrb[0].mxu0
      %1583 = vmatprep.mubr.f32.mxu0 %v552
      %1584 = vmatmul.mubr.f32.gmra.mrb[0].mxu0 %v551
      %v1585 = vpop.f32.mrb[0].mxu0
      %v1586 = vadd.f32 %v1201, %v1585
      %v1587 = vpop.f32.mrb[0].mxu0
      %1588 = vmatprep.mubr.f32.mxu0 %v557
      %1589 = vmatmul.mubr.f32.gmra.mrb[0].mxu0 %v556
      %v1590 = vpop.f32.mrb[0].mxu0
      %v1591 = vadd.f32 %v1206, %v1590
      %v1592 = vpop.f32.mrb[0].mxu0
      %1593 = vmatprep.mubr.f32.mxu0 %v562
      %1594 = vmatmul.mubr.f32.gmra.mrb[0].mxu0 %v561
      %v1595 = vpop.f32.mrb[0].mxu0
      %v1596 = vadd.f32 %v1211, %v1595
      %v1597 = vpop.f32.mrb[0].mxu0
      %1598 = vmatprep.mubr.f32.mxu0 %v567
      %1599 = vmatmul.mubr.f32.gmra.mrb[0].mxu0 %v566
      %v1600 = vpop.f32.mrb[0].mxu0
      %v1601 = vadd.f32 %v1216, %v1600
      %v1602 = vpop.f32.mrb[0].mxu0
      %1603 = vmatprep.mubr.f32.mxu0 %v572
      %1604 = vmatmul.mubr.f32.gmra.mrb[0].mxu0 %v571
      %v1605 = vpop.f32.mrb[0].mxu0
      %v1606 = vadd.f32 %v1221, %v1605
      %v1607 = vpop.f32.mrb[0].mxu0
      %1608 = vmatprep.mubr.f32.mxu0 %v577
      %1609 = vmatmul.mubr.f32.gmra.mrb[0].mxu0 %v576
      %v1610 = vpop.f32.mrb[0].mxu0
      %v1611 = vadd.f32 %v1226, %v1610
      %v1612 = vpop.f32.mrb[0].mxu0
      %1613 = vmatprep.mubr.f32.mxu0 %v582
      %1614 = vmatmul.mubr.f32.gmra.mrb[0].mxu0 %v581
      %v1615 = vpop.f32.mrb[0].mxu0
      %v1616 = vadd.f32 %v1231, %v1615
      %v1617 = vpop.f32.mrb[0].mxu0
      %1618 = vmatprep.mubr.f32.mxu0 %v587
      %1619 = vmatmul.mubr.f32.gmra.mrb[0].mxu0 %v586
      %v1620 = vpop.f32.mrb[0].mxu0
      %v1621 = vadd.f32 %v1236, %v1620
      %v1622 = vpop.f32.mrb[0].mxu0
      %1623 = vmatprep.mubr.f32.mxu0 %v592
      %1624 = vmatmul.mubr.f32.gmra.mrb[0].mxu0 %v591
      %v1625 = vpop.f32.mrb[0].mxu0
      %v1626 = vadd.f32 %v1241, %v1625
      %v1627 = vpop.f32.mrb[0].mxu0
      %1628 = vmatprep.mubr.f32.mxu0 %v597
      %1629 = vmatmul.mubr.f32.gmra.mrb[0].mxu0 %v596
      %v1630 = vpop.f32.mrb[0].mxu0
      %v1631 = vadd.f32 %v1246, %v1630
      %v1632 = vpop.f32.mrb[0].mxu0
      %1633 = vmatprep.mubr.f32.mxu0 %v602
      %1634 = vmatmul.mubr.f32.gmra.mrb[0].mxu0 %v601
      %v1635 = vpop.f32.mrb[0].mxu0
      %v1636 = vadd.f32 %v1251, %v1635
      %v1637 = vpop.f32.mrb[0].mxu0
      %1638 = vmatprep.mubr.f32.mxu0 %v607
      %1639 = vmatmul.mubr.f32.gmra.mrb[0].mxu0 %v606
      %v1640 = vpop.f32.mrb[0].mxu0
      %v1641 = vadd.f32 %v1256, %v1640
      %v1642 = vpop.f32.mrb[0].mxu0
      %1643 = vmatprep.mubr.f32.mxu0 %v612
      %1644 = vmatmul.mubr.f32.gmra.mrb[0].mxu0 %v611
      %v1645 = vpop.f32.mrb[0].mxu0
      %v1646 = vadd.f32 %v1261, %v1645
      %v1647 = vpop.f32.mrb[0].mxu0
      %1648 = vmatprep.mubr.f32.mxu0 %v617
      %1649 = vmatmul.mubr.f32.gmra.mrb[0].mxu0 %v616
      %v1650 = vpop.f32.mrb[0].mxu0
      %v1651 = vadd.f32 %v1266, %v1650
      %v1652 = vpop.f32.mrb[0].mxu0
      %1653 = vmatprep.mubr.f32.mxu0 %v622
      %1654 = vmatmul.mubr.f32.gmra.mrb[0].mxu0 %v621
      %v1655 = vpop.f32.mrb[0].mxu0
      %v1656 = vadd.f32 %v1271, %v1655
      %v1657 = vpop.f32.mrb[0].mxu0
      %1658 = vmatprep.mubr.f32.mxu0 %v627
      %1659 = vmatmul.mubr.f32.gmra.mrb[0].mxu0 %v626
      %v1660 = vpop.f32.mrb[0].mxu0
      %v1661 = vadd.f32 %v1276, %v1660
      %v1662 = vpop.f32.mrb[0].mxu0
      %1663 = vmatprep.mubr.f32.mxu0 %v632
      %1664 = vmatmul.mubr.f32.gmra.mrb[0].mxu0 %v631
      %v1665 = vpop.f32.mrb[0].mxu0
      %v1666 = vadd.f32 %v1281, %v1665
      %v1667 = vpop.f32.mrb[0].mxu0
      %1668 = vmatprep.mubr.f32.mxu0 %v637
      %1669 = vmatmul.mubr.f32.gmra.mrb[0].mxu0 %v636
      %v1670 = vpop.f32.mrb[0].mxu0
      %v1671 = vadd.f32 %v1286, %v1670
      %v1672 = vpop.f32.mrb[0].mxu0
      %1673 = vmatprep.mubr.f32.mxu0 %v642
      %1674 = vmatmul.mubr.f32.gmra.mrb[0].mxu0 %v641
      %v1675 = vpop.f32.mrb[0].mxu0
      %v1676 = vadd.f32 %v1291, %v1675
      %v1677 = vpop.f32.mrb[0].mxu0
      %1678 = vmatprep.mubr.f32.mxu0 %v647
      %1679 = vmatmul.mubr.f32.gmra.mrb[0].mxu0 %v646
      %v1680 = vpop.f32.mrb[0].mxu0
      %v1681 = vadd.f32 %v1296, %v1680
      %v1682 = vpop.f32.mrb[0].mxu0
      %1683 = vmatprep.mubr.f32.mxu0 %v652
      %1684 = vmatmul.mubr.f32.gmra.mrb[0].mxu0 %v651
      %v1685 = vpop.f32.mrb[0].mxu0
      %v1686 = vadd.f32 %v1301, %v1685
      %v1687 = vpop.f32.mrb[0].mxu0
      %1688 = vmatprep.mubr.f32.mxu0 %v657
      %1689 = vmatmul.mubr.f32.gmra.mrb[0].mxu0 %v656
      %v1690 = vpop.f32.mrb[0].mxu0
      %v1691 = vadd.f32 %v1306, %v1690
      %v1692 = vpop.f32.mrb[0].mxu0
      %1693 = vdwg.mxu0
      %1694 = vmatprep.subr.mxu0 0.0
      %1695 = vmatpush1.msra.mxu0 %v723
      %1696 = vmatprep.subr.mxu0 0.0
      %1697 = vmatpush1.msra.mxu0 %v724
      %1698 = vmatprep.subr.mxu0 0.0
      %1699 = vmatpush1.msra.mxu0 %v725
      %1700 = vmatprep.subr.mxu0 0.0
      %1701 = vmatpush1.msra.mxu0 %v726
      %1702 = vmatprep.subr.mxu0 0.0
      %1703 = vmatpush1.msra.mxu0 %v727
      %1704 = vmatprep.subr.mxu0 0.0
      %1705 = vmatpush1.msra.mxu0 %v728
      %1706 = vmatprep.subr.mxu0 0.0
      %1707 = vmatpush1.msra.mxu0 %v729
      %1708 = vmatprep.subr.mxu0 0.0
      %1709 = vmatpush1.msra.mxu0 %v730
      %1710 = vmatprep.subr.mxu0 0.0
      %1711 = vmatpush1.msra.mxu0 0.0
      %1712 = vmatprep.subr.mxu0 0.0
      %1713 = vmatpush1.msra.mxu0 0.0
      %1714 = vmatprep.subr.mxu0 0.0
      %1715 = vmatpush1.msra.mxu0 0.0
      %1716 = vmatprep.subr.mxu0 0.0
      %1717 = vmatpush1.msra.mxu0 0.0
      %1718 = vmatprep.subr.mxu0 0.0
      %1719 = vmatpush1.msra.mxu0 0.0
      %1720 = vmatprep.subr.mxu0 0.0
      %1721 = vmatpush1.msra.mxu0 0.0
      %1722 = vmatprep.subr.mxu0 0.0
      %1723 = vmatpush1.msra.mxu0 0.0
      %1724 = vmatprep.subr.mxu0 0.0
      %1725 = vmatpush1.msra.mxu0 0.0
      %1726 = vmatprep.subr.mxu0 0.0
      %1727 = vmatpush1.msra.mxu0 0.0
      %1728 = vmatprep.subr.mxu0 0.0
      %1729 = vmatpush1.msra.mxu0 0.0
      %1730 = vmatprep.subr.mxu0 0.0
      %1731 = vmatpush1.msra.mxu0 0.0
      %1732 = vmatprep.subr.mxu0 0.0
      %1733 = vmatpush1.msra.mxu0 0.0
      %1734 = vmatprep.subr.mxu0 0.0
      %1735 = vmatpush1.msra.mxu0 0.0
      %1736 = vmatprep.subr.mxu0 0.0
      %1737 = vmatpush1.msra.mxu0 0.0
      %1738 = vmatprep.subr.mxu0 0.0
      %1739 = vmatpush1.msra.mxu0 0.0
      %1740 = vmatprep.subr.mxu0 0.0
      %1741 = vmatpush1.msra.mxu0 0.0
      %1742 = vmatprep.subr.mxu0 0.0
      %1743 = vmatpush1.msra.mxu0 0.0
      %1744 = vmatprep.subr.mxu0 0.0
      %1745 = vmatpush1.msra.mxu0 0.0
      %1746 = vmatprep.subr.mxu0 0.0
      %1747 = vmatpush1.msra.mxu0 0.0
      %1748 = vmatprep.subr.mxu0 0.0
      %1749 = vmatpush1.msra.mxu0 0.0
      %1750 = vmatprep.subr.mxu0 0.0
      %1751 = vmatpush1.msra.mxu0 0.0
      %1752 = vmatprep.subr.mxu0 0.0
      %1753 = vmatpush1.msra.mxu0 0.0
      %1754 = vmatprep.subr.mxu0 0.0
      %1755 = vmatpush1.msra.mxu0 0.0
      %1756 = vmatprep.subr.mxu0 0.0
      %1757 = vmatpush1.msra.mxu0 0.0
      %1758 = vmatprep.mubr.f32.mxu0 0.0
      %1759 = vmatmul.mubr.f32.gmra.mrb[0].mxu0 %v733
      %v1760 = vpop.f32.mrb[0].mxu0
      %v1761 = vadd.f32 %v1376, %v1760
      %v1762 = vpop.f32.mrb[0].mxu0
      %1763 = vmatprep.mubr.f32.mxu0 0.0
      %1764 = vmatmul.mubr.f32.gmra.mrb[0].mxu0 %v736
      %v1765 = vpop.f32.mrb[0].mxu0
      %v1766 = vadd.f32 %v1381, %v1765
      %v1767 = vpop.f32.mrb[0].mxu0
      %1768 = vmatprep.mubr.f32.mxu0 0.0
      %1769 = vmatmul.mubr.f32.gmra.mrb[0].mxu0 %v739
      %v1770 = vpop.f32.mrb[0].mxu0
      %v1771 = vadd.f32 %v1386, %v1770
      %v1772 = vpop.f32.mrb[0].mxu0
      %1773 = vmatprep.mubr.f32.mxu0 0.0
      %1774 = vmatmul.mubr.f32.gmra.mrb[0].mxu0 %v742
      %v1775 = vpop.f32.mrb[0].mxu0
      %v1776 = vadd.f32 %v1391, %v1775
      %v1777 = vpop.f32.mrb[0].mxu0
      %1778 = vmatprep.mubr.f32.mxu0 0.0
      %1779 = vmatmul.mubr.f32.gmra.mrb[0].mxu0 %v745
      %v1780 = vpop.f32.mrb[0].mxu0
      %v1781 = vadd.f32 %v1396, %v1780
      %v1782 = vpop.f32.mrb[0].mxu0
      %1783 = vmatprep.mubr.f32.mxu0 0.0
      %1784 = vmatmul.mubr.f32.gmra.mrb[0].mxu0 %v748
      %v1785 = vpop.f32.mrb[0].mxu0
      %v1786 = vadd.f32 %v1401, %v1785
      %v1787 = vpop.f32.mrb[0].mxu0
      %1788 = vmatprep.mubr.f32.mxu0 0.0
      %1789 = vmatmul.mubr.f32.gmra.mrb[0].mxu0 %v751
      %v1790 = vpop.f32.mrb[0].mxu0
      %v1791 = vadd.f32 %v1406, %v1790
      %v1792 = vpop.f32.mrb[0].mxu0
      %1793 = vmatprep.mubr.f32.mxu0 0.0
      %1794 = vmatmul.mubr.f32.gmra.mrb[0].mxu0 %v754
      %v1795 = vpop.f32.mrb[0].mxu0
      %v1796 = vadd.f32 %v1411, %v1795
      %v1797 = vpop.f32.mrb[0].mxu0
      %1798 = vmatprep.mubr.f32.mxu0 0.0
      %1799 = vmatmul.mubr.f32.gmra.mrb[0].mxu0 %v757
      %v1800 = vpop.f32.mrb[0].mxu0
      %v1801 = vadd.f32 %v1416, %v1800
      %v1802 = vpop.f32.mrb[0].mxu0
      %1803 = vmatprep.mubr.f32.mxu0 0.0
      %1804 = vmatmul.mubr.f32.gmra.mrb[0].mxu0 %v760
      %v1805 = vpop.f32.mrb[0].mxu0
      %v1806 = vadd.f32 %v1421, %v1805
      %v1807 = vpop.f32.mrb[0].mxu0
      %1808 = vmatprep.mubr.f32.mxu0 0.0
      %1809 = vmatmul.mubr.f32.gmra.mrb[0].mxu0 %v763
      %v1810 = vpop.f32.mrb[0].mxu0
      %v1811 = vadd.f32 %v1426, %v1810
      %v1812 = vpop.f32.mrb[0].mxu0
      %1813 = vmatprep.mubr.f32.mxu0 0.0
      %1814 = vmatmul.mubr.f32.gmra.mrb[0].mxu0 %v766
      %v1815 = vpop.f32.mrb[0].mxu0
      %v1816 = vadd.f32 %v1431, %v1815
      %v1817 = vpop.f32.mrb[0].mxu0
      %1818 = vmatprep.mubr.f32.mxu0 0.0
      %1819 = vmatmul.mubr.f32.gmra.mrb[0].mxu0 %v769
      %v1820 = vpop.f32.mrb[0].mxu0
      %v1821 = vadd.f32 %v1436, %v1820
      %v1822 = vpop.f32.mrb[0].mxu0
      %1823 = vmatprep.mubr.f32.mxu0 0.0
      %1824 = vmatmul.mubr.f32.gmra.mrb[0].mxu0 %v772
      %v1825 = vpop.f32.mrb[0].mxu0
      %v1826 = vadd.f32 %v1441, %v1825
      %v1827 = vpop.f32.mrb[0].mxu0
      %1828 = vmatprep.mubr.f32.mxu0 0.0
      %1829 = vmatmul.mubr.f32.gmra.mrb[0].mxu0 %v775
      %v1830 = vpop.f32.mrb[0].mxu0
      %v1831 = vadd.f32 %v1446, %v1830
      %v1832 = vpop.f32.mrb[0].mxu0
      %1833 = vmatprep.mubr.f32.mxu0 0.0
      %1834 = vmatmul.mubr.f32.gmra.mrb[0].mxu0 %v778
      %v1835 = vpop.f32.mrb[0].mxu0
      %v1836 = vadd.f32 %v1451, %v1835
      %v1837 = vpop.f32.mrb[0].mxu0
      %1838 = vmatprep.mubr.f32.mxu0 0.0
      %1839 = vmatmul.mubr.f32.gmra.mrb[0].mxu0 %v781
      %v1840 = vpop.f32.mrb[0].mxu0
      %v1841 = vadd.f32 %v1456, %v1840
      %v1842 = vpop.f32.mrb[0].mxu0
      %1843 = vmatprep.mubr.f32.mxu0 0.0
      %1844 = vmatmul.mubr.f32.gmra.mrb[0].mxu0 %v784
      %v1845 = vpop.f32.mrb[0].mxu0
      %v1846 = vadd.f32 %v1461, %v1845
      %v1847 = vpop.f32.mrb[0].mxu0
      %1848 = vmatprep.mubr.f32.mxu0 0.0
      %1849 = vmatmul.mubr.f32.gmra.mrb[0].mxu0 %v787
      %v1850 = vpop.f32.mrb[0].mxu0
      %v1851 = vadd.f32 %v1466, %v1850
      %v1852 = vpop.f32.mrb[0].mxu0
      %1853 = vmatprep.mubr.f32.mxu0 0.0
      %1854 = vmatmul.mubr.f32.gmra.mrb[0].mxu0 %v790
      %v1855 = vpop.f32.mrb[0].mxu0
      %v1856 = vadd.f32 %v1471, %v1855
      %v1857 = vpop.f32.mrb[0].mxu0
      %1858 = vmatprep.mubr.f32.mxu0 0.0
      %1859 = vmatmul.mubr.f32.gmra.mrb[0].mxu0 %v793
      %v1860 = vpop.f32.mrb[0].mxu0
      %v1861 = vadd.f32 %v1476, %v1860
      %v1862 = vpop.f32.mrb[0].mxu0
      %1863 = vmatprep.mubr.f32.mxu0 0.0
      %1864 = vmatmul.mubr.f32.gmra.mrb[0].mxu0 %v796
      %v1865 = vpop.f32.mrb[0].mxu0
      %v1866 = vadd.f32 %v1481, %v1865
      %v1867 = vpop.f32.mrb[0].mxu0
      %1868 = vmatprep.mubr.f32.mxu0 0.0
      %1869 = vmatmul.mubr.f32.gmra.mrb[0].mxu0 %v799
      %v1870 = vpop.f32.mrb[0].mxu0
      %v1871 = vadd.f32 %v1486, %v1870
      %v1872 = vpop.f32.mrb[0].mxu0
      %1873 = vmatprep.mubr.f32.mxu0 0.0
      %1874 = vmatmul.mubr.f32.gmra.mrb[0].mxu0 %v802
      %v1875 = vpop.f32.mrb[0].mxu0
      %v1876 = vadd.f32 %v1491, %v1875
      %v1877 = vpop.f32.mrb[0].mxu0
      %1878 = vmatprep.mubr.f32.mxu0 0.0
      %1879 = vmatmul.mubr.f32.gmra.mrb[0].mxu0 %v805
      %v1880 = vpop.f32.mrb[0].mxu0
      %v1881 = vadd.f32 %v1496, %v1880
      %v1882 = vpop.f32.mrb[0].mxu0
      %1883 = vmatprep.mubr.f32.mxu0 0.0
      %1884 = vmatmul.mubr.f32.gmra.mrb[0].mxu0 %v808
      %v1885 = vpop.f32.mrb[0].mxu0
      %v1886 = vadd.f32 %v1501, %v1885
      %v1887 = vpop.f32.mrb[0].mxu0
      %1888 = vmatprep.mubr.f32.mxu0 0.0
      %1889 = vmatmul.mubr.f32.gmra.mrb[0].mxu0 %v811
      %v1890 = vpop.f32.mrb[0].mxu0
      %v1891 = vadd.f32 %v1506, %v1890
      %v1892 = vpop.f32.mrb[0].mxu0
      %1893 = vmatprep.mubr.f32.mxu0 0.0
      %1894 = vmatmul.mubr.f32.gmra.mrb[0].mxu0 %v814
      %v1895 = vpop.f32.mrb[0].mxu0
      %v1896 = vadd.f32 %v1511, %v1895
      %v1897 = vpop.f32.mrb[0].mxu0
      %1898 = vmatprep.mubr.f32.mxu0 0.0
      %1899 = vmatmul.mubr.f32.gmra.mrb[0].mxu0 %v817
      %v1900 = vpop.f32.mrb[0].mxu0
      %v1901 = vadd.f32 %v1516, %v1900
      %v1902 = vpop.f32.mrb[0].mxu0
      %1903 = vmatprep.mubr.f32.mxu0 0.0
      %1904 = vmatmul.mubr.f32.gmra.mrb[0].mxu0 %v820
      %v1905 = vpop.f32.mrb[0].mxu0
      %v1906 = vadd.f32 %v1521, %v1905
      %v1907 = vpop.f32.mrb[0].mxu0
      %1908 = vmatprep.mubr.f32.mxu0 0.0
      %1909 = vmatmul.mubr.f32.gmra.mrb[0].mxu0 %v823
      %v1910 = vpop.f32.mrb[0].mxu0
      %v1911 = vadd.f32 %v1526, %v1910
      %v1912 = vpop.f32.mrb[0].mxu0
      %1913 = vmatprep.mubr.f32.mxu0 0.0
      %1914 = vmatmul.mubr.f32.gmra.mrb[0].mxu0 %v826
      %v1915 = vpop.f32.mrb[0].mxu0
      %v1916 = vadd.f32 %v1531, %v1915
      %v1917 = vpop.f32.mrb[0].mxu0
      %1918 = vmatprep.mubr.f32.mxu0 0.0
      %1919 = vmatmul.mubr.f32.gmra.mrb[0].mxu0 %v829
      %v1920 = vpop.f32.mrb[0].mxu0
      %v1921 = vadd.f32 %v1536, %v1920
      %v1922 = vpop.f32.mrb[0].mxu0
      %1923 = vmatprep.mubr.f32.mxu0 0.0
      %1924 = vmatmul.mubr.f32.gmra.mrb[0].mxu0 %v832
      %v1925 = vpop.f32.mrb[0].mxu0
      %v1926 = vadd.f32 %v1541, %v1925
      %v1927 = vpop.f32.mrb[0].mxu0
      %1928 = vmatprep.mubr.f32.mxu0 0.0
      %1929 = vmatmul.mubr.f32.gmra.mrb[0].mxu0 %v835
      %v1930 = vpop.f32.mrb[0].mxu0
      %v1931 = vadd.f32 %v1546, %v1930
      %v1932 = vpop.f32.mrb[0].mxu0
      %1933 = vmatprep.mubr.f32.mxu0 0.0
      %1934 = vmatmul.mubr.f32.gmra.mrb[0].mxu0 %v838
      %v1935 = vpop.f32.mrb[0].mxu0
      %v1936 = vadd.f32 %v1551, %v1935
      %v1937 = vpop.f32.mrb[0].mxu0
      %1938 = vmatprep.mubr.f32.mxu0 0.0
      %1939 = vmatmul.mubr.f32.gmra.mrb[0].mxu0 %v841
      %v1940 = vpop.f32.mrb[0].mxu0
      %v1941 = vadd.f32 %v1556, %v1940
      %v1942 = vpop.f32.mrb[0].mxu0
      %1943 = vmatprep.mubr.f32.mxu0 0.0
      %1944 = vmatmul.mubr.f32.gmra.mrb[0].mxu0 %v844
      %v1945 = vpop.f32.mrb[0].mxu0
      %v1946 = vadd.f32 %v1561, %v1945
      %v1947 = vpop.f32.mrb[0].mxu0
      %1948 = vmatprep.mubr.f32.mxu0 0.0
      %1949 = vmatmul.mubr.f32.gmra.mrb[0].mxu0 %v847
      %v1950 = vpop.f32.mrb[0].mxu0
      %v1951 = vadd.f32 %v1566, %v1950
      %v1952 = vpop.f32.mrb[0].mxu0
      %1953 = vmatprep.mubr.f32.mxu0 0.0
      %1954 = vmatmul.mubr.f32.gmra.mrb[0].mxu0 %v850
      %v1955 = vpop.f32.mrb[0].mxu0
      %v1956 = vadd.f32 %v1571, %v1955
      %v1957 = vpop.f32.mrb[0].mxu0
      %1958 = vmatprep.mubr.f32.mxu0 0.0
      %1959 = vmatmul.mubr.f32.gmra.mrb[0].mxu0 %v853
      %v1960 = vpop.f32.mrb[0].mxu0
      %v1961 = vadd.f32 %v1576, %v1960
      %v1962 = vpop.f32.mrb[0].mxu0
      %1963 = vmatprep.mubr.f32.mxu0 0.0
      %1964 = vmatmul.mubr.f32.gmra.mrb[0].mxu0 %v856
      %v1965 = vpop.f32.mrb[0].mxu0
      %v1966 = vadd.f32 %v1581, %v1965
      %v1967 = vpop.f32.mrb[0].mxu0
      %1968 = vmatprep.mubr.f32.mxu0 0.0
      %1969 = vmatmul.mubr.f32.gmra.mrb[0].mxu0 %v859
      %v1970 = vpop.f32.mrb[0].mxu0
      %v1971 = vadd.f32 %v1586, %v1970
      %v1972 = vpop.f32.mrb[0].mxu0
      %1973 = vmatprep.mubr.f32.mxu0 0.0
      %1974 = vmatmul.mubr.f32.gmra.mrb[0].mxu0 %v862
      %v1975 = vpop.f32.mrb[0].mxu0
      %v1976 = vadd.f32 %v1591, %v1975
      %v1977 = vpop.f32.mrb[0].mxu0
      %1978 = vmatprep.mubr.f32.mxu0 0.0
      %1979 = vmatmul.mubr.f32.gmra.mrb[0].mxu0 %v865
      %v1980 = vpop.f32.mrb[0].mxu0
      %v1981 = vadd.f32 %v1596, %v1980
      %v1982 = vpop.f32.mrb[0].mxu0
      %1983 = vmatprep.mubr.f32.mxu0 0.0
      %1984 = vmatmul.mubr.f32.gmra.mrb[0].mxu0 %v868
      %v1985 = vpop.f32.mrb[0].mxu0
      %v1986 = vadd.f32 %v1601, %v1985
      %v1987 = vpop.f32.mrb[0].mxu0
      %1988 = vmatprep.mubr.f32.mxu0 0.0
      %1989 = vmatmul.mubr.f32.gmra.mrb[0].mxu0 %v871
      %v1990 = vpop.f32.mrb[0].mxu0
      %v1991 = vadd.f32 %v1606, %v1990
      %v1992 = vpop.f32.mrb[0].mxu0
      %1993 = vmatprep.mubr.f32.mxu0 0.0
      %1994 = vmatmul.mubr.f32.gmra.mrb[0].mxu0 %v874
      %v1995 = vpop.f32.mrb[0].mxu0
      %v1996 = vadd.f32 %v1611, %v1995
      %v1997 = vpop.f32.mrb[0].mxu0
      %1998 = vmatprep.mubr.f32.mxu0 0.0
      %1999 = vmatmul.mubr.f32.gmra.mrb[0].mxu0 %v877
      %v2000 = vpop.f32.mrb[0].mxu0
      %v2001 = vadd.f32 %v1616, %v2000
      %v2002 = vpop.f32.mrb[0].mxu0
      %2003 = vmatprep.mubr.f32.mxu0 0.0
      %2004 = vmatmul.mubr.f32.gmra.mrb[0].mxu0 %v880
      %v2005 = vpop.f32.mrb[0].mxu0
      %v2006 = vadd.f32 %v1621, %v2005
      %v2007 = vpop.f32.mrb[0].mxu0
      %2008 = vmatprep.mubr.f32.mxu0 0.0
      %2009 = vmatmul.mubr.f32.gmra.mrb[0].mxu0 %v883
      %v2010 = vpop.f32.mrb[0].mxu0
      %v2011 = vadd.f32 %v1626, %v2010
      %v2012 = vpop.f32.mrb[0].mxu0
      %2013 = vmatprep.mubr.f32.mxu0 0.0
      %2014 = vmatmul.mubr.f32.gmra.mrb[0].mxu0 %v886
      %v2015 = vpop.f32.mrb[0].mxu0
      %v2016 = vadd.f32 %v1631, %v2015
      %v2017 = vpop.f32.mrb[0].mxu0
      %2018 = vmatprep.mubr.f32.mxu0 0.0
      %2019 = vmatmul.mubr.f32.gmra.mrb[0].mxu0 %v889
      %v2020 = vpop.f32.mrb[0].mxu0
      %v2021 = vadd.f32 %v1636, %v2020
      %v2022 = vpop.f32.mrb[0].mxu0
      %2023 = vmatprep.mubr.f32.mxu0 0.0
      %2024 = vmatmul.mubr.f32.gmra.mrb[0].mxu0 %v892
      %v2025 = vpop.f32.mrb[0].mxu0
      %v2026 = vadd.f32 %v1641, %v2025
      %v2027 = vpop.f32.mrb[0].mxu0
      %2028 = vmatprep.mubr.f32.mxu0 0.0
      %2029 = vmatmul.mubr.f32.gmra.mrb[0].mxu0 %v895
      %v2030 = vpop.f32.mrb[0].mxu0
      %v2031 = vadd.f32 %v1646, %v2030
      %v2032 = vpop.f32.mrb[0].mxu0
      %2033 = vmatprep.mubr.f32.mxu0 0.0
      %2034 = vmatmul.mubr.f32.gmra.mrb[0].mxu0 %v898
      %v2035 = vpop.f32.mrb[0].mxu0
      %v2036 = vadd.f32 %v1651, %v2035
      %v2037 = vpop.f32.mrb[0].mxu0
      %2038 = vmatprep.mubr.f32.mxu0 0.0
      %2039 = vmatmul.mubr.f32.gmra.mrb[0].mxu0 %v901
      %v2040 = vpop.f32.mrb[0].mxu0
      %v2041 = vadd.f32 %v1656, %v2040
      %v2042 = vpop.f32.mrb[0].mxu0
      %2043 = vmatprep.mubr.f32.mxu0 0.0
      %2044 = vmatmul.mubr.f32.gmra.mrb[0].mxu0 %v904
      %v2045 = vpop.f32.mrb[0].mxu0
      %v2046 = vadd.f32 %v1661, %v2045
      %v2047 = vpop.f32.mrb[0].mxu0
      %2048 = vmatprep.mubr.f32.mxu0 0.0
      %2049 = vmatmul.mubr.f32.gmra.mrb[0].mxu0 %v907
      %v2050 = vpop.f32.mrb[0].mxu0
      %v2051 = vadd.f32 %v1666, %v2050
      %v2052 = vpop.f32.mrb[0].mxu0
      %2053 = vmatprep.mubr.f32.mxu0 0.0
      %2054 = vmatmul.mubr.f32.gmra.mrb[0].mxu0 %v910
      %v2055 = vpop.f32.mrb[0].mxu0
      %v2056 = vadd.f32 %v1671, %v2055
      %v2057 = vpop.f32.mrb[0].mxu0
      %2058 = vmatprep.mubr.f32.mxu0 0.0
      %2059 = vmatmul.mubr.f32.gmra.mrb[0].mxu0 %v913
      %v2060 = vpop.f32.mrb[0].mxu0
      %v2061 = vadd.f32 %v1676, %v2060
      %v2062 = vpop.f32.mrb[0].mxu0
      %2063 = vmatprep.mubr.f32.mxu0 0.0
      %2064 = vmatmul.mubr.f32.gmra.mrb[0].mxu0 %v916
      %v2065 = vpop.f32.mrb[0].mxu0
      %v2066 = vadd.f32 %v1681, %v2065
      %v2067 = vpop.f32.mrb[0].mxu0
      %2068 = vmatprep.mubr.f32.mxu0 0.0
      %2069 = vmatmul.mubr.f32.gmra.mrb[0].mxu0 %v919
      %v2070 = vpop.f32.mrb[0].mxu0
      %v2071 = vadd.f32 %v1686, %v2070
      %v2072 = vpop.f32.mrb[0].mxu0
      %2073 = vmatprep.mubr.f32.mxu0 0.0
      %2074 = vmatmul.mubr.f32.gmra.mrb[0].mxu0 %v922
      %v2075 = vpop.f32.mrb[0].mxu0
      %v2076 = vadd.f32 %v1691, %v2075
      %v2077 = vpop.f32.mrb[0].mxu0
      %2078 = vdwg.mxu0
      %v2079 = vld [vmem:[%s4] sm:$0x1]
      %v2081 = vlaneseq
      %v2082 = vshrl.u32 %v2081, 7
      %v2083 = vsub.s32 0, %v2082
      %v2084 = vrot.slane %v2079, %v2083
      %v2086 = vmul.f32 %v1761, %v2084
      %v2087 = vmul.f32 %v1766, %v2084
      %v2088 = vmul.f32 %v1771, %v2084
      %v2089 = vmul.f32 %v1776, %v2084
      %v2090 = vmul.f32 %v1781, %v2084
      %v2091 = vmul.f32 %v1786, %v2084
      %v2092 = vmul.f32 %v1791, %v2084
      %v2093 = vmul.f32 %v1796, %v2084
      %v2094 = vmul.f32 %v1801, %v2084
      %v2095 = vmul.f32 %v1806, %v2084
      %v2096 = vmul.f32 %v1811, %v2084
      %v2097 = vmul.f32 %v1816, %v2084
      %v2098 = vmul.f32 %v1821, %v2084
      %v2099 = vmul.f32 %v1826, %v2084
      %v2100 = vmul.f32 %v1831, %v2084
      %v2101 = vmul.f32 %v1836, %v2084
      %v2102 = vmul.f32 %v1841, %v2084
      %v2103 = vmul.f32 %v1846, %v2084
      %v2104 = vmul.f32 %v1851, %v2084
      %v2105 = vmul.f32 %v1856, %v2084
      %v2106 = vmul.f32 %v1861, %v2084
      %v2107 = vmul.f32 %v1866, %v2084
      %v2108 = vmul.f32 %v1871, %v2084
      %v2109 = vmul.f32 %v1876, %v2084
      %v2110 = vmul.f32 %v1881, %v2084
      %v2111 = vmul.f32 %v1886, %v2084
      %v2112 = vmul.f32 %v1891, %v2084
      %v2113 = vmul.f32 %v1896, %v2084
      %v2114 = vmul.f32 %v1901, %v2084
      %v2115 = vmul.f32 %v1906, %v2084
      %v2116 = vmul.f32 %v1911, %v2084
      %v2117 = vmul.f32 %v1916, %v2084
      %v2118 = vmul.f32 %v1921, %v2084
      %v2119 = vmul.f32 %v1926, %v2084
      %v2120 = vmul.f32 %v1931, %v2084
      %v2121 = vmul.f32 %v1936, %v2084
      %v2122 = vmul.f32 %v1941, %v2084
      %v2123 = vmul.f32 %v1946, %v2084
      %v2124 = vmul.f32 %v1951, %v2084
      %v2125 = vmul.f32 %v1956, %v2084
      %v2126 = vmul.f32 %v1961, %v2084
      %v2127 = vmul.f32 %v1966, %v2084
      %v2128 = vmul.f32 %v1971, %v2084
      %v2129 = vmul.f32 %v1976, %v2084
      %v2130 = vmul.f32 %v1981, %v2084
      %v2131 = vmul.f32 %v1986, %v2084
      %v2132 = vmul.f32 %v1991, %v2084
      %v2133 = vmul.f32 %v1996, %v2084
      %v2134 = vmul.f32 %v2001, %v2084
      %v2135 = vmul.f32 %v2006, %v2084
      %v2136 = vmul.f32 %v2011, %v2084
      %v2137 = vmul.f32 %v2016, %v2084
      %v2138 = vmul.f32 %v2021, %v2084
      %v2139 = vmul.f32 %v2026, %v2084
      %v2140 = vmul.f32 %v2031, %v2084
      %v2141 = vmul.f32 %v2036, %v2084
      %v2142 = vmul.f32 %v2041, %v2084
      %v2143 = vmul.f32 %v2046, %v2084
      %v2144 = vmul.f32 %v2051, %v2084
      %v2145 = vmul.f32 %v2056, %v2084
      %v2146 = vmul.f32 %v2061, %v2084
      %v2147 = vmul.f32 %v2066, %v2084
      %v2148 = vmul.f32 %v2071, %v2084
      %v2149 = vmul.f32 %v2076, %v2084
      %v2150 = vld [vmem:[%s5] sm:$0x1]
      %v2152 = vlaneseq
      %v2153 = vshrl.u32 %v2152, 7
      %v2154 = vsub.s32 0, %v2153
      %v2155 = vrot.slane %v2150, %v2154
      %v2157 = vadd.f32 %v2086, %v2155
      %v2158 = vadd.f32 %v2087, %v2155
      %v2159 = vadd.f32 %v2088, %v2155
      %v2160 = vadd.f32 %v2089, %v2155
      %v2161 = vadd.f32 %v2090, %v2155
      %v2162 = vadd.f32 %v2091, %v2155
      %v2163 = vadd.f32 %v2092, %v2155
      %v2164 = vadd.f32 %v2093, %v2155
      %v2165 = vadd.f32 %v2094, %v2155
      %v2166 = vadd.f32 %v2095, %v2155
      %v2167 = vadd.f32 %v2096, %v2155
      %v2168 = vadd.f32 %v2097, %v2155
      %v2169 = vadd.f32 %v2098, %v2155
      %v2170 = vadd.f32 %v2099, %v2155
      %v2171 = vadd.f32 %v2100, %v2155
      %v2172 = vadd.f32 %v2101, %v2155
      %v2173 = vadd.f32 %v2102, %v2155
      %v2174 = vadd.f32 %v2103, %v2155
      %v2175 = vadd.f32 %v2104, %v2155
      %v2176 = vadd.f32 %v2105, %v2155
      %v2177 = vadd.f32 %v2106, %v2155
      %v2178 = vadd.f32 %v2107, %v2155
      %v2179 = vadd.f32 %v2108, %v2155
      %v2180 = vadd.f32 %v2109, %v2155
      %v2181 = vadd.f32 %v2110, %v2155
      %v2182 = vadd.f32 %v2111, %v2155
      %v2183 = vadd.f32 %v2112, %v2155
      %v2184 = vadd.f32 %v2113, %v2155
      %v2185 = vadd.f32 %v2114, %v2155
      %v2186 = vadd.f32 %v2115, %v2155
      %v2187 = vadd.f32 %v2116, %v2155
      %v2188 = vadd.f32 %v2117, %v2155
      %v2189 = vadd.f32 %v2118, %v2155
      %v2190 = vadd.f32 %v2119, %v2155
      %v2191 = vadd.f32 %v2120, %v2155
      %v2192 = vadd.f32 %v2121, %v2155
      %v2193 = vadd.f32 %v2122, %v2155
      %v2194 = vadd.f32 %v2123, %v2155
      %v2195 = vadd.f32 %v2124, %v2155
      %v2196 = vadd.f32 %v2125, %v2155
      %v2197 = vadd.f32 %v2126, %v2155
      %v2198 = vadd.f32 %v2127, %v2155
      %v2199 = vadd.f32 %v2128, %v2155
      %v2200 = vadd.f32 %v2129, %v2155
      %v2201 = vadd.f32 %v2130, %v2155
      %v2202 = vadd.f32 %v2131, %v2155
      %v2203 = vadd.f32 %v2132, %v2155
      %v2204 = vadd.f32 %v2133, %v2155
      %v2205 = vadd.f32 %v2134, %v2155
      %v2206 = vadd.f32 %v2135, %v2155
      %v2207 = vadd.f32 %v2136, %v2155
      %v2208 = vadd.f32 %v2137, %v2155
      %v2209 = vadd.f32 %v2138, %v2155
      %v2210 = vadd.f32 %v2139, %v2155
      %v2211 = vadd.f32 %v2140, %v2155
      %v2212 = vadd.f32 %v2141, %v2155
      %v2213 = vadd.f32 %v2142, %v2155
      %v2214 = vadd.f32 %v2143, %v2155
      %v2215 = vadd.f32 %v2144, %v2155
      %v2216 = vadd.f32 %v2145, %v2155
      %v2217 = vadd.f32 %v2146, %v2155
      %v2218 = vadd.f32 %v2147, %v2155
      %v2219 = vadd.f32 %v2148, %v2155
      %v2220 = vadd.f32 %v2149, %v2155
      %v2221 = vmax.f32 %v2157, 0.0
      %v2222 = vmax.f32 %v2158, 0.0
      %v2223 = vmax.f32 %v2159, 0.0
      %v2224 = vmax.f32 %v2160, 0.0
      %v2225 = vmax.f32 %v2161, 0.0
      %v2226 = vmax.f32 %v2162, 0.0
      %v2227 = vmax.f32 %v2163, 0.0
      %v2228 = vmax.f32 %v2164, 0.0
      %v2229 = vmax.f32 %v2165, 0.0
      %v2230 = vmax.f32 %v2166, 0.0
      %v2231 = vmax.f32 %v2167, 0.0
      %v2232 = vmax.f32 %v2168, 0.0
      %v2233 = vmax.f32 %v2169, 0.0
      %v2234 = vmax.f32 %v2170, 0.0
      %v2235 = vmax.f32 %v2171, 0.0
      %v2236 = vmax.f32 %v2172, 0.0
      %v2237 = vmax.f32 %v2173, 0.0
      %v2238 = vmax.f32 %v2174, 0.0
      %v2239 = vmax.f32 %v2175, 0.0
      %v2240 = vmax.f32 %v2176, 0.0
      %v2241 = vmax.f32 %v2177, 0.0
      %v2242 = vmax.f32 %v2178, 0.0
      %v2243 = vmax.f32 %v2179, 0.0
      %v2244 = vmax.f32 %v2180, 0.0
      %v2245 = vmax.f32 %v2181, 0.0
      %v2246 = vmax.f32 %v2182, 0.0
      %v2247 = vmax.f32 %v2183, 0.0
      %v2248 = vmax.f32 %v2184, 0.0
      %v2249 = vmax.f32 %v2185, 0.0
      %v2250 = vmax.f32 %v2186, 0.0
      %v2251 = vmax.f32 %v2187, 0.0
      %v2252 = vmax.f32 %v2188, 0.0
      %v2253 = vmax.f32 %v2189, 0.0
      %v2254 = vmax.f32 %v2190, 0.0
      %v2255 = vmax.f32 %v2191, 0.0
      %v2256 = vmax.f32 %v2192, 0.0
      %v2257 = vmax.f32 %v2193, 0.0
      %v2258 = vmax.f32 %v2194, 0.0
      %v2259 = vmax.f32 %v2195, 0.0
      %v2260 = vmax.f32 %v2196, 0.0
      %v2261 = vmax.f32 %v2197, 0.0
      %v2262 = vmax.f32 %v2198, 0.0
      %v2263 = vmax.f32 %v2199, 0.0
      %v2264 = vmax.f32 %v2200, 0.0
      %v2265 = vmax.f32 %v2201, 0.0
      %v2266 = vmax.f32 %v2202, 0.0
      %v2267 = vmax.f32 %v2203, 0.0
      %v2268 = vmax.f32 %v2204, 0.0
      %v2269 = vmax.f32 %v2205, 0.0
      %v2270 = vmax.f32 %v2206, 0.0
      %v2271 = vmax.f32 %v2207, 0.0
      %v2272 = vmax.f32 %v2208, 0.0
      %v2273 = vmax.f32 %v2209, 0.0
      %v2274 = vmax.f32 %v2210, 0.0
      %v2275 = vmax.f32 %v2211, 0.0
      %v2276 = vmax.f32 %v2212, 0.0
      %v2277 = vmax.f32 %v2213, 0.0
      %v2278 = vmax.f32 %v2214, 0.0
      %v2279 = vmax.f32 %v2215, 0.0
      %v2280 = vmax.f32 %v2216, 0.0
      %v2281 = vmax.f32 %v2217, 0.0
      %v2282 = vmax.f32 %v2218, 0.0
      %v2283 = vmax.f32 %v2219, 0.0
      %v2284 = vmax.f32 %v2220, 0.0
      %v2285 = vlaneseq
      %v2286 = vshrl.u32 %v2285, 7
      %v2287 = vadd.s32 %v2286, 8
      %v2288 = vrot.slane %v2221, 7
      %v2289 = vrot.slane %v2223, 7
      %v2290 = vrot.slane %v2225, 7
      %v2291 = vrot.slane %v2227, 7
      %v2292 = vrot.slane %v2229, 7
      %v2293 = vrot.slane %v2231, 7
      %v2294 = vrot.slane %v2233, 7
      %v2295 = vrot.slane %v2235, 7
      %v2296 = vrot.slane %v2237, 7
      %v2297 = vrot.slane %v2239, 7
      %v2298 = vrot.slane %v2241, 7
      %v2299 = vrot.slane %v2243, 7
      %v2300 = vrot.slane %v2245, 7
      %v2301 = vrot.slane %v2247, 7
      %v2302 = vrot.slane %v2249, 7
      %v2303 = vrot.slane %v2251, 7
      %v2304 = vrot.slane %v2253, 7
      %v2305 = vrot.slane %v2255, 7
      %v2306 = vrot.slane %v2257, 7
      %v2307 = vrot.slane %v2259, 7
      %v2308 = vrot.slane %v2261, 7
      %v2309 = vrot.slane %v2263, 7
      %v2310 = vrot.slane %v2265, 7
      %v2311 = vrot.slane %v2267, 7
      %v2312 = vrot.slane %v2269, 7
      %v2313 = vrot.slane %v2271, 7
      %v2314 = vrot.slane %v2273, 7
      %v2315 = vrot.slane %v2275, 7
      %v2316 = vrot.slane %v2277, 7
      %v2317 = vrot.slane %v2279, 7
      %v2318 = vrot.slane %v2281, 7
      %v2319 = vrot.slane %v2283, 7
      %v2320 = vrot.slane %v2222, 7
      %v2321 = vrot.slane %v2224, 7
      %v2322 = vrot.slane %v2226, 7
      %v2323 = vrot.slane %v2228, 7
      %v2324 = vrot.slane %v2230, 7
      %v2325 = vrot.slane %v2232, 7
      %v2326 = vrot.slane %v2234, 7
      %v2327 = vrot.slane %v2236, 7
      %v2328 = vrot.slane %v2238, 7
      %v2329 = vrot.slane %v2240, 7
      %v2330 = vrot.slane %v2242, 7
      %v2331 = vrot.slane %v2244, 7
      %v2332 = vrot.slane %v2246, 7
      %v2333 = vrot.slane %v2248, 7
      %v2334 = vrot.slane %v2250, 7
      %v2335 = vrot.slane %v2252, 7
      %v2336 = vrot.slane %v2254, 7
      %v2337 = vrot.slane %v2256, 7
      %v2338 = vrot.slane %v2258, 7
      %v2339 = vrot.slane %v2260, 7
      %v2340 = vrot.slane %v2262, 7
      %v2341 = vrot.slane %v2264, 7
      %v2342 = vrot.slane %v2266, 7
      %v2343 = vrot.slane %v2268, 7
      %v2344 = vrot.slane %v2270, 7
      %v2345 = vrot.slane %v2272, 7
      %v2346 = vrot.slane %v2274, 7
      %v2347 = vrot.slane %v2276, 7
      %v2348 = vrot.slane %v2278, 7
      %v2349 = vrot.slane %v2280, 7
      %v2350 = vrot.slane %v2282, 7
      %v2351 = vrot.slane %v2284, 7
      %vm2352 = vcmp.lt.s32.totalorder %v2286, 1
      %v2353 = vsel %vm2352, %v2288, %v2320
      %v2354 = vsel %vm2352, %v2289, %v2321
      %v2355 = vsel %vm2352, %v2290, %v2322
      %v2356 = vsel %vm2352, %v2291, %v2323
      %v2357 = vsel %vm2352, %v2292, %v2324
      %v2358 = vsel %vm2352, %v2293, %v2325
      %v2359 = vsel %vm2352, %v2294, %v2326
      %v2360 = vsel %vm2352, %v2295, %v2327
      %v2361 = vsel %vm2352, %v2296, %v2328
      %v2362 = vsel %vm2352, %v2297, %v2329
      %v2363 = vsel %vm2352, %v2298, %v2330
      %v2364 = vsel %vm2352, %v2299, %v2331
      %v2365 = vsel %vm2352, %v2300, %v2332
      %v2366 = vsel %vm2352, %v2301, %v2333
      %v2367 = vsel %vm2352, %v2302, %v2334
      %v2368 = vsel %vm2352, %v2303, %v2335
      %v2369 = vsel %vm2352, %v2304, %v2336
      %v2370 = vsel %vm2352, %v2305, %v2337
      %v2371 = vsel %vm2352, %v2306, %v2338
      %v2372 = vsel %vm2352, %v2307, %v2339
      %v2373 = vsel %vm2352, %v2308, %v2340
      %v2374 = vsel %vm2352, %v2309, %v2341
      %v2375 = vsel %vm2352, %v2310, %v2342
      %v2376 = vsel %vm2352, %v2311, %v2343
      %v2377 = vsel %vm2352, %v2312, %v2344
      %v2378 = vsel %vm2352, %v2313, %v2345
      %v2379 = vsel %vm2352, %v2314, %v2346
      %v2380 = vsel %vm2352, %v2315, %v2347
      %v2381 = vsel %vm2352, %v2316, %v2348
      %v2382 = vsel %vm2352, %v2317, %v2349
      %v2383 = vsel %vm2352, %v2318, %v2350
      %v2384 = vsel %vm2352, %v2319, %v2351
      %v2385 = vsel %vm2352, %v2320, %v2288
      %v2386 = vsel %vm2352, %v2321, %v2289
      %v2387 = vsel %vm2352, %v2322, %v2290
      %v2388 = vsel %vm2352, %v2323, %v2291
      %v2389 = vsel %vm2352, %v2324, %v2292
      %v2390 = vsel %vm2352, %v2325, %v2293
      %v2391 = vsel %vm2352, %v2326, %v2294
      %v2392 = vsel %vm2352, %v2327, %v2295
      %v2393 = vsel %vm2352, %v2328, %v2296
      %v2394 = vsel %vm2352, %v2329, %v2297
      %v2395 = vsel %vm2352, %v2330, %v2298
      %v2396 = vsel %vm2352, %v2331, %v2299
      %v2397 = vsel %vm2352, %v2332, %v2300
      %v2398 = vsel %vm2352, %v2333, %v2301
      %v2399 = vsel %vm2352, %v2334, %v2302
      %v2400 = vsel %vm2352, %v2335, %v2303
      %v2401 = vsel %vm2352, %v2336, %v2304
      %v2402 = vsel %vm2352, %v2337, %v2305
      %v2403 = vsel %vm2352, %v2338, %v2306
      %v2404 = vsel %vm2352, %v2339, %v2307
      %v2405 = vsel %vm2352, %v2340, %v2308
      %v2406 = vsel %vm2352, %v2341, %v2309
      %v2407 = vsel %vm2352, %v2342, %v2310
      %v2408 = vsel %vm2352, %v2343, %v2311
      %v2409 = vsel %vm2352, %v2344, %v2312
      %v2410 = vsel %vm2352, %v2345, %v2313
      %v2411 = vsel %vm2352, %v2346, %v2314
      %v2412 = vsel %vm2352, %v2347, %v2315
      %v2413 = vsel %vm2352, %v2348, %v2316
      %v2414 = vsel %vm2352, %v2349, %v2317
      %v2415 = vsel %vm2352, %v2350, %v2318
      %v2416 = vsel %vm2352, %v2351, %v2319
      %v2417 = vadd.s32 %v2286, 4294967295
      %v2418 = vadd.s32 %v2287, 4294967295
      %vm2419 = vcmp.ge.s32.totalorder %v2417, 0
      %vm2420 = vcmp.ge.s32.totalorder %v2418, 0
      %vm2421 = vcmp.lt.s32.totalorder %v2417, 16
      %vm2422 = vcmp.lt.s32.totalorder %v2418, 16
      %vm2423 = vmand %vm2419, %vm2421
      %vm2424 = vmand %vm2420, %vm2422
      %v2425 = vsel %vm2423, 1, 0
      %v2426 = vsel %vm2424, 1, 0
      %vm2427 = vcmp.eq.s32.totalorder %v2425, 1
      %vm2428 = vcmp.eq.s32.totalorder %v2426, 1
      %v2429 = vsel %vm2427, 0.0, 0.0
      %v2430 = vsel %vm2428, 0.0, 0.0
      %v2431 = vsel %vm2427, %v2385, 0.0
      %v2432 = vsel %vm2428, %v2353, 0.0
      %v2433 = vsel %vm2427, %v2386, 0.0
      %v2434 = vsel %vm2428, %v2354, 0.0
      %v2435 = vsel %vm2427, %v2387, 0.0
      %v2436 = vsel %vm2428, %v2355, 0.0
      %v2437 = vsel %vm2427, %v2388, 0.0
      %v2438 = vsel %vm2428, %v2356, 0.0
      %v2439 = vsel %vm2427, %v2389, 0.0
      %v2440 = vsel %vm2428, %v2357, 0.0
      %v2441 = vsel %vm2427, %v2390, 0.0
      %v2442 = vsel %vm2428, %v2358, 0.0
      %v2443 = vsel %vm2427, %v2391, 0.0
      %v2444 = vsel %vm2428, %v2359, 0.0
      %v2445 = vsel %vm2427, %v2392, 0.0
      %v2446 = vsel %vm2428, %v2360, 0.0
      %v2447 = vsel %vm2427, %v2393, 0.0
      %v2448 = vsel %vm2428, %v2361, 0.0
      %v2449 = vsel %vm2427, %v2394, 0.0
      %v2450 = vsel %vm2428, %v2362, 0.0
      %v2451 = vsel %vm2427, %v2395, 0.0
      %v2452 = vsel %vm2428, %v2363, 0.0
      %v2453 = vsel %vm2427, %v2396, 0.0
      %v2454 = vsel %vm2428, %v2364, 0.0
      %v2455 = vsel %vm2427, %v2397, 0.0
      %v2456 = vsel %vm2428, %v2365, 0.0
      %v2457 = vsel %vm2427, %v2398, 0.0
      %v2458 = vsel %vm2428, %v2366, 0.0
      %v2459 = vsel %vm2427, %v2399, 0.0
      %v2460 = vsel %vm2428, %v2367, 0.0
      %v2461 = vsel %vm2427, %v2400, 0.0
      %v2462 = vsel %vm2428, %v2368, 0.0
      %v2463 = vsel %vm2427, %v2401, 0.0
      %v2464 = vsel %vm2428, %v2369, 0.0
      %v2465 = vsel %vm2427, %v2402, 0.0
      %v2466 = vsel %vm2428, %v2370, 0.0
      %v2467 = vsel %vm2427, %v2403, 0.0
      %v2468 = vsel %vm2428, %v2371, 0.0
      %v2469 = vsel %vm2427, %v2404, 0.0
      %v2470 = vsel %vm2428, %v2372, 0.0
      %v2471 = vsel %vm2427, %v2405, 0.0
      %v2472 = vsel %vm2428, %v2373, 0.0
      %v2473 = vsel %vm2427, %v2406, 0.0
      %v2474 = vsel %vm2428, %v2374, 0.0
      %v2475 = vsel %vm2427, %v2407, 0.0
      %v2476 = vsel %vm2428, %v2375, 0.0
      %v2477 = vsel %vm2427, %v2408, 0.0
      %v2478 = vsel %vm2428, %v2376, 0.0
      %v2479 = vsel %vm2427, %v2409, 0.0
      %v2480 = vsel %vm2428, %v2377, 0.0
      %v2481 = vsel %vm2427, %v2410, 0.0
      %v2482 = vsel %vm2428, %v2378, 0.0
      %v2483 = vsel %vm2427, %v2411, 0.0
      %v2484 = vsel %vm2428, %v2379, 0.0
      %v2485 = vsel %vm2427, %v2412, 0.0
      %v2486 = vsel %vm2428, %v2380, 0.0
      %v2487 = vsel %vm2427, %v2413, 0.0
      %v2488 = vsel %vm2428, %v2381, 0.0
      %v2489 = vsel %vm2427, %v2414, 0.0
      %v2490 = vsel %vm2428, %v2382, 0.0
      %v2491 = vsel %vm2427, %v2415, 0.0
      %v2492 = vsel %vm2428, %v2383, 0.0
      %v2493 = vsel %vm2427, %v2416, 0.0
      %v2494 = vsel %vm2428, %v2384, 0.0
      %v2495 = vrot.slane %v2221, 1
      %v2496 = vrot.slane %v2223, 1
      %v2497 = vrot.slane %v2225, 1
      %v2498 = vrot.slane %v2227, 1
      %v2499 = vrot.slane %v2229, 1
      %v2500 = vrot.slane %v2231, 1
      %v2501 = vrot.slane %v2233, 1
      %v2502 = vrot.slane %v2235, 1
      %v2503 = vrot.slane %v2237, 1
      %v2504 = vrot.slane %v2239, 1
      %v2505 = vrot.slane %v2241, 1
      %v2506 = vrot.slane %v2243, 1
      %v2507 = vrot.slane %v2245, 1
      %v2508 = vrot.slane %v2247, 1
      %v2509 = vrot.slane %v2249, 1
      %v2510 = vrot.slane %v2251, 1
      %v2511 = vrot.slane %v2253, 1
      %v2512 = vrot.slane %v2255, 1
      %v2513 = vrot.slane %v2257, 1
      %v2514 = vrot.slane %v2259, 1
      %v2515 = vrot.slane %v2261, 1
      %v2516 = vrot.slane %v2263, 1
      %v2517 = vrot.slane %v2265, 1
      %v2518 = vrot.slane %v2267, 1
      %v2519 = vrot.slane %v2269, 1
      %v2520 = vrot.slane %v2271, 1
      %v2521 = vrot.slane %v2273, 1
      %v2522 = vrot.slane %v2275, 1
      %v2523 = vrot.slane %v2277, 1
      %v2524 = vrot.slane %v2279, 1
      %v2525 = vrot.slane %v2281, 1
      %v2526 = vrot.slane %v2283, 1
      %v2527 = vrot.slane %v2222, 1
      %v2528 = vrot.slane %v2224, 1
      %v2529 = vrot.slane %v2226, 1
      %v2530 = vrot.slane %v2228, 1
      %v2531 = vrot.slane %v2230, 1
      %v2532 = vrot.slane %v2232, 1
      %v2533 = vrot.slane %v2234, 1
      %v2534 = vrot.slane %v2236, 1
      %v2535 = vrot.slane %v2238, 1
      %v2536 = vrot.slane %v2240, 1
      %v2537 = vrot.slane %v2242, 1
      %v2538 = vrot.slane %v2244, 1
      %v2539 = vrot.slane %v2246, 1
      %v2540 = vrot.slane %v2248, 1
      %v2541 = vrot.slane %v2250, 1
      %v2542 = vrot.slane %v2252, 1
      %v2543 = vrot.slane %v2254, 1
      %v2544 = vrot.slane %v2256, 1
      %v2545 = vrot.slane %v2258, 1
      %v2546 = vrot.slane %v2260, 1
      %v2547 = vrot.slane %v2262, 1
      %v2548 = vrot.slane %v2264, 1
      %v2549 = vrot.slane %v2266, 1
      %v2550 = vrot.slane %v2268, 1
      %v2551 = vrot.slane %v2270, 1
      %v2552 = vrot.slane %v2272, 1
      %v2553 = vrot.slane %v2274, 1
      %v2554 = vrot.slane %v2276, 1
      %v2555 = vrot.slane %v2278, 1
      %v2556 = vrot.slane %v2280, 1
      %v2557 = vrot.slane %v2282, 1
      %v2558 = vrot.slane %v2284, 1
      %vm2559 = vcmp.lt.s32.totalorder %v2286, 7
      %v2560 = vsel %vm2559, %v2495, %v2527
      %v2561 = vsel %vm2559, %v2496, %v2528
      %v2562 = vsel %vm2559, %v2497, %v2529
      %v2563 = vsel %vm2559, %v2498, %v2530
      %v2564 = vsel %vm2559, %v2499, %v2531
      %v2565 = vsel %vm2559, %v2500, %v2532
      %v2566 = vsel %vm2559, %v2501, %v2533
      %v2567 = vsel %vm2559, %v2502, %v2534
      %v2568 = vsel %vm2559, %v2503, %v2535
      %v2569 = vsel %vm2559, %v2504, %v2536
      %v2570 = vsel %vm2559, %v2505, %v2537
      %v2571 = vsel %vm2559, %v2506, %v2538
      %v2572 = vsel %vm2559, %v2507, %v2539
      %v2573 = vsel %vm2559, %v2508, %v2540
      %v2574 = vsel %vm2559, %v2509, %v2541
      %v2575 = vsel %vm2559, %v2510, %v2542
      %v2576 = vsel %vm2559, %v2511, %v2543
      %v2577 = vsel %vm2559, %v2512, %v2544
      %v2578 = vsel %vm2559, %v2513, %v2545
      %v2579 = vsel %vm2559, %v2514, %v2546
      %v2580 = vsel %vm2559, %v2515, %v2547
      %v2581 = vsel %vm2559, %v2516, %v2548
      %v2582 = vsel %vm2559, %v2517, %v2549
      %v2583 = vsel %vm2559, %v2518, %v2550
      %v2584 = vsel %vm2559, %v2519, %v2551
      %v2585 = vsel %vm2559, %v2520, %v2552
      %v2586 = vsel %vm2559, %v2521, %v2553
      %v2587 = vsel %vm2559, %v2522, %v2554
      %v2588 = vsel %vm2559, %v2523, %v2555
      %v2589 = vsel %vm2559, %v2524, %v2556
      %v2590 = vsel %vm2559, %v2525, %v2557
      %v2591 = vsel %vm2559, %v2526, %v2558
      %v2592 = vsel %vm2559, %v2527, %v2495
      %v2593 = vsel %vm2559, %v2528, %v2496
      %v2594 = vsel %vm2559, %v2529, %v2497
      %v2595 = vsel %vm2559, %v2530, %v2498
      %v2596 = vsel %vm2559, %v2531, %v2499
      %v2597 = vsel %vm2559, %v2532, %v2500
      %v2598 = vsel %vm2559, %v2533, %v2501
      %v2599 = vsel %vm2559, %v2534, %v2502
      %v2600 = vsel %vm2559, %v2535, %v2503
      %v2601 = vsel %vm2559, %v2536, %v2504
      %v2602 = vsel %vm2559, %v2537, %v2505
      %v2603 = vsel %vm2559, %v2538, %v2506
      %v2604 = vsel %vm2559, %v2539, %v2507
      %v2605 = vsel %vm2559, %v2540, %v2508
      %v2606 = vsel %vm2559, %v2541, %v2509
      %v2607 = vsel %vm2559, %v2542, %v2510
      %v2608 = vsel %vm2559, %v2543, %v2511
      %v2609 = vsel %vm2559, %v2544, %v2512
      %v2610 = vsel %vm2559, %v2545, %v2513
      %v2611 = vsel %vm2559, %v2546, %v2514
      %v2612 = vsel %vm2559, %v2547, %v2515
      %v2613 = vsel %vm2559, %v2548, %v2516
      %v2614 = vsel %vm2559, %v2549, %v2517
      %v2615 = vsel %vm2559, %v2550, %v2518
      %v2616 = vsel %vm2559, %v2551, %v2519
      %v2617 = vsel %vm2559, %v2552, %v2520
      %v2618 = vsel %vm2559, %v2553, %v2521
      %v2619 = vsel %vm2559, %v2554, %v2522
      %v2620 = vsel %vm2559, %v2555, %v2523
      %v2621 = vsel %vm2559, %v2556, %v2524
      %v2622 = vsel %vm2559, %v2557, %v2525
      %v2623 = vsel %vm2559, %v2558, %v2526
      %v2624 = vadd.s32 %v2286, 1
      %v2625 = vadd.s32 %v2287, 1
      %vm2626 = vcmp.ge.s32.totalorder %v2624, 0
      %vm2627 = vcmp.ge.s32.totalorder %v2625, 0
      %vm2628 = vcmp.lt.s32.totalorder %v2624, 16
      %vm2629 = vcmp.lt.s32.totalorder %v2625, 16
      %vm2630 = vmand %vm2626, %vm2628
      %vm2631 = vmand %vm2627, %vm2629
      %v2632 = vsel %vm2630, 1, 0
      %v2633 = vsel %vm2631, 1, 0
      %vm2634 = vcmp.eq.s32.totalorder %v2632, 1
      %vm2635 = vcmp.eq.s32.totalorder %v2633, 1
      %v2636 = vsel %vm2634, 0.0, 0.0
      %v2637 = vsel %vm2635, 0.0, 0.0
      %v2638 = vsel %vm2634, %v2560, 0.0
      %v2639 = vsel %vm2635, %v2592, 0.0
      %v2640 = vsel %vm2634, %v2561, 0.0
      %v2641 = vsel %vm2635, %v2593, 0.0
      %v2642 = vsel %vm2634, %v2562, 0.0
      %v2643 = vsel %vm2635, %v2594, 0.0
      %v2644 = vsel %vm2634, %v2563, 0.0
      %v2645 = vsel %vm2635, %v2595, 0.0
      %v2646 = vsel %vm2634, %v2564, 0.0
      %v2647 = vsel %vm2635, %v2596, 0.0
      %v2648 = vsel %vm2634, %v2565, 0.0
      %v2649 = vsel %vm2635, %v2597, 0.0
      %v2650 = vsel %vm2634, %v2566, 0.0
      %v2651 = vsel %vm2635, %v2598, 0.0
      %v2652 = vsel %vm2634, %v2567, 0.0
      %v2653 = vsel %vm2635, %v2599, 0.0
      %v2654 = vsel %vm2634, %v2568, 0.0
      %v2655 = vsel %vm2635, %v2600, 0.0
      %v2656 = vsel %vm2634, %v2569, 0.0
      %v2657 = vsel %vm2635, %v2601, 0.0
      %v2658 = vsel %vm2634, %v2570, 0.0
      %v2659 = vsel %vm2635, %v2602, 0.0
      %v2660 = vsel %vm2634, %v2571, 0.0
      %v2661 = vsel %vm2635, %v2603, 0.0
      %v2662 = vsel %vm2634, %v2572, 0.0
      %v2663 = vsel %vm2635, %v2604, 0.0
      %v2664 = vsel %vm2634, %v2573, 0.0
      %v2665 = vsel %vm2635, %v2605, 0.0
      %v2666 = vsel %vm2634, %v2574, 0.0
      %v2667 = vsel %vm2635, %v2606, 0.0
      %v2668 = vsel %vm2634, %v2575, 0.0
      %v2669 = vsel %vm2635, %v2607, 0.0
      %v2670 = vsel %vm2634, %v2576, 0.0
      %v2671 = vsel %vm2635, %v2608, 0.0
      %v2672 = vsel %vm2634, %v2577, 0.0
      %v2673 = vsel %vm2635, %v2609, 0.0
      %v2674 = vsel %vm2634, %v2578, 0.0
      %v2675 = vsel %vm2635, %v2610, 0.0
      %v2676 = vsel %vm2634, %v2579, 0.0
      %v2677 = vsel %vm2635, %v2611, 0.0
      %v2678 = vsel %vm2634, %v2580, 0.0
      %v2679 = vsel %vm2635, %v2612, 0.0
      %v2680 = vsel %vm2634, %v2581, 0.0
      %v2681 = vsel %vm2635, %v2613, 0.0
      %v2682 = vsel %vm2634, %v2582, 0.0
      %v2683 = vsel %vm2635, %v2614, 0.0
      %v2684 = vsel %vm2634, %v2583, 0.0
      %v2685 = vsel %vm2635, %v2615, 0.0
      %v2686 = vsel %vm2634, %v2584, 0.0
      %v2687 = vsel %vm2635, %v2616, 0.0
      %v2688 = vsel %vm2634, %v2585, 0.0
      %v2689 = vsel %vm2635, %v2617, 0.0
      %v2690 = vsel %vm2634, %v2586, 0.0
      %v2691 = vsel %vm2635, %v2618, 0.0
      %v2692 = vsel %vm2634, %v2587, 0.0
      %v2693 = vsel %vm2635, %v2619, 0.0
      %v2694 = vsel %vm2634, %v2588, 0.0
      %v2695 = vsel %vm2635, %v2620, 0.0
      %v2696 = vsel %vm2634, %v2589, 0.0
      %v2697 = vsel %vm2635, %v2621, 0.0
      %v2698 = vsel %vm2634, %v2590, 0.0
      %v2699 = vsel %vm2635, %v2622, 0.0
      %v2700 = vsel %vm2634, %v2591, 0.0
      %v2701 = vsel %vm2635, %v2623, 0.0
      %2763 = vrot.lane.b32.xlu0 0.0, 64
      %v2764 = vpop.permute.xlu0 %2763
      %2765 = vrot.lane.b32.xlu0 %v2221, 64
      %v2766 = vpop.permute.xlu0 %2765
      %2767 = vrot.lane.b32.xlu0 %v2222, 64
      %v2768 = vpop.permute.xlu0 %2767
      %2769 = vrot.lane.b32.xlu0 %v2223, 64
      %v2770 = vpop.permute.xlu0 %2769
      %2771 = vrot.lane.b32.xlu0 %v2224, 64
      %v2772 = vpop.permute.xlu0 %2771
      %2773 = vrot.lane.b32.xlu0 %v2225, 64
      %v2774 = vpop.permute.xlu0 %2773
      %2775 = vrot.lane.b32.xlu0 %v2226, 64
      %v2776 = vpop.permute.xlu0 %2775
      %2777 = vrot.lane.b32.xlu0 %v2227, 64
      %v2778 = vpop.permute.xlu0 %2777
      %2779 = vrot.lane.b32.xlu0 %v2228, 64
      %v2780 = vpop.permute.xlu0 %2779
      %2781 = vrot.lane.b32.xlu0 %v2229, 64
      %v2782 = vpop.permute.xlu0 %2781
      %2783 = vrot.lane.b32.xlu0 %v2230, 64
      %v2784 = vpop.permute.xlu0 %2783
      %2785 = vrot.lane.b32.xlu0 %v2231, 64
      %v2786 = vpop.permute.xlu0 %2785
      %2787 = vrot.lane.b32.xlu0 %v2232, 64
      %v2788 = vpop.permute.xlu0 %2787
      %2789 = vrot.lane.b32.xlu0 %v2233, 64
      %v2790 = vpop.permute.xlu0 %2789
      %2791 = vrot.lane.b32.xlu0 %v2234, 64
      %v2792 = vpop.permute.xlu0 %2791
      %2793 = vrot.lane.b32.xlu0 %v2235, 64
      %v2794 = vpop.permute.xlu0 %2793
      %2795 = vrot.lane.b32.xlu0 %v2236, 64
      %v2796 = vpop.permute.xlu0 %2795
      %2797 = vrot.lane.b32.xlu0 %v2237, 64
      %v2798 = vpop.permute.xlu0 %2797
      %2799 = vrot.lane.b32.xlu0 %v2238, 64
      %v2800 = vpop.permute.xlu0 %2799
      %2801 = vrot.lane.b32.xlu0 %v2239, 64
      %v2802 = vpop.permute.xlu0 %2801
      %2803 = vrot.lane.b32.xlu0 %v2240, 64
      %v2804 = vpop.permute.xlu0 %2803
      %2805 = vrot.lane.b32.xlu0 %v2241, 64
      %v2806 = vpop.permute.xlu0 %2805
      %2807 = vrot.lane.b32.xlu0 %v2242, 64
      %v2808 = vpop.permute.xlu0 %2807
      %2809 = vrot.lane.b32.xlu0 %v2243, 64
      %v2810 = vpop.permute.xlu0 %2809
      %2811 = vrot.lane.b32.xlu0 %v2244, 64
      %v2812 = vpop.permute.xlu0 %2811
      %2813 = vrot.lane.b32.xlu0 %v2245, 64
      %v2814 = vpop.permute.xlu0 %2813
      %2815 = vrot.lane.b32.xlu0 %v2246, 64
      %v2816 = vpop.permute.xlu0 %2815
      %2817 = vrot.lane.b32.xlu0 %v2247, 64
      %v2818 = vpop.permute.xlu0 %2817
      %2819 = vrot.lane.b32.xlu0 %v2248, 64
      %v2820 = vpop.permute.xlu0 %2819
      %2821 = vrot.lane.b32.xlu0 %v2249, 64
      %v2822 = vpop.permute.xlu0 %2821
      %2823 = vrot.lane.b32.xlu0 %v2250, 64
      %v2824 = vpop.permute.xlu0 %2823
      %2825 = vrot.lane.b32.xlu0 %v2253, 64
      %v2826 = vpop.permute.xlu0 %2825
      %2827 = vrot.lane.b32.xlu0 %v2254, 64
      %v2828 = vpop.permute.xlu0 %2827
      %2829 = vrot.lane.b32.xlu0 %v2255, 64
      %v2830 = vpop.permute.xlu0 %2829
      %2831 = vrot.lane.b32.xlu0 %v2256, 64
      %v2832 = vpop.permute.xlu0 %2831
      %2833 = vrot.lane.b32.xlu0 %v2257, 64
      %v2834 = vpop.permute.xlu0 %2833
      %2835 = vrot.lane.b32.xlu0 %v2258, 64
      %v2836 = vpop.permute.xlu0 %2835
      %2837 = vrot.lane.b32.xlu0 %v2259, 64
      %v2838 = vpop.permute.xlu0 %2837
      %2839 = vrot.lane.b32.xlu0 %v2260, 64
      %v2840 = vpop.permute.xlu0 %2839
      %2841 = vrot.lane.b32.xlu0 %v2261, 64
      %v2842 = vpop.permute.xlu0 %2841
      %2843 = vrot.lane.b32.xlu0 %v2262, 64
      %v2844 = vpop.permute.xlu0 %2843
      %2845 = vrot.lane.b32.xlu0 %v2263, 64
      %v2846 = vpop.permute.xlu0 %2845
      %2847 = vrot.lane.b32.xlu0 %v2264, 64
      %v2848 = vpop.permute.xlu0 %2847
      %2849 = vrot.lane.b32.xlu0 %v2265, 64
      %v2850 = vpop.permute.xlu0 %2849
      %2851 = vrot.lane.b32.xlu0 %v2266, 64
      %v2852 = vpop.permute.xlu0 %2851
      %2853 = vrot.lane.b32.xlu0 %v2267, 64
      %v2854 = vpop.permute.xlu0 %2853
      %2855 = vrot.lane.b32.xlu0 %v2268, 64
      %v2856 = vpop.permute.xlu0 %2855
      %2857 = vrot.lane.b32.xlu0 %v2269, 64
      %v2858 = vpop.permute.xlu0 %2857
      %2859 = vrot.lane.b32.xlu0 %v2270, 64
      %v2860 = vpop.permute.xlu0 %2859
      %2861 = vrot.lane.b32.xlu0 %v2271, 64
      %v2862 = vpop.permute.xlu0 %2861
      %2863 = vrot.lane.b32.xlu0 %v2272, 64
      %v2864 = vpop.permute.xlu0 %2863
      %2865 = vrot.lane.b32.xlu0 %v2273, 64
      %v2866 = vpop.permute.xlu0 %2865
      %2867 = vrot.lane.b32.xlu0 %v2274, 64
      %v2868 = vpop.permute.xlu0 %2867
      %2869 = vrot.lane.b32.xlu0 %v2275, 64
      %v2870 = vpop.permute.xlu0 %2869
      %2871 = vrot.lane.b32.xlu0 %v2276, 64
      %v2872 = vpop.permute.xlu0 %2871
      %2873 = vrot.lane.b32.xlu0 %v2277, 64
      %v2874 = vpop.permute.xlu0 %2873
      %2875 = vrot.lane.b32.xlu0 %v2278, 64
      %v2876 = vpop.permute.xlu0 %2875
      %2877 = vrot.lane.b32.xlu0 %v2279, 64
      %v2878 = vpop.permute.xlu0 %2877
      %2879 = vrot.lane.b32.xlu0 %v2280, 64
      %v2880 = vpop.permute.xlu0 %2879
      %2881 = vrot.lane.b32.xlu0 %v2281, 64
      %v2882 = vpop.permute.xlu0 %2881
      %2883 = vrot.lane.b32.xlu0 %v2282, 64
      %v2884 = vpop.permute.xlu0 %2883
      %v2946 = vsel %vm731, %v2429, %v2764
      %v2947 = vsel %vm731, %v2430, %v2764
      %v2948 = vsel %vm731, %v2431, %v2766
      %v2949 = vsel %vm731, %v2432, %v2768
      %v2950 = vsel %vm731, %v2433, %v2770
      %v2951 = vsel %vm731, %v2434, %v2772
      %v2952 = vsel %vm731, %v2435, %v2774
      %v2953 = vsel %vm731, %v2436, %v2776
      %v2954 = vsel %vm731, %v2437, %v2778
      %v2955 = vsel %vm731, %v2438, %v2780
      %v2956 = vsel %vm731, %v2439, %v2782
      %v2957 = vsel %vm731, %v2440, %v2784
      %v2958 = vsel %vm731, %v2441, %v2786
      %v2959 = vsel %vm731, %v2442, %v2788
      %v2960 = vsel %vm731, %v2443, %v2790
      %v2961 = vsel %vm731, %v2444, %v2792
      %v2962 = vsel %vm731, %v2445, %v2794
      %v2963 = vsel %vm731, %v2446, %v2796
      %v2964 = vsel %vm731, %v2447, %v2798
      %v2965 = vsel %vm731, %v2448, %v2800
      %v2966 = vsel %vm731, %v2449, %v2802
      %v2967 = vsel %vm731, %v2450, %v2804
      %v2968 = vsel %vm731, %v2451, %v2806
      %v2969 = vsel %vm731, %v2452, %v2808
      %v2970 = vsel %vm731, %v2453, %v2810
      %v2971 = vsel %vm731, %v2454, %v2812
      %v2972 = vsel %vm731, %v2455, %v2814
      %v2973 = vsel %vm731, %v2456, %v2816
      %v2974 = vsel %vm731, %v2457, %v2818
      %v2975 = vsel %vm731, %v2458, %v2820
      %v2976 = vsel %vm731, %v2459, %v2822
      %v2977 = vsel %vm731, %v2460, %v2824
      %v2978 = vsel %vm731, %v2463, %v2826
      %v2979 = vsel %vm731, %v2464, %v2828
      %v2980 = vsel %vm731, %v2465, %v2830
      %v2981 = vsel %vm731, %v2466, %v2832
      %v2982 = vsel %vm731, %v2467, %v2834
      %v2983 = vsel %vm731, %v2468, %v2836
      %v2984 = vsel %vm731, %v2469, %v2838
      %v2985 = vsel %vm731, %v2470, %v2840
      %v2986 = vsel %vm731, %v2471, %v2842
      %v2987 = vsel %vm731, %v2472, %v2844
      %v2988 = vsel %vm731, %v2473, %v2846
      %v2989 = vsel %vm731, %v2474, %v2848
      %v2990 = vsel %vm731, %v2475, %v2850
      %v2991 = vsel %vm731, %v2476, %v2852
      %v2992 = vsel %vm731, %v2477, %v2854
      %v2993 = vsel %vm731, %v2478, %v2856
      %v2994 = vsel %vm731, %v2479, %v2858
      %v2995 = vsel %vm731, %v2480, %v2860
      %v2996 = vsel %vm731, %v2481, %v2862
      %v2997 = vsel %vm731, %v2482, %v2864
      %v2998 = vsel %vm731, %v2483, %v2866
      %v2999 = vsel %vm731, %v2484, %v2868
      %v3000 = vsel %vm731, %v2485, %v2870
      %v3001 = vsel %vm731, %v2486, %v2872
      %v3002 = vsel %vm731, %v2487, %v2874
      %v3003 = vsel %vm731, %v2488, %v2876
      %v3004 = vsel %vm731, %v2489, %v2878
      %v3005 = vsel %vm731, %v2490, %v2880
      %v3006 = vsel %vm731, %v2491, %v2882
      %v3007 = vsel %vm731, %v2492, %v2884
      %v3008 = vld [vmem:[%s3] sm:$0xff]
      %v3009 = vld [vmem:[%s3 + $0x8] sm:$0xff]
      %v3010 = vld [vmem:[%s3 + $0x10] sm:$0xff]
      %v3011 = vld [vmem:[%s3 + $0x18] sm:$0xff]
      %v3012 = vld [vmem:[%s3 + $0x20] sm:$0xff]
      %v3013 = vld [vmem:[%s3 + $0x28] sm:$0xff]
      %v3014 = vld [vmem:[%s3 + $0x30] sm:$0xff]
      %v3015 = vld [vmem:[%s3 + $0x38] sm:$0xff]
      %v3016 = vld [vmem:[%s3 + $0x40] sm:$0xff]
      %v3017 = vld [vmem:[%s3 + $0x48] sm:$0xff]
      %v3018 = vld [vmem:[%s3 + $0x50] sm:$0xff]
      %v3019 = vld [vmem:[%s3 + $0x58] sm:$0xff]
      %v3020 = vld [vmem:[%s3 + $0x60] sm:$0xff]
      %v3021 = vld [vmem:[%s3 + $0x68] sm:$0xff]
      %v3022 = vld [vmem:[%s3 + $0x70] sm:$0xff]
      %v3023 = vld [vmem:[%s3 + $0x78] sm:$0xff]
      %v3024 = vld [vmem:[%s3 + $0x80] sm:$0xff]
      %v3025 = vld [vmem:[%s3 + $0x88] sm:$0xff]
      %v3026 = vld [vmem:[%s3 + $0x90] sm:$0xff]
      %v3027 = vld [vmem:[%s3 + $0x98] sm:$0xff]
      %v3028 = vld [vmem:[%s3 + $0xa0] sm:$0xff]
      %v3029 = vld [vmem:[%s3 + $0xa8] sm:$0xff]
      %v3030 = vld [vmem:[%s3 + $0xb0] sm:$0xff]
      %v3031 = vld [vmem:[%s3 + $0xb8] sm:$0xff]
      %3036 = vrot.lane.b32.xlu0 %v2251, 64
      %v3037 = vpop.permute.xlu0 %3036
      %3038 = vrot.lane.b32.xlu0 %v2252, 64
      %v3039 = vpop.permute.xlu0 %3038
      %3040 = vrot.lane.b32.xlu0 %v2283, 64
      %v3041 = vpop.permute.xlu0 %3040
      %3042 = vrot.lane.b32.xlu0 %v2284, 64
      %v3043 = vpop.permute.xlu0 %3042
      %v3048 = vsel %vm731, %v2461, %v3037
      %v3049 = vsel %vm731, %v2462, %v3039
      %v3050 = vsel %vm731, %v2493, %v3041
      %v3051 = vsel %vm731, %v2494, %v3043
      %s3052 = scalar_lea.vmem %s3, 192
      %v3053 = vld [vmem:[%s3052] sm:$0xff]
      %v3054 = vld [vmem:[%s3052 + $0x8] sm:$0xff]
      %v3055 = vld [vmem:[%s3052 + $0x10] sm:$0xff]
      %v3056 = vld [vmem:[%s3052 + $0x18] sm:$0xff]
      %v3057 = vld [vmem:[%s3052 + $0x20] sm:$0xff]
      %v3058 = vld [vmem:[%s3052 + $0x28] sm:$0xff]
      %v3059 = vld [vmem:[%s3052 + $0x30] sm:$0xff]
      %v3060 = vld [vmem:[%s3052 + $0x38] sm:$0xff]
      %v3061 = vld [vmem:[%s3052 + $0x40] sm:$0xff]
      %v3062 = vld [vmem:[%s3052 + $0x48] sm:$0xff]
      %v3063 = vld [vmem:[%s3052 + $0x50] sm:$0xff]
      %v3064 = vld [vmem:[%s3052 + $0x58] sm:$0xff]
      %v3065 = vld [vmem:[%s3052 + $0x60] sm:$0xff]
      %v3066 = vld [vmem:[%s3052 + $0x68] sm:$0xff]
      %v3067 = vld [vmem:[%s3052 + $0x70] sm:$0xff]
      %v3068 = vld [vmem:[%s3052 + $0x78] sm:$0xff]
      %v3069 = vld [vmem:[%s3052 + $0x80] sm:$0xff]
      %v3070 = vld [vmem:[%s3052 + $0x88] sm:$0xff]
      %v3071 = vld [vmem:[%s3052 + $0x90] sm:$0xff]
      %v3072 = vld [vmem:[%s3052 + $0x98] sm:$0xff]
      %v3073 = vld [vmem:[%s3052 + $0xa0] sm:$0xff]
      %v3074 = vld [vmem:[%s3052 + $0xa8] sm:$0xff]
      %v3075 = vld [vmem:[%s3052 + $0xb0] sm:$0xff]
      %v3076 = vld [vmem:[%s3052 + $0xb8] sm:$0xff]
      %v3078 = vsel %vm731, %v2638, 0
      %v3081 = vsel %vm731, %v2639, 0
      %v3084 = vsel %vm731, %v2640, 0
      %v3087 = vsel %vm731, %v2641, 0
      %v3090 = vsel %vm731, %v2642, 0
      %v3093 = vsel %vm731, %v2643, 0
      %v3096 = vsel %vm731, %v2644, 0
      %v3099 = vsel %vm731, %v2645, 0
      %v3102 = vsel %vm731, %v2646, 0
      %v3105 = vsel %vm731, %v2647, 0
      %v3108 = vsel %vm731, %v2648, 0
      %v3111 = vsel %vm731, %v2649, 0
      %v3114 = vsel %vm731, %v2650, 0
      %v3117 = vsel %vm731, %v2651, 0
      %v3120 = vsel %vm731, %v2652, 0
      %v3123 = vsel %vm731, %v2653, 0
      %v3126 = vsel %vm731, %v2654, 0
      %v3129 = vsel %vm731, %v2655, 0
      %v3132 = vsel %vm731, %v2656, 0
      %v3135 = vsel %vm731, %v2657, 0
      %v3138 = vsel %vm731, %v2658, 0
      %v3141 = vsel %vm731, %v2659, 0
      %v3144 = vsel %vm731, %v2660, 0
      %v3147 = vsel %vm731, %v2661, 0
      %v3150 = vsel %vm731, %v2662, 0
      %v3153 = vsel %vm731, %v2663, 0
      %v3156 = vsel %vm731, %v2664, 0
      %v3159 = vsel %vm731, %v2665, 0
      %v3162 = vsel %vm731, %v2666, 0
      %v3165 = vsel %vm731, %v2667, 0
      %v3168 = vsel %vm731, %v2668, 0
      %v3171 = vsel %vm731, %v2669, 0
      %v3174 = vsel %vm731, %v2670, 0
      %v3177 = vsel %vm731, %v2671, 0
      %v3180 = vsel %vm731, %v2672, 0
      %v3183 = vsel %vm731, %v2673, 0
      %v3186 = vsel %vm731, %v2674, 0
      %v3189 = vsel %vm731, %v2675, 0
      %v3192 = vsel %vm731, %v2676, 0
      %v3195 = vsel %vm731, %v2677, 0
      %v3198 = vsel %vm731, %v2678, 0
      %v3201 = vsel %vm731, %v2679, 0
      %v3204 = vsel %vm731, %v2680, 0
      %v3207 = vsel %vm731, %v2681, 0
      %v3210 = vsel %vm731, %v2682, 0
      %v3213 = vsel %vm731, %v2683, 0
      %v3216 = vsel %vm731, %v2684, 0
      %v3219 = vsel %vm731, %v2685, 0
      %v3222 = vsel %vm731, %v2686, 0
      %v3225 = vsel %vm731, %v2687, 0
      %v3228 = vsel %vm731, %v2688, 0
      %v3231 = vsel %vm731, %v2689, 0
      %v3234 = vsel %vm731, %v2690, 0
      %v3237 = vsel %vm731, %v2691, 0
      %v3240 = vsel %vm731, %v2692, 0
      %v3243 = vsel %vm731, %v2693, 0
      %v3246 = vsel %vm731, %v2694, 0
      %v3249 = vsel %vm731, %v2695, 0
      %v3252 = vsel %vm731, %v2696, 0
      %v3255 = vsel %vm731, %v2697, 0
      %v3258 = vsel %vm731, %v2698, 0
      %v3261 = vsel %vm731, %v2699, 0
      %v3264 = vsel %vm731, %v2700, 0
      %v3267 = vsel %vm731, %v2701, 0
      %3269 = vmatprep.subr.mxu0 0.0
      %3270 = vmatpush1.msra.mxu0 %v3053
      %3271 = vmatprep.subr.mxu0 0.0
      %3272 = vmatpush1.msra.mxu0 %v3054
      %3273 = vmatprep.subr.mxu0 0.0
      %3274 = vmatpush1.msra.mxu0 %v3055
      %3275 = vmatprep.subr.mxu0 0.0
      %3276 = vmatpush1.msra.mxu0 %v3056
      %3277 = vmatprep.subr.mxu0 0.0
      %3278 = vmatpush1.msra.mxu0 %v3057
      %3279 = vmatprep.subr.mxu0 0.0
      %3280 = vmatpush1.msra.mxu0 %v3058
      %3281 = vmatprep.subr.mxu0 0.0
      %3282 = vmatpush1.msra.mxu0 %v3059
      %3283 = vmatprep.subr.mxu0 0.0
      %3284 = vmatpush1.msra.mxu0 %v3060
      %3285 = vmatprep.subr.mxu0 0.0
      %3286 = vmatpush1.msra.mxu0 %v3061
      %3287 = vmatprep.subr.mxu0 0.0
      %3288 = vmatpush1.msra.mxu0 %v3062
      %3289 = vmatprep.subr.mxu0 0.0
      %3290 = vmatpush1.msra.mxu0 %v3063
      %3291 = vmatprep.subr.mxu0 0.0
      %3292 = vmatpush1.msra.mxu0 %v3064
      %3293 = vmatprep.subr.mxu0 0.0
      %3294 = vmatpush1.msra.mxu0 %v3065
      %3295 = vmatprep.subr.mxu0 0.0
      %3296 = vmatpush1.msra.mxu0 %v3066
      %3297 = vmatprep.subr.mxu0 0.0
      %3298 = vmatpush1.msra.mxu0 %v3067
      %3299 = vmatprep.subr.mxu0 0.0
      %3300 = vmatpush1.msra.mxu0 %v3068
      %3301 = vmatprep.subr.mxu0 0.0
      %3302 = vmatpush1.msra.mxu0 %v3069
      %3303 = vmatprep.subr.mxu0 0.0
      %3304 = vmatpush1.msra.mxu0 %v3070
      %3305 = vmatprep.subr.mxu0 0.0
      %3306 = vmatpush1.msra.mxu0 %v3071
      %3307 = vmatprep.subr.mxu0 0.0
      %3308 = vmatpush1.msra.mxu0 %v3072
      %3309 = vmatprep.subr.mxu0 0.0
      %3310 = vmatpush1.msra.mxu0 %v3073
      %3311 = vmatprep.subr.mxu0 0.0
      %3312 = vmatpush1.msra.mxu0 %v3074
      %3313 = vmatprep.subr.mxu0 0.0
      %3314 = vmatpush1.msra.mxu0 %v3075
      %3315 = vmatprep.subr.mxu0 0.0
      %3316 = vmatpush1.msra.mxu0 %v3076
      %3317 = vmatprep.subr.mxu0 0.0
      %3318 = vmatpush1.msra.mxu0 0.0
      %3319 = vmatprep.subr.mxu0 0.0
      %3320 = vmatpush1.msra.mxu0 0.0
      %3321 = vmatprep.subr.mxu0 0.0
      %3322 = vmatpush1.msra.mxu0 0.0
      %3323 = vmatprep.subr.mxu0 0.0
      %3324 = vmatpush1.msra.mxu0 0.0
      %3325 = vmatprep.subr.mxu0 0.0
      %3326 = vmatpush1.msra.mxu0 0.0
      %3327 = vmatprep.subr.mxu0 0.0
      %3328 = vmatpush1.msra.mxu0 0.0
      %3329 = vmatprep.subr.mxu0 0.0
      %3330 = vmatpush1.msra.mxu0 0.0
      %3331 = vmatprep.subr.mxu0 0.0
      %3332 = vmatpush1.msra.mxu0 0.0
      %3333 = vmatprep.mubr.f32.mxu0 %v3078
      %3334 = vmatmul.mubr.f32.gmra.mrb[0].mxu0 %v2948
      %v3335 = vpop.f32.mrb[0].mxu0
      %v3336 = vadd.f32 0.0, %v3335
      %v3337 = vpop.f32.mrb[0].mxu0
      %3338 = vmatprep.mubr.f32.mxu0 %v3081
      %3339 = vmatmul.mubr.f32.gmra.mrb[0].mxu0 %v2949
      %v3340 = vpop.f32.mrb[0].mxu0
      %v3341 = vadd.f32 0.0, %v3340
      %v3342 = vpop.f32.mrb[0].mxu0
      %3343 = vmatprep.mubr.f32.mxu0 %v3084
      %3344 = vmatmul.mubr.f32.gmra.mrb[0].mxu0 %v2950
      %v3345 = vpop.f32.mrb[0].mxu0
      %v3346 = vadd.f32 0.0, %v3345
      %v3347 = vpop.f32.mrb[0].mxu0
      %3348 = vmatprep.mubr.f32.mxu0 %v3087
      %3349 = vmatmul.mubr.f32.gmra.mrb[0].mxu0 %v2951
      %v3350 = vpop.f32.mrb[0].mxu0
      %v3351 = vadd.f32 0.0, %v3350
      %v3352 = vpop.f32.mrb[0].mxu0
      %3353 = vmatprep.mubr.f32.mxu0 %v3090
      %3354 = vmatmul.mubr.f32.gmra.mrb[0].mxu0 %v2952
      %v3355 = vpop.f32.mrb[0].mxu0
      %v3356 = vadd.f32 0.0, %v3355
      %v3357 = vpop.f32.mrb[0].mxu0
      %3358 = vmatprep.mubr.f32.mxu0 %v3093
      %3359 = vmatmul.mubr.f32.gmra.mrb[0].mxu0 %v2953
      %v3360 = vpop.f32.mrb[0].mxu0
      %v3361 = vadd.f32 0.0, %v3360
      %v3362 = vpop.f32.mrb[0].mxu0
      %3363 = vmatprep.mubr.f32.mxu0 %v3096
      %3364 = vmatmul.mubr.f32.gmra.mrb[0].mxu0 %v2954
      %v3365 = vpop.f32.mrb[0].mxu0
      %v3366 = vadd.f32 0.0, %v3365
      %v3367 = vpop.f32.mrb[0].mxu0
      %3368 = vmatprep.mubr.f32.mxu0 %v3099
      %3369 = vmatmul.mubr.f32.gmra.mrb[0].mxu0 %v2955
      %v3370 = vpop.f32.mrb[0].mxu0
      %v3371 = vadd.f32 0.0, %v3370
      %v3372 = vpop.f32.mrb[0].mxu0
      %3373 = vmatprep.mubr.f32.mxu0 %v3102
      %3374 = vmatmul.mubr.f32.gmra.mrb[0].mxu0 %v2956
      %v3375 = vpop.f32.mrb[0].mxu0
      %v3376 = vadd.f32 0.0, %v3375
      %v3377 = vpop.f32.mrb[0].mxu0
      %3378 = vmatprep.mubr.f32.mxu0 %v3105
      %3379 = vmatmul.mubr.f32.gmra.mrb[0].mxu0 %v2957
      %v3380 = vpop.f32.mrb[0].mxu0
      %v3381 = vadd.f32 0.0, %v3380
      %v3382 = vpop.f32.mrb[0].mxu0
      %3383 = vmatprep.mubr.f32.mxu0 %v3108
      %3384 = vmatmul.mubr.f32.gmra.mrb[0].mxu0 %v2958
      %v3385 = vpop.f32.mrb[0].mxu0
      %v3386 = vadd.f32 0.0, %v3385
      %v3387 = vpop.f32.mrb[0].mxu0
      %3388 = vmatprep.mubr.f32.mxu0 %v3111
      %3389 = vmatmul.mubr.f32.gmra.mrb[0].mxu0 %v2959
      %v3390 = vpop.f32.mrb[0].mxu0
      %v3391 = vadd.f32 0.0, %v3390
      %v3392 = vpop.f32.mrb[0].mxu0
      %3393 = vmatprep.mubr.f32.mxu0 %v3114
      %3394 = vmatmul.mubr.f32.gmra.mrb[0].mxu0 %v2960
      %v3395 = vpop.f32.mrb[0].mxu0
      %v3396 = vadd.f32 0.0, %v3395
      %v3397 = vpop.f32.mrb[0].mxu0
      %3398 = vmatprep.mubr.f32.mxu0 %v3117
      %3399 = vmatmul.mubr.f32.gmra.mrb[0].mxu0 %v2961
      %v3400 = vpop.f32.mrb[0].mxu0
      %v3401 = vadd.f32 0.0, %v3400
      %v3402 = vpop.f32.mrb[0].mxu0
      %3403 = vmatprep.mubr.f32.mxu0 %v3120
      %3404 = vmatmul.mubr.f32.gmra.mrb[0].mxu0 %v2962
      %v3405 = vpop.f32.mrb[0].mxu0
      %v3406 = vadd.f32 0.0, %v3405
      %v3407 = vpop.f32.mrb[0].mxu0
      %3408 = vmatprep.mubr.f32.mxu0 %v3123
      %3409 = vmatmul.mubr.f32.gmra.mrb[0].mxu0 %v2963
      %v3410 = vpop.f32.mrb[0].mxu0
      %v3411 = vadd.f32 0.0, %v3410
      %v3412 = vpop.f32.mrb[0].mxu0
      %3413 = vmatprep.mubr.f32.mxu0 %v3126
      %3414 = vmatmul.mubr.f32.gmra.mrb[0].mxu0 %v2964
      %v3415 = vpop.f32.mrb[0].mxu0
      %v3416 = vadd.f32 0.0, %v3415
      %v3417 = vpop.f32.mrb[0].mxu0
      %3418 = vmatprep.mubr.f32.mxu0 %v3129
      %3419 = vmatmul.mubr.f32.gmra.mrb[0].mxu0 %v2965
      %v3420 = vpop.f32.mrb[0].mxu0
      %v3421 = vadd.f32 0.0, %v3420
      %v3422 = vpop.f32.mrb[0].mxu0
      %3423 = vmatprep.mubr.f32.mxu0 %v3132
      %3424 = vmatmul.mubr.f32.gmra.mrb[0].mxu0 %v2966
      %v3425 = vpop.f32.mrb[0].mxu0
      %v3426 = vadd.f32 0.0, %v3425
      %v3427 = vpop.f32.mrb[0].mxu0
      %3428 = vmatprep.mubr.f32.mxu0 %v3135
      %3429 = vmatmul.mubr.f32.gmra.mrb[0].mxu0 %v2967
      %v3430 = vpop.f32.mrb[0].mxu0
      %v3431 = vadd.f32 0.0, %v3430
      %v3432 = vpop.f32.mrb[0].mxu0
      %3433 = vmatprep.mubr.f32.mxu0 %v3138
      %3434 = vmatmul.mubr.f32.gmra.mrb[0].mxu0 %v2968
      %v3435 = vpop.f32.mrb[0].mxu0
      %v3436 = vadd.f32 0.0, %v3435
      %v3437 = vpop.f32.mrb[0].mxu0
      %3438 = vmatprep.mubr.f32.mxu0 %v3141
      %3439 = vmatmul.mubr.f32.gmra.mrb[0].mxu0 %v2969
      %v3440 = vpop.f32.mrb[0].mxu0
      %v3441 = vadd.f32 0.0, %v3440
      %v3442 = vpop.f32.mrb[0].mxu0
      %3443 = vmatprep.mubr.f32.mxu0 %v3144
      %3444 = vmatmul.mubr.f32.gmra.mrb[0].mxu0 %v2970
      %v3445 = vpop.f32.mrb[0].mxu0
      %v3446 = vadd.f32 0.0, %v3445
      %v3447 = vpop.f32.mrb[0].mxu0
      %3448 = vmatprep.mubr.f32.mxu0 %v3147
      %3449 = vmatmul.mubr.f32.gmra.mrb[0].mxu0 %v2971
      %v3450 = vpop.f32.mrb[0].mxu0
      %v3451 = vadd.f32 0.0, %v3450
      %v3452 = vpop.f32.mrb[0].mxu0
      %3453 = vmatprep.mubr.f32.mxu0 %v3150
      %3454 = vmatmul.mubr.f32.gmra.mrb[0].mxu0 %v2972
      %v3455 = vpop.f32.mrb[0].mxu0
      %v3456 = vadd.f32 0.0, %v3455
      %v3457 = vpop.f32.mrb[0].mxu0
      %3458 = vmatprep.mubr.f32.mxu0 %v3153
      %3459 = vmatmul.mubr.f32.gmra.mrb[0].mxu0 %v2973
      %v3460 = vpop.f32.mrb[0].mxu0
      %v3461 = vadd.f32 0.0, %v3460
      %v3462 = vpop.f32.mrb[0].mxu0
      %3463 = vmatprep.mubr.f32.mxu0 %v3156
      %3464 = vmatmul.mubr.f32.gmra.mrb[0].mxu0 %v2974
      %v3465 = vpop.f32.mrb[0].mxu0
      %v3466 = vadd.f32 0.0, %v3465
      %v3467 = vpop.f32.mrb[0].mxu0
      %3468 = vmatprep.mubr.f32.mxu0 %v3159
      %3469 = vmatmul.mubr.f32.gmra.mrb[0].mxu0 %v2975
      %v3470 = vpop.f32.mrb[0].mxu0
      %v3471 = vadd.f32 0.0, %v3470
      %v3472 = vpop.f32.mrb[0].mxu0
      %3473 = vmatprep.mubr.f32.mxu0 %v3162
      %3474 = vmatmul.mubr.f32.gmra.mrb[0].mxu0 %v2976
      %v3475 = vpop.f32.mrb[0].mxu0
      %v3476 = vadd.f32 0.0, %v3475
      %v3477 = vpop.f32.mrb[0].mxu0
      %3478 = vmatprep.mubr.f32.mxu0 %v3165
      %3479 = vmatmul.mubr.f32.gmra.mrb[0].mxu0 %v2977
      %v3480 = vpop.f32.mrb[0].mxu0
      %v3481 = vadd.f32 0.0, %v3480
      %v3482 = vpop.f32.mrb[0].mxu0
      %3483 = vmatprep.mubr.f32.mxu0 %v3168
      %3484 = vmatmul.mubr.f32.gmra.mrb[0].mxu0 %v3048
      %v3485 = vpop.f32.mrb[0].mxu0
      %v3486 = vadd.f32 0.0, %v3485
      %v3487 = vpop.f32.mrb[0].mxu0
      %3488 = vmatprep.mubr.f32.mxu0 %v3171
      %3489 = vmatmul.mubr.f32.gmra.mrb[0].mxu0 %v3049
      %v3490 = vpop.f32.mrb[0].mxu0
      %v3491 = vadd.f32 0.0, %v3490
      %v3492 = vpop.f32.mrb[0].mxu0
      %3493 = vmatprep.mubr.f32.mxu0 %v3174
      %3494 = vmatmul.mubr.f32.gmra.mrb[0].mxu0 %v2978
      %v3495 = vpop.f32.mrb[0].mxu0
      %v3496 = vadd.f32 0.0, %v3495
      %v3497 = vpop.f32.mrb[0].mxu0
      %3498 = vmatprep.mubr.f32.mxu0 %v3177
      %3499 = vmatmul.mubr.f32.gmra.mrb[0].mxu0 %v2979
      %v3500 = vpop.f32.mrb[0].mxu0
      %v3501 = vadd.f32 0.0, %v3500
      %v3502 = vpop.f32.mrb[0].mxu0
      %3503 = vmatprep.mubr.f32.mxu0 %v3180
      %3504 = vmatmul.mubr.f32.gmra.mrb[0].mxu0 %v2980
      %v3505 = vpop.f32.mrb[0].mxu0
      %v3506 = vadd.f32 0.0, %v3505
      %v3507 = vpop.f32.mrb[0].mxu0
      %3508 = vmatprep.mubr.f32.mxu0 %v3183
      %3509 = vmatmul.mubr.f32.gmra.mrb[0].mxu0 %v2981
      %v3510 = vpop.f32.mrb[0].mxu0
      %v3511 = vadd.f32 0.0, %v3510
      %v3512 = vpop.f32.mrb[0].mxu0
      %3513 = vmatprep.mubr.f32.mxu0 %v3186
      %3514 = vmatmul.mubr.f32.gmra.mrb[0].mxu0 %v2982
      %v3515 = vpop.f32.mrb[0].mxu0
      %v3516 = vadd.f32 0.0, %v3515
      %v3517 = vpop.f32.mrb[0].mxu0
      %3518 = vmatprep.mubr.f32.mxu0 %v3189
      %3519 = vmatmul.mubr.f32.gmra.mrb[0].mxu0 %v2983
      %v3520 = vpop.f32.mrb[0].mxu0
      %v3521 = vadd.f32 0.0, %v3520
      %v3522 = vpop.f32.mrb[0].mxu0
      %3523 = vmatprep.mubr.f32.mxu0 %v3192
      %3524 = vmatmul.mubr.f32.gmra.mrb[0].mxu0 %v2984
      %v3525 = vpop.f32.mrb[0].mxu0
      %v3526 = vadd.f32 0.0, %v3525
      %v3527 = vpop.f32.mrb[0].mxu0
      %3528 = vmatprep.mubr.f32.mxu0 %v3195
      %3529 = vmatmul.mubr.f32.gmra.mrb[0].mxu0 %v2985
      %v3530 = vpop.f32.mrb[0].mxu0
      %v3531 = vadd.f32 0.0, %v3530
      %v3532 = vpop.f32.mrb[0].mxu0
      %3533 = vmatprep.mubr.f32.mxu0 %v3198
      %3534 = vmatmul.mubr.f32.gmra.mrb[0].mxu0 %v2986
      %v3535 = vpop.f32.mrb[0].mxu0
      %v3536 = vadd.f32 0.0, %v3535
      %v3537 = vpop.f32.mrb[0].mxu0
      %3538 = vmatprep.mubr.f32.mxu0 %v3201
      %3539 = vmatmul.mubr.f32.gmra.mrb[0].mxu0 %v2987
      %v3540 = vpop.f32.mrb[0].mxu0
      %v3541 = vadd.f32 0.0, %v3540
      %v3542 = vpop.f32.mrb[0].mxu0
      %3543 = vmatprep.mubr.f32.mxu0 %v3204
      %3544 = vmatmul.mubr.f32.gmra.mrb[0].mxu0 %v2988
      %v3545 = vpop.f32.mrb[0].mxu0
      %v3546 = vadd.f32 0.0, %v3545
      %v3547 = vpop.f32.mrb[0].mxu0
      %3548 = vmatprep.mubr.f32.mxu0 %v3207
      %3549 = vmatmul.mubr.f32.gmra.mrb[0].mxu0 %v2989
      %v3550 = vpop.f32.mrb[0].mxu0
      %v3551 = vadd.f32 0.0, %v3550
      %v3552 = vpop.f32.mrb[0].mxu0
      %3553 = vmatprep.mubr.f32.mxu0 %v3210
      %3554 = vmatmul.mubr.f32.gmra.mrb[0].mxu0 %v2990
      %v3555 = vpop.f32.mrb[0].mxu0
      %v3556 = vadd.f32 0.0, %v3555
      %v3557 = vpop.f32.mrb[0].mxu0
      %3558 = vmatprep.mubr.f32.mxu0 %v3213
      %3559 = vmatmul.mubr.f32.gmra.mrb[0].mxu0 %v2991
      %v3560 = vpop.f32.mrb[0].mxu0
      %v3561 = vadd.f32 0.0, %v3560
      %v3562 = vpop.f32.mrb[0].mxu0
      %3563 = vmatprep.mubr.f32.mxu0 %v3216
      %3564 = vmatmul.mubr.f32.gmra.mrb[0].mxu0 %v2992
      %v3565 = vpop.f32.mrb[0].mxu0
      %v3566 = vadd.f32 0.0, %v3565
      %v3567 = vpop.f32.mrb[0].mxu0
      %3568 = vmatprep.mubr.f32.mxu0 %v3219
      %3569 = vmatmul.mubr.f32.gmra.mrb[0].mxu0 %v2993
      %v3570 = vpop.f32.mrb[0].mxu0
      %v3571 = vadd.f32 0.0, %v3570
      %v3572 = vpop.f32.mrb[0].mxu0
      %3573 = vmatprep.mubr.f32.mxu0 %v3222
      %3574 = vmatmul.mubr.f32.gmra.mrb[0].mxu0 %v2994
      %v3575 = vpop.f32.mrb[0].mxu0
      %v3576 = vadd.f32 0.0, %v3575
      %v3577 = vpop.f32.mrb[0].mxu0
      %3578 = vmatprep.mubr.f32.mxu0 %v3225
      %3579 = vmatmul.mubr.f32.gmra.mrb[0].mxu0 %v2995
      %v3580 = vpop.f32.mrb[0].mxu0
      %v3581 = vadd.f32 0.0, %v3580
      %v3582 = vpop.f32.mrb[0].mxu0
      %3583 = vmatprep.mubr.f32.mxu0 %v3228
      %3584 = vmatmul.mubr.f32.gmra.mrb[0].mxu0 %v2996
      %v3585 = vpop.f32.mrb[0].mxu0
      %v3586 = vadd.f32 0.0, %v3585
      %v3587 = vpop.f32.mrb[0].mxu0
      %3588 = vmatprep.mubr.f32.mxu0 %v3231
      %3589 = vmatmul.mubr.f32.gmra.mrb[0].mxu0 %v2997
      %v3590 = vpop.f32.mrb[0].mxu0
      %v3591 = vadd.f32 0.0, %v3590
      %v3592 = vpop.f32.mrb[0].mxu0
      %3593 = vmatprep.mubr.f32.mxu0 %v3234
      %3594 = vmatmul.mubr.f32.gmra.mrb[0].mxu0 %v2998
      %v3595 = vpop.f32.mrb[0].mxu0
      %v3596 = vadd.f32 0.0, %v3595
      %v3597 = vpop.f32.mrb[0].mxu0
      %3598 = vmatprep.mubr.f32.mxu0 %v3237
      %3599 = vmatmul.mubr.f32.gmra.mrb[0].mxu0 %v2999
      %v3600 = vpop.f32.mrb[0].mxu0
      %v3601 = vadd.f32 0.0, %v3600
      %v3602 = vpop.f32.mrb[0].mxu0
      %3603 = vmatprep.mubr.f32.mxu0 %v3240
      %3604 = vmatmul.mubr.f32.gmra.mrb[0].mxu0 %v3000
      %v3605 = vpop.f32.mrb[0].mxu0
      %v3606 = vadd.f32 0.0, %v3605
      %v3607 = vpop.f32.mrb[0].mxu0
      %3608 = vmatprep.mubr.f32.mxu0 %v3243
      %3609 = vmatmul.mubr.f32.gmra.mrb[0].mxu0 %v3001
      %v3610 = vpop.f32.mrb[0].mxu0
      %v3611 = vadd.f32 0.0, %v3610
      %v3612 = vpop.f32.mrb[0].mxu0
      %3613 = vmatprep.mubr.f32.mxu0 %v3246
      %3614 = vmatmul.mubr.f32.gmra.mrb[0].mxu0 %v3002
      %v3615 = vpop.f32.mrb[0].mxu0
      %v3616 = vadd.f32 0.0, %v3615
      %v3617 = vpop.f32.mrb[0].mxu0
      %3618 = vmatprep.mubr.f32.mxu0 %v3249
      %3619 = vmatmul.mubr.f32.gmra.mrb[0].mxu0 %v3003
      %v3620 = vpop.f32.mrb[0].mxu0
      %v3621 = vadd.f32 0.0, %v3620
      %v3622 = vpop.f32.mrb[0].mxu0
      %3623 = vmatprep.mubr.f32.mxu0 %v3252
      %3624 = vmatmul.mubr.f32.gmra.mrb[0].mxu0 %v3004
      %v3625 = vpop.f32.mrb[0].mxu0
      %v3626 = vadd.f32 0.0, %v3625
      %v3627 = vpop.f32.mrb[0].mxu0
      %3628 = vmatprep.mubr.f32.mxu0 %v3255
      %3629 = vmatmul.mubr.f32.gmra.mrb[0].mxu0 %v3005
      %v3630 = vpop.f32.mrb[0].mxu0
      %v3631 = vadd.f32 0.0, %v3630
      %v3632 = vpop.f32.mrb[0].mxu0
      %3633 = vmatprep.mubr.f32.mxu0 %v3258
      %3634 = vmatmul.mubr.f32.gmra.mrb[0].mxu0 %v3006
      %v3635 = vpop.f32.mrb[0].mxu0
      %v3636 = vadd.f32 0.0, %v3635
      %v3637 = vpop.f32.mrb[0].mxu0
      %3638 = vmatprep.mubr.f32.mxu0 %v3261
      %3639 = vmatmul.mubr.f32.gmra.mrb[0].mxu0 %v3007
      %v3640 = vpop.f32.mrb[0].mxu0
      %v3641 = vadd.f32 0.0, %v3640
      %v3642 = vpop.f32.mrb[0].mxu0
      %3643 = vmatprep.mubr.f32.mxu0 %v3264
      %3644 = vmatmul.mubr.f32.gmra.mrb[0].mxu0 %v3050
      %v3645 = vpop.f32.mrb[0].mxu0
      %v3646 = vadd.f32 0.0, %v3645
      %v3647 = vpop.f32.mrb[0].mxu0
      %3648 = vmatprep.mubr.f32.mxu0 %v3267
      %3649 = vmatmul.mubr.f32.gmra.mrb[0].mxu0 %v3051
      %v3650 = vpop.f32.mrb[0].mxu0
      %v3651 = vadd.f32 0.0, %v3650
      %v3652 = vpop.f32.mrb[0].mxu0
      %3653 = vdwg.mxu0
      %v3655 = vsel %vm731, %v2636, 0
      %v3658 = vsel %vm731, %v2637, 0
      %3660 = vmatprep.subr.mxu0 0.0
      %3661 = vmatpush1.msra.mxu0 %v3008
      %3662 = vmatprep.subr.mxu0 0.0
      %3663 = vmatpush1.msra.mxu0 %v3009
      %3664 = vmatprep.subr.mxu0 0.0
      %3665 = vmatpush1.msra.mxu0 %v3010
      %3666 = vmatprep.subr.mxu0 0.0
      %3667 = vmatpush1.msra.mxu0 %v3011
      %3668 = vmatprep.subr.mxu0 0.0
      %3669 = vmatpush1.msra.mxu0 %v3012
      %3670 = vmatprep.subr.mxu0 0.0
      %3671 = vmatpush1.msra.mxu0 %v3013
      %3672 = vmatprep.subr.mxu0 0.0
      %3673 = vmatpush1.msra.mxu0 %v3014
      %3674 = vmatprep.subr.mxu0 0.0
      %3675 = vmatpush1.msra.mxu0 %v3015
      %3676 = vmatprep.subr.mxu0 0.0
      %3677 = vmatpush1.msra.mxu0 %v3016
      %3678 = vmatprep.subr.mxu0 0.0
      %3679 = vmatpush1.msra.mxu0 %v3017
      %3680 = vmatprep.subr.mxu0 0.0
      %3681 = vmatpush1.msra.mxu0 %v3018
      %3682 = vmatprep.subr.mxu0 0.0
      %3683 = vmatpush1.msra.mxu0 %v3019
      %3684 = vmatprep.subr.mxu0 0.0
      %3685 = vmatpush1.msra.mxu0 %v3020
      %3686 = vmatprep.subr.mxu0 0.0
      %3687 = vmatpush1.msra.mxu0 %v3021
      %3688 = vmatprep.subr.mxu0 0.0
      %3689 = vmatpush1.msra.mxu0 %v3022
      %3690 = vmatprep.subr.mxu0 0.0
      %3691 = vmatpush1.msra.mxu0 %v3023
      %3692 = vmatprep.subr.mxu0 0.0
      %3693 = vmatpush1.msra.mxu0 %v3024
      %3694 = vmatprep.subr.mxu0 0.0
      %3695 = vmatpush1.msra.mxu0 %v3025
      %3696 = vmatprep.subr.mxu0 0.0
      %3697 = vmatpush1.msra.mxu0 %v3026
      %3698 = vmatprep.subr.mxu0 0.0
      %3699 = vmatpush1.msra.mxu0 %v3027
      %3700 = vmatprep.subr.mxu0 0.0
      %3701 = vmatpush1.msra.mxu0 %v3028
      %3702 = vmatprep.subr.mxu0 0.0
      %3703 = vmatpush1.msra.mxu0 %v3029
      %3704 = vmatprep.subr.mxu0 0.0
      %3705 = vmatpush1.msra.mxu0 %v3030
      %3706 = vmatprep.subr.mxu0 0.0
      %3707 = vmatpush1.msra.mxu0 %v3031
      %3708 = vmatprep.subr.mxu0 0.0
      %3709 = vmatpush1.msra.mxu0 0.0
      %3710 = vmatprep.subr.mxu0 0.0
      %3711 = vmatpush1.msra.mxu0 0.0
      %3712 = vmatprep.subr.mxu0 0.0
      %3713 = vmatpush1.msra.mxu0 0.0
      %3714 = vmatprep.subr.mxu0 0.0
      %3715 = vmatpush1.msra.mxu0 0.0
      %3716 = vmatprep.subr.mxu0 0.0
      %3717 = vmatpush1.msra.mxu0 0.0
      %3718 = vmatprep.subr.mxu0 0.0
      %3719 = vmatpush1.msra.mxu0 0.0
      %3720 = vmatprep.subr.mxu0 0.0
      %3721 = vmatpush1.msra.mxu0 0.0
      %3722 = vmatprep.subr.mxu0 0.0
      %3723 = vmatpush1.msra.mxu0 0.0
      %3724 = vmatprep.mubr.f32.mxu0 %v3655
      %3725 = vmatmul.mubr.f32.gmra.mrb[0].mxu0 %v2946
      %v3726 = vpop.f32.mrb[0].mxu0
      %v3727 = vadd.f32 %v3336, %v3726
      %v3728 = vpop.f32.mrb[0].mxu0
      %3729 = vmatprep.mubr.f32.mxu0 %v3658
      %3730 = vmatmul.mubr.f32.gmra.mrb[0].mxu0 %v2947
      %v3731 = vpop.f32.mrb[0].mxu0
      %v3732 = vadd.f32 %v3341, %v3731
      %v3733 = vpop.f32.mrb[0].mxu0
      %3734 = vmatprep.mubr.f32.mxu0 %v3078
      %3735 = vmatmul.mubr.f32.gmra.mrb[0].mxu0 %v2948
      %v3736 = vpop.f32.mrb[0].mxu0
      %v3737 = vadd.f32 %v3346, %v3736
      %v3738 = vpop.f32.mrb[0].mxu0
      %3739 = vmatprep.mubr.f32.mxu0 %v3081
      %3740 = vmatmul.mubr.f32.gmra.mrb[0].mxu0 %v2949
      %v3741 = vpop.f32.mrb[0].mxu0
      %v3742 = vadd.f32 %v3351, %v3741
      %v3743 = vpop.f32.mrb[0].mxu0
      %3744 = vmatprep.mubr.f32.mxu0 %v3084
      %3745 = vmatmul.mubr.f32.gmra.mrb[0].mxu0 %v2950
      %v3746 = vpop.f32.mrb[0].mxu0
      %v3747 = vadd.f32 %v3356, %v3746
      %v3748 = vpop.f32.mrb[0].mxu0
      %3749 = vmatprep.mubr.f32.mxu0 %v3087
      %3750 = vmatmul.mubr.f32.gmra.mrb[0].mxu0 %v2951
      %v3751 = vpop.f32.mrb[0].mxu0
      %v3752 = vadd.f32 %v3361, %v3751
      %v3753 = vpop.f32.mrb[0].mxu0
      %3754 = vmatprep.mubr.f32.mxu0 %v3090
      %3755 = vmatmul.mubr.f32.gmra.mrb[0].mxu0 %v2952
      %v3756 = vpop.f32.mrb[0].mxu0
      %v3757 = vadd.f32 %v3366, %v3756
      %v3758 = vpop.f32.mrb[0].mxu0
      %3759 = vmatprep.mubr.f32.mxu0 %v3093
      %3760 = vmatmul.mubr.f32.gmra.mrb[0].mxu0 %v2953
      %v3761 = vpop.f32.mrb[0].mxu0
      %v3762 = vadd.f32 %v3371, %v3761
      %v3763 = vpop.f32.mrb[0].mxu0
      %3764 = vmatprep.mubr.f32.mxu0 %v3096
      %3765 = vmatmul.mubr.f32.gmra.mrb[0].mxu0 %v2954
      %v3766 = vpop.f32.mrb[0].mxu0
      %v3767 = vadd.f32 %v3376, %v3766
      %v3768 = vpop.f32.mrb[0].mxu0
      %3769 = vmatprep.mubr.f32.mxu0 %v3099
      %3770 = vmatmul.mubr.f32.gmra.mrb[0].mxu0 %v2955
      %v3771 = vpop.f32.mrb[0].mxu0
      %v3772 = vadd.f32 %v3381, %v3771
      %v3773 = vpop.f32.mrb[0].mxu0
      %3774 = vmatprep.mubr.f32.mxu0 %v3102
      %3775 = vmatmul.mubr.f32.gmra.mrb[0].mxu0 %v2956
      %v3776 = vpop.f32.mrb[0].mxu0
      %v3777 = vadd.f32 %v3386, %v3776
      %v3778 = vpop.f32.mrb[0].mxu0
      %3779 = vmatprep.mubr.f32.mxu0 %v3105
      %3780 = vmatmul.mubr.f32.gmra.mrb[0].mxu0 %v2957
      %v3781 = vpop.f32.mrb[0].mxu0
      %v3782 = vadd.f32 %v3391, %v3781
      %v3783 = vpop.f32.mrb[0].mxu0
      %3784 = vmatprep.mubr.f32.mxu0 %v3108
      %3785 = vmatmul.mubr.f32.gmra.mrb[0].mxu0 %v2958
      %v3786 = vpop.f32.mrb[0].mxu0
      %v3787 = vadd.f32 %v3396, %v3786
      %v3788 = vpop.f32.mrb[0].mxu0
      %3789 = vmatprep.mubr.f32.mxu0 %v3111
      %3790 = vmatmul.mubr.f32.gmra.mrb[0].mxu0 %v2959
      %v3791 = vpop.f32.mrb[0].mxu0
      %v3792 = vadd.f32 %v3401, %v3791
      %v3793 = vpop.f32.mrb[0].mxu0
      %3794 = vmatprep.mubr.f32.mxu0 %v3114
      %3795 = vmatmul.mubr.f32.gmra.mrb[0].mxu0 %v2960
      %v3796 = vpop.f32.mrb[0].mxu0
      %v3797 = vadd.f32 %v3406, %v3796
      %v3798 = vpop.f32.mrb[0].mxu0
      %3799 = vmatprep.mubr.f32.mxu0 %v3117
      %3800 = vmatmul.mubr.f32.gmra.mrb[0].mxu0 %v2961
      %v3801 = vpop.f32.mrb[0].mxu0
      %v3802 = vadd.f32 %v3411, %v3801
      %v3803 = vpop.f32.mrb[0].mxu0
      %3804 = vmatprep.mubr.f32.mxu0 %v3120
      %3805 = vmatmul.mubr.f32.gmra.mrb[0].mxu0 %v2962
      %v3806 = vpop.f32.mrb[0].mxu0
      %v3807 = vadd.f32 %v3416, %v3806
      %v3808 = vpop.f32.mrb[0].mxu0
      %3809 = vmatprep.mubr.f32.mxu0 %v3123
      %3810 = vmatmul.mubr.f32.gmra.mrb[0].mxu0 %v2963
      %v3811 = vpop.f32.mrb[0].mxu0
      %v3812 = vadd.f32 %v3421, %v3811
      %v3813 = vpop.f32.mrb[0].mxu0
      %3814 = vmatprep.mubr.f32.mxu0 %v3126
      %3815 = vmatmul.mubr.f32.gmra.mrb[0].mxu0 %v2964
      %v3816 = vpop.f32.mrb[0].mxu0
      %v3817 = vadd.f32 %v3426, %v3816
      %v3818 = vpop.f32.mrb[0].mxu0
      %3819 = vmatprep.mubr.f32.mxu0 %v3129
      %3820 = vmatmul.mubr.f32.gmra.mrb[0].mxu0 %v2965
      %v3821 = vpop.f32.mrb[0].mxu0
      %v3822 = vadd.f32 %v3431, %v3821
      %v3823 = vpop.f32.mrb[0].mxu0
      %3824 = vmatprep.mubr.f32.mxu0 %v3132
      %3825 = vmatmul.mubr.f32.gmra.mrb[0].mxu0 %v2966
      %v3826 = vpop.f32.mrb[0].mxu0
      %v3827 = vadd.f32 %v3436, %v3826
      %v3828 = vpop.f32.mrb[0].mxu0
      %3829 = vmatprep.mubr.f32.mxu0 %v3135
      %3830 = vmatmul.mubr.f32.gmra.mrb[0].mxu0 %v2967
      %v3831 = vpop.f32.mrb[0].mxu0
      %v3832 = vadd.f32 %v3441, %v3831
      %v3833 = vpop.f32.mrb[0].mxu0
      %3834 = vmatprep.mubr.f32.mxu0 %v3138
      %3835 = vmatmul.mubr.f32.gmra.mrb[0].mxu0 %v2968
      %v3836 = vpop.f32.mrb[0].mxu0
      %v3837 = vadd.f32 %v3446, %v3836
      %v3838 = vpop.f32.mrb[0].mxu0
      %3839 = vmatprep.mubr.f32.mxu0 %v3141
      %3840 = vmatmul.mubr.f32.gmra.mrb[0].mxu0 %v2969
      %v3841 = vpop.f32.mrb[0].mxu0
      %v3842 = vadd.f32 %v3451, %v3841
      %v3843 = vpop.f32.mrb[0].mxu0
      %3844 = vmatprep.mubr.f32.mxu0 %v3144
      %3845 = vmatmul.mubr.f32.gmra.mrb[0].mxu0 %v2970
      %v3846 = vpop.f32.mrb[0].mxu0
      %v3847 = vadd.f32 %v3456, %v3846
      %v3848 = vpop.f32.mrb[0].mxu0
      %3849 = vmatprep.mubr.f32.mxu0 %v3147
      %3850 = vmatmul.mubr.f32.gmra.mrb[0].mxu0 %v2971
      %v3851 = vpop.f32.mrb[0].mxu0
      %v3852 = vadd.f32 %v3461, %v3851
      %v3853 = vpop.f32.mrb[0].mxu0
      %3854 = vmatprep.mubr.f32.mxu0 %v3150
      %3855 = vmatmul.mubr.f32.gmra.mrb[0].mxu0 %v2972
      %v3856 = vpop.f32.mrb[0].mxu0
      %v3857 = vadd.f32 %v3466, %v3856
      %v3858 = vpop.f32.mrb[0].mxu0
      %3859 = vmatprep.mubr.f32.mxu0 %v3153
      %3860 = vmatmul.mubr.f32.gmra.mrb[0].mxu0 %v2973
      %v3861 = vpop.f32.mrb[0].mxu0
      %v3862 = vadd.f32 %v3471, %v3861
      %v3863 = vpop.f32.mrb[0].mxu0
      %3864 = vmatprep.mubr.f32.mxu0 %v3156
      %3865 = vmatmul.mubr.f32.gmra.mrb[0].mxu0 %v2974
      %v3866 = vpop.f32.mrb[0].mxu0
      %v3867 = vadd.f32 %v3476, %v3866
      %v3868 = vpop.f32.mrb[0].mxu0
      %3869 = vmatprep.mubr.f32.mxu0 %v3159
      %3870 = vmatmul.mubr.f32.gmra.mrb[0].mxu0 %v2975
      %v3871 = vpop.f32.mrb[0].mxu0
      %v3872 = vadd.f32 %v3481, %v3871
      %v3873 = vpop.f32.mrb[0].mxu0
      %3874 = vmatprep.mubr.f32.mxu0 %v3162
      %3875 = vmatmul.mubr.f32.gmra.mrb[0].mxu0 %v2976
      %v3876 = vpop.f32.mrb[0].mxu0
      %v3877 = vadd.f32 %v3486, %v3876
      %v3878 = vpop.f32.mrb[0].mxu0
      %3879 = vmatprep.mubr.f32.mxu0 %v3165
      %3880 = vmatmul.mubr.f32.gmra.mrb[0].mxu0 %v2977
      %v3881 = vpop.f32.mrb[0].mxu0
      %v3882 = vadd.f32 %v3491, %v3881
      %v3883 = vpop.f32.mrb[0].mxu0
      %3884 = vmatprep.mubr.f32.mxu0 %v3655
      %3885 = vmatmul.mubr.f32.gmra.mrb[0].mxu0 %v2946
      %v3886 = vpop.f32.mrb[0].mxu0
      %v3887 = vadd.f32 %v3496, %v3886
      %v3888 = vpop.f32.mrb[0].mxu0
      %3889 = vmatprep.mubr.f32.mxu0 %v3658
      %3890 = vmatmul.mubr.f32.gmra.mrb[0].mxu0 %v2947
      %v3891 = vpop.f32.mrb[0].mxu0
      %v3892 = vadd.f32 %v3501, %v3891
      %v3893 = vpop.f32.mrb[0].mxu0
      %3894 = vmatprep.mubr.f32.mxu0 %v3174
      %3895 = vmatmul.mubr.f32.gmra.mrb[0].mxu0 %v2978
      %v3896 = vpop.f32.mrb[0].mxu0
      %v3897 = vadd.f32 %v3506, %v3896
      %v3898 = vpop.f32.mrb[0].mxu0
      %3899 = vmatprep.mubr.f32.mxu0 %v3177
      %3900 = vmatmul.mubr.f32.gmra.mrb[0].mxu0 %v2979
      %v3901 = vpop.f32.mrb[0].mxu0
      %v3902 = vadd.f32 %v3511, %v3901
      %v3903 = vpop.f32.mrb[0].mxu0
      %3904 = vmatprep.mubr.f32.mxu0 %v3180
      %3905 = vmatmul.mubr.f32.gmra.mrb[0].mxu0 %v2980
      %v3906 = vpop.f32.mrb[0].mxu0
      %v3907 = vadd.f32 %v3516, %v3906
      %v3908 = vpop.f32.mrb[0].mxu0
      %3909 = vmatprep.mubr.f32.mxu0 %v3183
      %3910 = vmatmul.mubr.f32.gmra.mrb[0].mxu0 %v2981
      %v3911 = vpop.f32.mrb[0].mxu0
      %v3912 = vadd.f32 %v3521, %v3911
      %v3913 = vpop.f32.mrb[0].mxu0
      %3914 = vmatprep.mubr.f32.mxu0 %v3186
      %3915 = vmatmul.mubr.f32.gmra.mrb[0].mxu0 %v2982
      %v3916 = vpop.f32.mrb[0].mxu0
      %v3917 = vadd.f32 %v3526, %v3916
      %v3918 = vpop.f32.mrb[0].mxu0
      %3919 = vmatprep.mubr.f32.mxu0 %v3189
      %3920 = vmatmul.mubr.f32.gmra.mrb[0].mxu0 %v2983
      %v3921 = vpop.f32.mrb[0].mxu0
      %v3922 = vadd.f32 %v3531, %v3921
      %v3923 = vpop.f32.mrb[0].mxu0
      %3924 = vmatprep.mubr.f32.mxu0 %v3192
      %3925 = vmatmul.mubr.f32.gmra.mrb[0].mxu0 %v2984
      %v3926 = vpop.f32.mrb[0].mxu0
      %v3927 = vadd.f32 %v3536, %v3926
      %v3928 = vpop.f32.mrb[0].mxu0
      %3929 = vmatprep.mubr.f32.mxu0 %v3195
      %3930 = vmatmul.mubr.f32.gmra.mrb[0].mxu0 %v2985
      %v3931 = vpop.f32.mrb[0].mxu0
      %v3932 = vadd.f32 %v3541, %v3931
      %v3933 = vpop.f32.mrb[0].mxu0
      %3934 = vmatprep.mubr.f32.mxu0 %v3198
      %3935 = vmatmul.mubr.f32.gmra.mrb[0].mxu0 %v2986
      %v3936 = vpop.f32.mrb[0].mxu0
      %v3937 = vadd.f32 %v3546, %v3936
      %v3938 = vpop.f32.mrb[0].mxu0
      %3939 = vmatprep.mubr.f32.mxu0 %v3201
      %3940 = vmatmul.mubr.f32.gmra.mrb[0].mxu0 %v2987
      %v3941 = vpop.f32.mrb[0].mxu0
      %v3942 = vadd.f32 %v3551, %v3941
      %v3943 = vpop.f32.mrb[0].mxu0
      %3944 = vmatprep.mubr.f32.mxu0 %v3204
      %3945 = vmatmul.mubr.f32.gmra.mrb[0].mxu0 %v2988
      %v3946 = vpop.f32.mrb[0].mxu0
      %v3947 = vadd.f32 %v3556, %v3946
      %v3948 = vpop.f32.mrb[0].mxu0
      %3949 = vmatprep.mubr.f32.mxu0 %v3207
      %3950 = vmatmul.mubr.f32.gmra.mrb[0].mxu0 %v2989
      %v3951 = vpop.f32.mrb[0].mxu0
      %v3952 = vadd.f32 %v3561, %v3951
      %v3953 = vpop.f32.mrb[0].mxu0
      %3954 = vmatprep.mubr.f32.mxu0 %v3210
      %3955 = vmatmul.mubr.f32.gmra.mrb[0].mxu0 %v2990
      %v3956 = vpop.f32.mrb[0].mxu0
      %v3957 = vadd.f32 %v3566, %v3956
      %v3958 = vpop.f32.mrb[0].mxu0
      %3959 = vmatprep.mubr.f32.mxu0 %v3213
      %3960 = vmatmul.mubr.f32.gmra.mrb[0].mxu0 %v2991
      %v3961 = vpop.f32.mrb[0].mxu0
      %v3962 = vadd.f32 %v3571, %v3961
      %v3963 = vpop.f32.mrb[0].mxu0
      %3964 = vmatprep.mubr.f32.mxu0 %v3216
      %3965 = vmatmul.mubr.f32.gmra.mrb[0].mxu0 %v2992
      %v3966 = vpop.f32.mrb[0].mxu0
      %v3967 = vadd.f32 %v3576, %v3966
      %v3968 = vpop.f32.mrb[0].mxu0
      %3969 = vmatprep.mubr.f32.mxu0 %v3219
      %3970 = vmatmul.mubr.f32.gmra.mrb[0].mxu0 %v2993
      %v3971 = vpop.f32.mrb[0].mxu0
      %v3972 = vadd.f32 %v3581, %v3971
      %v3973 = vpop.f32.mrb[0].mxu0
      %3974 = vmatprep.mubr.f32.mxu0 %v3222
      %3975 = vmatmul.mubr.f32.gmra.mrb[0].mxu0 %v2994
      %v3976 = vpop.f32.mrb[0].mxu0
      %v3977 = vadd.f32 %v3586, %v3976
      %v3978 = vpop.f32.mrb[0].mxu0
      %3979 = vmatprep.mubr.f32.mxu0 %v3225
      %3980 = vmatmul.mubr.f32.gmra.mrb[0].mxu0 %v2995
      %v3981 = vpop.f32.mrb[0].mxu0
      %v3982 = vadd.f32 %v3591, %v3981
      %v3983 = vpop.f32.mrb[0].mxu0
      %3984 = vmatprep.mubr.f32.mxu0 %v3228
      %3985 = vmatmul.mubr.f32.gmra.mrb[0].mxu0 %v2996
      %v3986 = vpop.f32.mrb[0].mxu0
      %v3987 = vadd.f32 %v3596, %v3986
      %v3988 = vpop.f32.mrb[0].mxu0
      %3989 = vmatprep.mubr.f32.mxu0 %v3231
      %3990 = vmatmul.mubr.f32.gmra.mrb[0].mxu0 %v2997
      %v3991 = vpop.f32.mrb[0].mxu0
      %v3992 = vadd.f32 %v3601, %v3991
      %v3993 = vpop.f32.mrb[0].mxu0
      %3994 = vmatprep.mubr.f32.mxu0 %v3234
      %3995 = vmatmul.mubr.f32.gmra.mrb[0].mxu0 %v2998
      %v3996 = vpop.f32.mrb[0].mxu0
      %v3997 = vadd.f32 %v3606, %v3996
      %v3998 = vpop.f32.mrb[0].mxu0
      %3999 = vmatprep.mubr.f32.mxu0 %v3237
      %4000 = vmatmul.mubr.f32.gmra.mrb[0].mxu0 %v2999
      %v4001 = vpop.f32.mrb[0].mxu0
      %v4002 = vadd.f32 %v3611, %v4001
      %v4003 = vpop.f32.mrb[0].mxu0
      %4004 = vmatprep.mubr.f32.mxu0 %v3240
      %4005 = vmatmul.mubr.f32.gmra.mrb[0].mxu0 %v3000
      %v4006 = vpop.f32.mrb[0].mxu0
      %v4007 = vadd.f32 %v3616, %v4006
      %v4008 = vpop.f32.mrb[0].mxu0
      %4009 = vmatprep.mubr.f32.mxu0 %v3243
      %4010 = vmatmul.mubr.f32.gmra.mrb[0].mxu0 %v3001
      %v4011 = vpop.f32.mrb[0].mxu0
      %v4012 = vadd.f32 %v3621, %v4011
      %v4013 = vpop.f32.mrb[0].mxu0
      %4014 = vmatprep.mubr.f32.mxu0 %v3246
      %4015 = vmatmul.mubr.f32.gmra.mrb[0].mxu0 %v3002
      %v4016 = vpop.f32.mrb[0].mxu0
      %v4017 = vadd.f32 %v3626, %v4016
      %v4018 = vpop.f32.mrb[0].mxu0
      %4019 = vmatprep.mubr.f32.mxu0 %v3249
      %4020 = vmatmul.mubr.f32.gmra.mrb[0].mxu0 %v3003
      %v4021 = vpop.f32.mrb[0].mxu0
      %v4022 = vadd.f32 %v3631, %v4021
      %v4023 = vpop.f32.mrb[0].mxu0
      %4024 = vmatprep.mubr.f32.mxu0 %v3252
      %4025 = vmatmul.mubr.f32.gmra.mrb[0].mxu0 %v3004
      %v4026 = vpop.f32.mrb[0].mxu0
      %v4027 = vadd.f32 %v3636, %v4026
      %v4028 = vpop.f32.mrb[0].mxu0
      %4029 = vmatprep.mubr.f32.mxu0 %v3255
      %4030 = vmatmul.mubr.f32.gmra.mrb[0].mxu0 %v3005
      %v4031 = vpop.f32.mrb[0].mxu0
      %v4032 = vadd.f32 %v3641, %v4031
      %v4033 = vpop.f32.mrb[0].mxu0
      %4034 = vmatprep.mubr.f32.mxu0 %v3258
      %4035 = vmatmul.mubr.f32.gmra.mrb[0].mxu0 %v3006
      %v4036 = vpop.f32.mrb[0].mxu0
      %v4037 = vadd.f32 %v3646, %v4036
      %v4038 = vpop.f32.mrb[0].mxu0
      %4039 = vmatprep.mubr.f32.mxu0 %v3261
      %4040 = vmatmul.mubr.f32.gmra.mrb[0].mxu0 %v3007
      %v4041 = vpop.f32.mrb[0].mxu0
      %v4042 = vadd.f32 %v3651, %v4041
      %v4043 = vpop.f32.mrb[0].mxu0
      %4044 = vdwg.mxu0
      %s4045 = scalar_lea.vmem %s3, 384
      %v4046 = vld [vmem:[%s4045] sm:$0xff]
      %v4047 = vld [vmem:[%s4045 + $0x8] sm:$0xff]
      %v4048 = vld [vmem:[%s4045 + $0x10] sm:$0xff]
      %v4049 = vld [vmem:[%s4045 + $0x18] sm:$0xff]
      %v4050 = vld [vmem:[%s4045 + $0x20] sm:$0xff]
      %v4051 = vld [vmem:[%s4045 + $0x28] sm:$0xff]
      %v4052 = vld [vmem:[%s4045 + $0x30] sm:$0xff]
      %v4053 = vld [vmem:[%s4045 + $0x38] sm:$0xff]
      %v4054 = vld [vmem:[%s4045 + $0x40] sm:$0xff]
      %v4055 = vld [vmem:[%s4045 + $0x48] sm:$0xff]
      %v4056 = vld [vmem:[%s4045 + $0x50] sm:$0xff]
      %v4057 = vld [vmem:[%s4045 + $0x58] sm:$0xff]
      %v4058 = vld [vmem:[%s4045 + $0x60] sm:$0xff]
      %v4059 = vld [vmem:[%s4045 + $0x68] sm:$0xff]
      %v4060 = vld [vmem:[%s4045 + $0x70] sm:$0xff]
      %v4061 = vld [vmem:[%s4045 + $0x78] sm:$0xff]
      %v4062 = vld [vmem:[%s4045 + $0x80] sm:$0xff]
      %v4063 = vld [vmem:[%s4045 + $0x88] sm:$0xff]
      %v4064 = vld [vmem:[%s4045 + $0x90] sm:$0xff]
      %v4065 = vld [vmem:[%s4045 + $0x98] sm:$0xff]
      %v4066 = vld [vmem:[%s4045 + $0xa0] sm:$0xff]
      %v4067 = vld [vmem:[%s4045 + $0xa8] sm:$0xff]
      %v4068 = vld [vmem:[%s4045 + $0xb0] sm:$0xff]
      %v4069 = vld [vmem:[%s4045 + $0xb8] sm:$0xff]
      %4070 = vmatprep.subr.mxu0 0.0
      %4071 = vmatpush1.msra.mxu0 %v4046
      %4072 = vmatprep.subr.mxu0 0.0
      %4073 = vmatpush1.msra.mxu0 %v4047
      %4074 = vmatprep.subr.mxu0 0.0
      %4075 = vmatpush1.msra.mxu0 %v4048
      %4076 = vmatprep.subr.mxu0 0.0
      %4077 = vmatpush1.msra.mxu0 %v4049
      %4078 = vmatprep.subr.mxu0 0.0
      %4079 = vmatpush1.msra.mxu0 %v4050
      %4080 = vmatprep.subr.mxu0 0.0
      %4081 = vmatpush1.msra.mxu0 %v4051
      %4082 = vmatprep.subr.mxu0 0.0
      %4083 = vmatpush1.msra.mxu0 %v4052
      %4084 = vmatprep.subr.mxu0 0.0
      %4085 = vmatpush1.msra.mxu0 %v4053
      %4086 = vmatprep.subr.mxu0 0.0
      %4087 = vmatpush1.msra.mxu0 %v4054
      %4088 = vmatprep.subr.mxu0 0.0
      %4089 = vmatpush1.msra.mxu0 %v4055
      %4090 = vmatprep.subr.mxu0 0.0
      %4091 = vmatpush1.msra.mxu0 %v4056
      %4092 = vmatprep.subr.mxu0 0.0
      %4093 = vmatpush1.msra.mxu0 %v4057
      %4094 = vmatprep.subr.mxu0 0.0
      %4095 = vmatpush1.msra.mxu0 %v4058
      %4096 = vmatprep.subr.mxu0 0.0
      %4097 = vmatpush1.msra.mxu0 %v4059
      %4098 = vmatprep.subr.mxu0 0.0
      %4099 = vmatpush1.msra.mxu0 %v4060
      %4100 = vmatprep.subr.mxu0 0.0
      %4101 = vmatpush1.msra.mxu0 %v4061
      %4102 = vmatprep.subr.mxu0 0.0
      %4103 = vmatpush1.msra.mxu0 %v4062
      %4104 = vmatprep.subr.mxu0 0.0
      %4105 = vmatpush1.msra.mxu0 %v4063
      %4106 = vmatprep.subr.mxu0 0.0
      %4107 = vmatpush1.msra.mxu0 %v4064
      %4108 = vmatprep.subr.mxu0 0.0
      %4109 = vmatpush1.msra.mxu0 %v4065
      %4110 = vmatprep.subr.mxu0 0.0
      %4111 = vmatpush1.msra.mxu0 %v4066
      %4112 = vmatprep.subr.mxu0 0.0
      %4113 = vmatpush1.msra.mxu0 %v4067
      %4114 = vmatprep.subr.mxu0 0.0
      %4115 = vmatpush1.msra.mxu0 %v4068
      %4116 = vmatprep.subr.mxu0 0.0
      %4117 = vmatpush1.msra.mxu0 %v4069
      %4118 = vmatprep.subr.mxu0 0.0
      %4119 = vmatpush1.msra.mxu0 0.0
      %4120 = vmatprep.subr.mxu0 0.0
      %4121 = vmatpush1.msra.mxu0 0.0
      %4122 = vmatprep.subr.mxu0 0.0
      %4123 = vmatpush1.msra.mxu0 0.0
      %4124 = vmatprep.subr.mxu0 0.0
      %4125 = vmatpush1.msra.mxu0 0.0
      %4126 = vmatprep.subr.mxu0 0.0
      %4127 = vmatpush1.msra.mxu0 0.0
      %4128 = vmatprep.subr.mxu0 0.0
      %4129 = vmatpush1.msra.mxu0 0.0
      %4130 = vmatprep.subr.mxu0 0.0
      %4131 = vmatpush1.msra.mxu0 0.0
      %4132 = vmatprep.subr.mxu0 0.0
      %4133 = vmatpush1.msra.mxu0 0.0
      %4134 = vmatprep.mubr.f32.mxu0 %v3084
      %4135 = vmatmul.mubr.f32.gmra.mrb[0].mxu0 %v2950
      %v4136 = vpop.f32.mrb[0].mxu0
      %v4137 = vadd.f32 0.0, %v4136
      %v4138 = vpop.f32.mrb[0].mxu0
      %4139 = vmatprep.mubr.f32.mxu0 %v3087
      %4140 = vmatmul.mubr.f32.gmra.mrb[0].mxu0 %v2951
      %v4141 = vpop.f32.mrb[0].mxu0
      %v4142 = vadd.f32 0.0, %v4141
      %v4143 = vpop.f32.mrb[0].mxu0
      %4144 = vmatprep.mubr.f32.mxu0 %v3090
      %4145 = vmatmul.mubr.f32.gmra.mrb[0].mxu0 %v2952
      %v4146 = vpop.f32.mrb[0].mxu0
      %v4147 = vadd.f32 0.0, %v4146
      %v4148 = vpop.f32.mrb[0].mxu0
      %4149 = vmatprep.mubr.f32.mxu0 %v3093
      %4150 = vmatmul.mubr.f32.gmra.mrb[0].mxu0 %v2953
      %v4151 = vpop.f32.mrb[0].mxu0
      %v4152 = vadd.f32 0.0, %v4151
      %v4153 = vpop.f32.mrb[0].mxu0
      %4154 = vmatprep.mubr.f32.mxu0 %v3096
      %4155 = vmatmul.mubr.f32.gmra.mrb[0].mxu0 %v2954
      %v4156 = vpop.f32.mrb[0].mxu0
      %v4157 = vadd.f32 0.0, %v4156
      %v4158 = vpop.f32.mrb[0].mxu0
      %4159 = vmatprep.mubr.f32.mxu0 %v3099
      %4160 = vmatmul.mubr.f32.gmra.mrb[0].mxu0 %v2955
      %v4161 = vpop.f32.mrb[0].mxu0
      %v4162 = vadd.f32 0.0, %v4161
      %v4163 = vpop.f32.mrb[0].mxu0
      %4164 = vmatprep.mubr.f32.mxu0 %v3102
      %4165 = vmatmul.mubr.f32.gmra.mrb[0].mxu0 %v2956
      %v4166 = vpop.f32.mrb[0].mxu0
      %v4167 = vadd.f32 0.0, %v4166
      %v4168 = vpop.f32.mrb[0].mxu0
      %4169 = vmatprep.mubr.f32.mxu0 %v3105
      %4170 = vmatmul.mubr.f32.gmra.mrb[0].mxu0 %v2957
      %v4171 = vpop.f32.mrb[0].mxu0
      %v4172 = vadd.f32 0.0, %v4171
      %v4173 = vpop.f32.mrb[0].mxu0
      %4174 = vmatprep.mubr.f32.mxu0 %v3108
      %4175 = vmatmul.mubr.f32.gmra.mrb[0].mxu0 %v2958
      %v4176 = vpop.f32.mrb[0].mxu0
      %v4177 = vadd.f32 0.0, %v4176
      %v4178 = vpop.f32.mrb[0].mxu0
      %4179 = vmatprep.mubr.f32.mxu0 %v3111
      %4180 = vmatmul.mubr.f32.gmra.mrb[0].mxu0 %v2959
      %v4181 = vpop.f32.mrb[0].mxu0
      %v4182 = vadd.f32 0.0, %v4181
      %v4183 = vpop.f32.mrb[0].mxu0
      %4184 = vmatprep.mubr.f32.mxu0 %v3114
      %4185 = vmatmul.mubr.f32.gmra.mrb[0].mxu0 %v2960
      %v4186 = vpop.f32.mrb[0].mxu0
      %v4187 = vadd.f32 0.0, %v4186
      %v4188 = vpop.f32.mrb[0].mxu0
      %4189 = vmatprep.mubr.f32.mxu0 %v3117
      %4190 = vmatmul.mubr.f32.gmra.mrb[0].mxu0 %v2961
      %v4191 = vpop.f32.mrb[0].mxu0
      %v4192 = vadd.f32 0.0, %v4191
      %v4193 = vpop.f32.mrb[0].mxu0
      %4194 = vmatprep.mubr.f32.mxu0 %v3120
      %4195 = vmatmul.mubr.f32.gmra.mrb[0].mxu0 %v2962
      %v4196 = vpop.f32.mrb[0].mxu0
      %v4197 = vadd.f32 0.0, %v4196
      %v4198 = vpop.f32.mrb[0].mxu0
      %4199 = vmatprep.mubr.f32.mxu0 %v3123
      %4200 = vmatmul.mubr.f32.gmra.mrb[0].mxu0 %v2963
      %v4201 = vpop.f32.mrb[0].mxu0
      %v4202 = vadd.f32 0.0, %v4201
      %v4203 = vpop.f32.mrb[0].mxu0
      %4204 = vmatprep.mubr.f32.mxu0 %v3126
      %4205 = vmatmul.mubr.f32.gmra.mrb[0].mxu0 %v2964
      %v4206 = vpop.f32.mrb[0].mxu0
      %v4207 = vadd.f32 0.0, %v4206
      %v4208 = vpop.f32.mrb[0].mxu0
      %4209 = vmatprep.mubr.f32.mxu0 %v3129
      %4210 = vmatmul.mubr.f32.gmra.mrb[0].mxu0 %v2965
      %v4211 = vpop.f32.mrb[0].mxu0
      %v4212 = vadd.f32 0.0, %v4211
      %v4213 = vpop.f32.mrb[0].mxu0
      %4214 = vmatprep.mubr.f32.mxu0 %v3132
      %4215 = vmatmul.mubr.f32.gmra.mrb[0].mxu0 %v2966
      %v4216 = vpop.f32.mrb[0].mxu0
      %v4217 = vadd.f32 0.0, %v4216
      %v4218 = vpop.f32.mrb[0].mxu0
      %4219 = vmatprep.mubr.f32.mxu0 %v3135
      %4220 = vmatmul.mubr.f32.gmra.mrb[0].mxu0 %v2967
      %v4221 = vpop.f32.mrb[0].mxu0
      %v4222 = vadd.f32 0.0, %v4221
      %v4223 = vpop.f32.mrb[0].mxu0
      %4224 = vmatprep.mubr.f32.mxu0 %v3138
      %4225 = vmatmul.mubr.f32.gmra.mrb[0].mxu0 %v2968
      %v4226 = vpop.f32.mrb[0].mxu0
      %v4227 = vadd.f32 0.0, %v4226
      %v4228 = vpop.f32.mrb[0].mxu0
      %4229 = vmatprep.mubr.f32.mxu0 %v3141
      %4230 = vmatmul.mubr.f32.gmra.mrb[0].mxu0 %v2969
      %v4231 = vpop.f32.mrb[0].mxu0
      %v4232 = vadd.f32 0.0, %v4231
      %v4233 = vpop.f32.mrb[0].mxu0
      %4234 = vmatprep.mubr.f32.mxu0 %v3144
      %4235 = vmatmul.mubr.f32.gmra.mrb[0].mxu0 %v2970
      %v4236 = vpop.f32.mrb[0].mxu0
      %v4237 = vadd.f32 0.0, %v4236
      %v4238 = vpop.f32.mrb[0].mxu0
      %4239 = vmatprep.mubr.f32.mxu0 %v3147
      %4240 = vmatmul.mubr.f32.gmra.mrb[0].mxu0 %v2971
      %v4241 = vpop.f32.mrb[0].mxu0
      %v4242 = vadd.f32 0.0, %v4241
      %v4243 = vpop.f32.mrb[0].mxu0
      %4244 = vmatprep.mubr.f32.mxu0 %v3150
      %4245 = vmatmul.mubr.f32.gmra.mrb[0].mxu0 %v2972
      %v4246 = vpop.f32.mrb[0].mxu0
      %v4247 = vadd.f32 0.0, %v4246
      %v4248 = vpop.f32.mrb[0].mxu0
      %4249 = vmatprep.mubr.f32.mxu0 %v3153
      %4250 = vmatmul.mubr.f32.gmra.mrb[0].mxu0 %v2973
      %v4251 = vpop.f32.mrb[0].mxu0
      %v4252 = vadd.f32 0.0, %v4251
      %v4253 = vpop.f32.mrb[0].mxu0
      %4254 = vmatprep.mubr.f32.mxu0 %v3156
      %4255 = vmatmul.mubr.f32.gmra.mrb[0].mxu0 %v2974
      %v4256 = vpop.f32.mrb[0].mxu0
      %v4257 = vadd.f32 0.0, %v4256
      %v4258 = vpop.f32.mrb[0].mxu0
      %4259 = vmatprep.mubr.f32.mxu0 %v3159
      %4260 = vmatmul.mubr.f32.gmra.mrb[0].mxu0 %v2975
      %v4261 = vpop.f32.mrb[0].mxu0
      %v4262 = vadd.f32 0.0, %v4261
      %v4263 = vpop.f32.mrb[0].mxu0
      %4264 = vmatprep.mubr.f32.mxu0 %v3162
      %4265 = vmatmul.mubr.f32.gmra.mrb[0].mxu0 %v2976
      %v4266 = vpop.f32.mrb[0].mxu0
      %v4267 = vadd.f32 0.0, %v4266
      %v4268 = vpop.f32.mrb[0].mxu0
      %4269 = vmatprep.mubr.f32.mxu0 %v3165
      %4270 = vmatmul.mubr.f32.gmra.mrb[0].mxu0 %v2977
      %v4271 = vpop.f32.mrb[0].mxu0
      %v4272 = vadd.f32 0.0, %v4271
      %v4273 = vpop.f32.mrb[0].mxu0
      %4274 = vmatprep.mubr.f32.mxu0 %v3168
      %4275 = vmatmul.mubr.f32.gmra.mrb[0].mxu0 %v3048
      %v4276 = vpop.f32.mrb[0].mxu0
      %v4277 = vadd.f32 0.0, %v4276
      %v4278 = vpop.f32.mrb[0].mxu0
      %4279 = vmatprep.mubr.f32.mxu0 %v3171
      %4280 = vmatmul.mubr.f32.gmra.mrb[0].mxu0 %v3049
      %v4281 = vpop.f32.mrb[0].mxu0
      %v4282 = vadd.f32 0.0, %v4281
      %v4283 = vpop.f32.mrb[0].mxu0
      %4284 = vmatprep.mubr.f32.mxu0 %v3655
      %4285 = vmatmul.mubr.f32.gmra.mrb[0].mxu0 %v2946
      %v4286 = vpop.f32.mrb[0].mxu0
      %v4287 = vadd.f32 0.0, %v4286
      %v4288 = vpop.f32.mrb[0].mxu0
      %4289 = vmatprep.mubr.f32.mxu0 %v3658
      %4290 = vmatmul.mubr.f32.gmra.mrb[0].mxu0 %v2947
      %v4291 = vpop.f32.mrb[0].mxu0
      %v4292 = vadd.f32 0.0, %v4291
      %v4293 = vpop.f32.mrb[0].mxu0
      %4294 = vmatprep.mubr.f32.mxu0 %v3180
      %4295 = vmatmul.mubr.f32.gmra.mrb[0].mxu0 %v2980
      %v4296 = vpop.f32.mrb[0].mxu0
      %v4297 = vadd.f32 0.0, %v4296
      %v4298 = vpop.f32.mrb[0].mxu0
      %4299 = vmatprep.mubr.f32.mxu0 %v3183
      %4300 = vmatmul.mubr.f32.gmra.mrb[0].mxu0 %v2981
      %v4301 = vpop.f32.mrb[0].mxu0
      %v4302 = vadd.f32 0.0, %v4301
      %v4303 = vpop.f32.mrb[0].mxu0
      %4304 = vmatprep.mubr.f32.mxu0 %v3186
      %4305 = vmatmul.mubr.f32.gmra.mrb[0].mxu0 %v2982
      %v4306 = vpop.f32.mrb[0].mxu0
      %v4307 = vadd.f32 0.0, %v4306
      %v4308 = vpop.f32.mrb[0].mxu0
      %4309 = vmatprep.mubr.f32.mxu0 %v3189
      %4310 = vmatmul.mubr.f32.gmra.mrb[0].mxu0 %v2983
      %v4311 = vpop.f32.mrb[0].mxu0
      %v4312 = vadd.f32 0.0, %v4311
      %v4313 = vpop.f32.mrb[0].mxu0
      %4314 = vmatprep.mubr.f32.mxu0 %v3192
      %4315 = vmatmul.mubr.f32.gmra.mrb[0].mxu0 %v2984
      %v4316 = vpop.f32.mrb[0].mxu0
      %v4317 = vadd.f32 0.0, %v4316
      %v4318 = vpop.f32.mrb[0].mxu0
      %4319 = vmatprep.mubr.f32.mxu0 %v3195
      %4320 = vmatmul.mubr.f32.gmra.mrb[0].mxu0 %v2985
      %v4321 = vpop.f32.mrb[0].mxu0
      %v4322 = vadd.f32 0.0, %v4321
      %v4323 = vpop.f32.mrb[0].mxu0
      %4324 = vmatprep.mubr.f32.mxu0 %v3198
      %4325 = vmatmul.mubr.f32.gmra.mrb[0].mxu0 %v2986
      %v4326 = vpop.f32.mrb[0].mxu0
      %v4327 = vadd.f32 0.0, %v4326
      %v4328 = vpop.f32.mrb[0].mxu0
      %4329 = vmatprep.mubr.f32.mxu0 %v3201
      %4330 = vmatmul.mubr.f32.gmra.mrb[0].mxu0 %v2987
      %v4331 = vpop.f32.mrb[0].mxu0
      %v4332 = vadd.f32 0.0, %v4331
      %v4333 = vpop.f32.mrb[0].mxu0
      %4334 = vmatprep.mubr.f32.mxu0 %v3204
      %4335 = vmatmul.mubr.f32.gmra.mrb[0].mxu0 %v2988
      %v4336 = vpop.f32.mrb[0].mxu0
      %v4337 = vadd.f32 0.0, %v4336
      %v4338 = vpop.f32.mrb[0].mxu0
      %4339 = vmatprep.mubr.f32.mxu0 %v3207
      %4340 = vmatmul.mubr.f32.gmra.mrb[0].mxu0 %v2989
      %v4341 = vpop.f32.mrb[0].mxu0
      %v4342 = vadd.f32 0.0, %v4341
      %v4343 = vpop.f32.mrb[0].mxu0
      %4344 = vmatprep.mubr.f32.mxu0 %v3210
      %4345 = vmatmul.mubr.f32.gmra.mrb[0].mxu0 %v2990
      %v4346 = vpop.f32.mrb[0].mxu0
      %v4347 = vadd.f32 0.0, %v4346
      %v4348 = vpop.f32.mrb[0].mxu0
      %4349 = vmatprep.mubr.f32.mxu0 %v3213
      %4350 = vmatmul.mubr.f32.gmra.mrb[0].mxu0 %v2991
      %v4351 = vpop.f32.mrb[0].mxu0
      %v4352 = vadd.f32 0.0, %v4351
      %v4353 = vpop.f32.mrb[0].mxu0
      %4354 = vmatprep.mubr.f32.mxu0 %v3216
      %4355 = vmatmul.mubr.f32.gmra.mrb[0].mxu0 %v2992
      %v4356 = vpop.f32.mrb[0].mxu0
      %v4357 = vadd.f32 0.0, %v4356
      %v4358 = vpop.f32.mrb[0].mxu0
      %4359 = vmatprep.mubr.f32.mxu0 %v3219
      %4360 = vmatmul.mubr.f32.gmra.mrb[0].mxu0 %v2993
      %v4361 = vpop.f32.mrb[0].mxu0
      %v4362 = vadd.f32 0.0, %v4361
      %v4363 = vpop.f32.mrb[0].mxu0
      %4364 = vmatprep.mubr.f32.mxu0 %v3222
      %4365 = vmatmul.mubr.f32.gmra.mrb[0].mxu0 %v2994
      %v4366 = vpop.f32.mrb[0].mxu0
      %v4367 = vadd.f32 0.0, %v4366
      %v4368 = vpop.f32.mrb[0].mxu0
      %4369 = vmatprep.mubr.f32.mxu0 %v3225
      %4370 = vmatmul.mubr.f32.gmra.mrb[0].mxu0 %v2995
      %v4371 = vpop.f32.mrb[0].mxu0
      %v4372 = vadd.f32 0.0, %v4371
      %v4373 = vpop.f32.mrb[0].mxu0
      %4374 = vmatprep.mubr.f32.mxu0 %v3228
      %4375 = vmatmul.mubr.f32.gmra.mrb[0].mxu0 %v2996
      %v4376 = vpop.f32.mrb[0].mxu0
      %v4377 = vadd.f32 0.0, %v4376
      %v4378 = vpop.f32.mrb[0].mxu0
      %4379 = vmatprep.mubr.f32.mxu0 %v3231
      %4380 = vmatmul.mubr.f32.gmra.mrb[0].mxu0 %v2997
      %v4381 = vpop.f32.mrb[0].mxu0
      %v4382 = vadd.f32 0.0, %v4381
      %v4383 = vpop.f32.mrb[0].mxu0
      %4384 = vmatprep.mubr.f32.mxu0 %v3234
      %4385 = vmatmul.mubr.f32.gmra.mrb[0].mxu0 %v2998
      %v4386 = vpop.f32.mrb[0].mxu0
      %v4387 = vadd.f32 0.0, %v4386
      %v4388 = vpop.f32.mrb[0].mxu0
      %4389 = vmatprep.mubr.f32.mxu0 %v3237
      %4390 = vmatmul.mubr.f32.gmra.mrb[0].mxu0 %v2999
      %v4391 = vpop.f32.mrb[0].mxu0
      %v4392 = vadd.f32 0.0, %v4391
      %v4393 = vpop.f32.mrb[0].mxu0
      %4394 = vmatprep.mubr.f32.mxu0 %v3240
      %4395 = vmatmul.mubr.f32.gmra.mrb[0].mxu0 %v3000
      %v4396 = vpop.f32.mrb[0].mxu0
      %v4397 = vadd.f32 0.0, %v4396
      %v4398 = vpop.f32.mrb[0].mxu0
      %4399 = vmatprep.mubr.f32.mxu0 %v3243
      %4400 = vmatmul.mubr.f32.gmra.mrb[0].mxu0 %v3001
      %v4401 = vpop.f32.mrb[0].mxu0
      %v4402 = vadd.f32 0.0, %v4401
      %v4403 = vpop.f32.mrb[0].mxu0
      %4404 = vmatprep.mubr.f32.mxu0 %v3246
      %4405 = vmatmul.mubr.f32.gmra.mrb[0].mxu0 %v3002
      %v4406 = vpop.f32.mrb[0].mxu0
      %v4407 = vadd.f32 0.0, %v4406
      %v4408 = vpop.f32.mrb[0].mxu0
      %4409 = vmatprep.mubr.f32.mxu0 %v3249
      %4410 = vmatmul.mubr.f32.gmra.mrb[0].mxu0 %v3003
      %v4411 = vpop.f32.mrb[0].mxu0
      %v4412 = vadd.f32 0.0, %v4411
      %v4413 = vpop.f32.mrb[0].mxu0
      %4414 = vmatprep.mubr.f32.mxu0 %v3252
      %4415 = vmatmul.mubr.f32.gmra.mrb[0].mxu0 %v3004
      %v4416 = vpop.f32.mrb[0].mxu0
      %v4417 = vadd.f32 0.0, %v4416
      %v4418 = vpop.f32.mrb[0].mxu0
      %4419 = vmatprep.mubr.f32.mxu0 %v3255
      %4420 = vmatmul.mubr.f32.gmra.mrb[0].mxu0 %v3005
      %v4421 = vpop.f32.mrb[0].mxu0
      %v4422 = vadd.f32 0.0, %v4421
      %v4423 = vpop.f32.mrb[0].mxu0
      %4424 = vmatprep.mubr.f32.mxu0 %v3258
      %4425 = vmatmul.mubr.f32.gmra.mrb[0].mxu0 %v3006
      %v4426 = vpop.f32.mrb[0].mxu0
      %v4427 = vadd.f32 0.0, %v4426
      %v4428 = vpop.f32.mrb[0].mxu0
      %4429 = vmatprep.mubr.f32.mxu0 %v3261
      %4430 = vmatmul.mubr.f32.gmra.mrb[0].mxu0 %v3007
      %v4431 = vpop.f32.mrb[0].mxu0
      %v4432 = vadd.f32 0.0, %v4431
      %v4433 = vpop.f32.mrb[0].mxu0
      %4434 = vmatprep.mubr.f32.mxu0 %v3264
      %4435 = vmatmul.mubr.f32.gmra.mrb[0].mxu0 %v3050
      %v4436 = vpop.f32.mrb[0].mxu0
      %v4437 = vadd.f32 0.0, %v4436
      %v4438 = vpop.f32.mrb[0].mxu0
      %4439 = vmatprep.mubr.f32.mxu0 %v3267
      %4440 = vmatmul.mubr.f32.gmra.mrb[0].mxu0 %v3051
      %v4441 = vpop.f32.mrb[0].mxu0
      %v4442 = vadd.f32 0.0, %v4441
      %v4443 = vpop.f32.mrb[0].mxu0
      %4444 = vmatprep.mubr.f32.mxu0 %v3655
      %4445 = vmatmul.mubr.f32.gmra.mrb[0].mxu0 %v2946
      %v4446 = vpop.f32.mrb[0].mxu0
      %v4447 = vadd.f32 0.0, %v4446
      %v4448 = vpop.f32.mrb[0].mxu0
      %4449 = vmatprep.mubr.f32.mxu0 %v3658
      %4450 = vmatmul.mubr.f32.gmra.mrb[0].mxu0 %v2947
      %v4451 = vpop.f32.mrb[0].mxu0
      %v4452 = vadd.f32 0.0, %v4451
      %v4453 = vpop.f32.mrb[0].mxu0
      %4454 = vdwg.mxu0
      %v4455 = vadd.f32 %v3727, %v4137
      %v4456 = vadd.f32 %v3732, %v4142
      %v4457 = vadd.f32 %v3737, %v4147
      %v4458 = vadd.f32 %v3742, %v4152
      %v4459 = vadd.f32 %v3747, %v4157
      %v4460 = vadd.f32 %v3752, %v4162
      %v4461 = vadd.f32 %v3757, %v4167
      %v4462 = vadd.f32 %v3762, %v4172
      %v4463 = vadd.f32 %v3767, %v4177
      %v4464 = vadd.f32 %v3772, %v4182
      %v4465 = vadd.f32 %v3777, %v4187
      %v4466 = vadd.f32 %v3782, %v4192
      %v4467 = vadd.f32 %v3787, %v4197
      %v4468 = vadd.f32 %v3792, %v4202
      %v4469 = vadd.f32 %v3797, %v4207
      %v4470 = vadd.f32 %v3802, %v4212
      %v4471 = vadd.f32 %v3807, %v4217
      %v4472 = vadd.f32 %v3812, %v4222
      %v4473 = vadd.f32 %v3817, %v4227
      %v4474 = vadd.f32 %v3822, %v4232
      %v4475 = vadd.f32 %v3827, %v4237
      %v4476 = vadd.f32 %v3832, %v4242
      %v4477 = vadd.f32 %v3837, %v4247
      %v4478 = vadd.f32 %v3842, %v4252
      %v4479 = vadd.f32 %v3847, %v4257
      %v4480 = vadd.f32 %v3852, %v4262
      %v4481 = vadd.f32 %v3857, %v4267
      %v4482 = vadd.f32 %v3862, %v4272
      %v4483 = vadd.f32 %v3867, %v4277
      %v4484 = vadd.f32 %v3872, %v4282
      %v4485 = vadd.f32 %v3877, %v4287
      %v4486 = vadd.f32 %v3882, %v4292
      %v4487 = vadd.f32 %v3887, %v4297
      %v4488 = vadd.f32 %v3892, %v4302
      %v4489 = vadd.f32 %v3897, %v4307
      %v4490 = vadd.f32 %v3902, %v4312
      %v4491 = vadd.f32 %v3907, %v4317
      %v4492 = vadd.f32 %v3912, %v4322
      %v4493 = vadd.f32 %v3917, %v4327
      %v4494 = vadd.f32 %v3922, %v4332
      %v4495 = vadd.f32 %v3927, %v4337
      %v4496 = vadd.f32 %v3932, %v4342
      %v4497 = vadd.f32 %v3937, %v4347
      %v4498 = vadd.f32 %v3942, %v4352
      %v4499 = vadd.f32 %v3947, %v4357
      %v4500 = vadd.f32 %v3952, %v4362
      %v4501 = vadd.f32 %v3957, %v4367
      %v4502 = vadd.f32 %v3962, %v4372
      %v4503 = vadd.f32 %v3967, %v4377
      %v4504 = vadd.f32 %v3972, %v4382
      %v4505 = vadd.f32 %v3977, %v4387
      %v4506 = vadd.f32 %v3982, %v4392
      %v4507 = vadd.f32 %v3987, %v4397
      %v4508 = vadd.f32 %v3992, %v4402
      %v4509 = vadd.f32 %v3997, %v4407
      %v4510 = vadd.f32 %v4002, %v4412
      %v4511 = vadd.f32 %v4007, %v4417
      %v4512 = vadd.f32 %v4012, %v4422
      %v4513 = vadd.f32 %v4017, %v4427
      %v4514 = vadd.f32 %v4022, %v4432
      %v4515 = vadd.f32 %v4027, %v4437
      %v4516 = vadd.f32 %v4032, %v4442
      %v4517 = vadd.f32 %v4037, %v4447
      %v4518 = vadd.f32 %v4042, %v4452
      %v4519 = vld [vmem:[%s6] sm:$0x1]
      %v4521 = vlaneseq
      %v4522 = vshrl.u32 %v4521, 7
      %v4523 = vsub.s32 0, %v4522
      %v4524 = vrot.slane %v4519, %v4523
      %v4526 = vmul.f32 %v4455, %v4524
      %v4527 = vmul.f32 %v4456, %v4524
      %v4528 = vmul.f32 %v4457, %v4524
      %v4529 = vmul.f32 %v4458, %v4524
      %v4530 = vmul.f32 %v4459, %v4524
      %v4531 = vmul.f32 %v4460, %v4524
      %v4532 = vmul.f32 %v4461, %v4524
      %v4533 = vmul.f32 %v4462, %v4524
      %v4534 = vmul.f32 %v4463, %v4524
      %v4535 = vmul.f32 %v4464, %v4524
      %v4536 = vmul.f32 %v4465, %v4524
      %v4537 = vmul.f32 %v4466, %v4524
      %v4538 = vmul.f32 %v4467, %v4524
      %v4539 = vmul.f32 %v4468, %v4524
      %v4540 = vmul.f32 %v4469, %v4524
      %v4541 = vmul.f32 %v4470, %v4524
      %v4542 = vmul.f32 %v4471, %v4524
      %v4543 = vmul.f32 %v4472, %v4524
      %v4544 = vmul.f32 %v4473, %v4524
      %v4545 = vmul.f32 %v4474, %v4524
      %v4546 = vmul.f32 %v4475, %v4524
      %v4547 = vmul.f32 %v4476, %v4524
      %v4548 = vmul.f32 %v4477, %v4524
      %v4549 = vmul.f32 %v4478, %v4524
      %v4550 = vmul.f32 %v4479, %v4524
      %v4551 = vmul.f32 %v4480, %v4524
      %v4552 = vmul.f32 %v4481, %v4524
      %v4553 = vmul.f32 %v4482, %v4524
      %v4554 = vmul.f32 %v4483, %v4524
      %v4555 = vmul.f32 %v4484, %v4524
      %v4556 = vmul.f32 %v4485, %v4524
      %v4557 = vmul.f32 %v4486, %v4524
      %v4558 = vmul.f32 %v4487, %v4524
      %v4559 = vmul.f32 %v4488, %v4524
      %v4560 = vmul.f32 %v4489, %v4524
      %v4561 = vmul.f32 %v4490, %v4524
      %v4562 = vmul.f32 %v4491, %v4524
      %v4563 = vmul.f32 %v4492, %v4524
      %v4564 = vmul.f32 %v4493, %v4524
      %v4565 = vmul.f32 %v4494, %v4524
      %v4566 = vmul.f32 %v4495, %v4524
      %v4567 = vmul.f32 %v4496, %v4524
      %v4568 = vmul.f32 %v4497, %v4524
      %v4569 = vmul.f32 %v4498, %v4524
      %v4570 = vmul.f32 %v4499, %v4524
      %v4571 = vmul.f32 %v4500, %v4524
      %v4572 = vmul.f32 %v4501, %v4524
      %v4573 = vmul.f32 %v4502, %v4524
      %v4574 = vmul.f32 %v4503, %v4524
      %v4575 = vmul.f32 %v4504, %v4524
      %v4576 = vmul.f32 %v4505, %v4524
      %v4577 = vmul.f32 %v4506, %v4524
      %v4578 = vmul.f32 %v4507, %v4524
      %v4579 = vmul.f32 %v4508, %v4524
      %v4580 = vmul.f32 %v4509, %v4524
      %v4581 = vmul.f32 %v4510, %v4524
      %v4582 = vmul.f32 %v4511, %v4524
      %v4583 = vmul.f32 %v4512, %v4524
      %v4584 = vmul.f32 %v4513, %v4524
      %v4585 = vmul.f32 %v4514, %v4524
      %v4586 = vmul.f32 %v4515, %v4524
      %v4587 = vmul.f32 %v4516, %v4524
      %v4588 = vmul.f32 %v4517, %v4524
      %v4589 = vmul.f32 %v4518, %v4524
      %v4590 = vld [vmem:[%s7] sm:$0x1]
      %v4592 = vlaneseq
      %v4593 = vshrl.u32 %v4592, 7
      %v4594 = vsub.s32 0, %v4593
      %v4595 = vrot.slane %v4590, %v4594
      %v4597 = vadd.f32 %v4526, %v4595
      %v4598 = vadd.f32 %v4527, %v4595
      %v4599 = vadd.f32 %v4528, %v4595
      %v4600 = vadd.f32 %v4529, %v4595
      %v4601 = vadd.f32 %v4530, %v4595
      %v4602 = vadd.f32 %v4531, %v4595
      %v4603 = vadd.f32 %v4532, %v4595
      %v4604 = vadd.f32 %v4533, %v4595
      %v4605 = vadd.f32 %v4534, %v4595
      %v4606 = vadd.f32 %v4535, %v4595
      %v4607 = vadd.f32 %v4536, %v4595
      %v4608 = vadd.f32 %v4537, %v4595
      %v4609 = vadd.f32 %v4538, %v4595
      %v4610 = vadd.f32 %v4539, %v4595
      %v4611 = vadd.f32 %v4540, %v4595
      %v4612 = vadd.f32 %v4541, %v4595
      %v4613 = vadd.f32 %v4542, %v4595
      %v4614 = vadd.f32 %v4543, %v4595
      %v4615 = vadd.f32 %v4544, %v4595
      %v4616 = vadd.f32 %v4545, %v4595
      %v4617 = vadd.f32 %v4546, %v4595
      %v4618 = vadd.f32 %v4547, %v4595
      %v4619 = vadd.f32 %v4548, %v4595
      %v4620 = vadd.f32 %v4549, %v4595
      %v4621 = vadd.f32 %v4550, %v4595
      %v4622 = vadd.f32 %v4551, %v4595
      %v4623 = vadd.f32 %v4552, %v4595
      %v4624 = vadd.f32 %v4553, %v4595
      %v4625 = vadd.f32 %v4554, %v4595
      %v4626 = vadd.f32 %v4555, %v4595
      %v4627 = vadd.f32 %v4556, %v4595
      %v4628 = vadd.f32 %v4557, %v4595
      %v4629 = vadd.f32 %v4558, %v4595
      %v4630 = vadd.f32 %v4559, %v4595
      %v4631 = vadd.f32 %v4560, %v4595
      %v4632 = vadd.f32 %v4561, %v4595
      %v4633 = vadd.f32 %v4562, %v4595
      %v4634 = vadd.f32 %v4563, %v4595
      %v4635 = vadd.f32 %v4564, %v4595
      %v4636 = vadd.f32 %v4565, %v4595
      %v4637 = vadd.f32 %v4566, %v4595
      %v4638 = vadd.f32 %v4567, %v4595
      %v4639 = vadd.f32 %v4568, %v4595
      %v4640 = vadd.f32 %v4569, %v4595
      %v4641 = vadd.f32 %v4570, %v4595
      %v4642 = vadd.f32 %v4571, %v4595
      %v4643 = vadd.f32 %v4572, %v4595
      %v4644 = vadd.f32 %v4573, %v4595
      %v4645 = vadd.f32 %v4574, %v4595
      %v4646 = vadd.f32 %v4575, %v4595
      %v4647 = vadd.f32 %v4576, %v4595
      %v4648 = vadd.f32 %v4577, %v4595
      %v4649 = vadd.f32 %v4578, %v4595
      %v4650 = vadd.f32 %v4579, %v4595
      %v4651 = vadd.f32 %v4580, %v4595
      %v4652 = vadd.f32 %v4581, %v4595
      %v4653 = vadd.f32 %v4582, %v4595
      %v4654 = vadd.f32 %v4583, %v4595
      %v4655 = vadd.f32 %v4584, %v4595
      %v4656 = vadd.f32 %v4585, %v4595
      %v4657 = vadd.f32 %v4586, %v4595
      %v4658 = vadd.f32 %v4587, %v4595
      %v4659 = vadd.f32 %v4588, %v4595
      %v4660 = vadd.f32 %v4589, %v4595
      %v4661 = vld [vmem:[%s330] sm:$0xff]
      %v4662 = vld [vmem:[%s330 + $0x8] sm:$0xff]
      %v4663 = vld [vmem:[%s330 + $0x10] sm:$0xff]
      %v4664 = vld [vmem:[%s330 + $0x18] sm:$0xff]
      %v4665 = vld [vmem:[%s330 + $0x20] sm:$0xff]
      %v4666 = vld [vmem:[%s330 + $0x28] sm:$0xff]
      %v4667 = vld [vmem:[%s330 + $0x30] sm:$0xff]
      %v4668 = vld [vmem:[%s330 + $0x38] sm:$0xff]
      %v4669 = vld [vmem:[%s330 + $0x40] sm:$0xff]
      %v4670 = vld [vmem:[%s330 + $0x48] sm:$0xff]
      %v4671 = vld [vmem:[%s330 + $0x50] sm:$0xff]
      %v4672 = vld [vmem:[%s330 + $0x58] sm:$0xff]
      %v4673 = vld [vmem:[%s330 + $0x60] sm:$0xff]
      %v4674 = vld [vmem:[%s330 + $0x68] sm:$0xff]
      %v4675 = vld [vmem:[%s330 + $0x70] sm:$0xff]
      %v4676 = vld [vmem:[%s330 + $0x78] sm:$0xff]
      %v4677 = vld [vmem:[%s330 + $0x80] sm:$0xff]
      %v4678 = vld [vmem:[%s330 + $0x88] sm:$0xff]
      %v4679 = vld [vmem:[%s330 + $0x90] sm:$0xff]
      %v4680 = vld [vmem:[%s330 + $0x98] sm:$0xff]
      %v4681 = vld [vmem:[%s330 + $0xa0] sm:$0xff]
      %v4682 = vld [vmem:[%s330 + $0xa8] sm:$0xff]
      %v4683 = vld [vmem:[%s330 + $0xb0] sm:$0xff]
      %v4684 = vld [vmem:[%s330 + $0xb8] sm:$0xff]
      %v4685 = vld [vmem:[%s330 + $0xc0] sm:$0xff]
      %v4686 = vld [vmem:[%s330 + $0xc8] sm:$0xff]
      %v4687 = vld [vmem:[%s330 + $0xd0] sm:$0xff]
      %v4688 = vld [vmem:[%s330 + $0xd8] sm:$0xff]
      %v4689 = vld [vmem:[%s330 + $0xe0] sm:$0xff]
      %v4690 = vld [vmem:[%s330 + $0xe8] sm:$0xff]
      %v4691 = vld [vmem:[%s330 + $0xf0] sm:$0xff]
      %v4692 = vld [vmem:[%s330 + $0xf8] sm:$0xff]
      %v4693 = vld [vmem:[%s330 + $0x100] sm:$0xff]
      %v4694 = vld [vmem:[%s330 + $0x108] sm:$0xff]
      %v4695 = vld [vmem:[%s330 + $0x110] sm:$0xff]
      %v4696 = vld [vmem:[%s330 + $0x118] sm:$0xff]
      %v4697 = vld [vmem:[%s330 + $0x120] sm:$0xff]
      %v4698 = vld [vmem:[%s330 + $0x128] sm:$0xff]
      %v4699 = vld [vmem:[%s330 + $0x130] sm:$0xff]
      %v4700 = vld [vmem:[%s330 + $0x138] sm:$0xff]
      %v4701 = vld [vmem:[%s330 + $0x140] sm:$0xff]
      %v4702 = vld [vmem:[%s330 + $0x148] sm:$0xff]
      %v4703 = vld [vmem:[%s330 + $0x150] sm:$0xff]
      %v4704 = vld [vmem:[%s330 + $0x158] sm:$0xff]
      %v4705 = vld [vmem:[%s330 + $0x160] sm:$0xff]
      %v4706 = vld [vmem:[%s330 + $0x168] sm:$0xff]
      %v4707 = vld [vmem:[%s330 + $0x170] sm:$0xff]
      %v4708 = vld [vmem:[%s330 + $0x178] sm:$0xff]
      %v4709 = vld [vmem:[%s330 + $0x180] sm:$0xff]
      %v4710 = vld [vmem:[%s330 + $0x188] sm:$0xff]
      %v4711 = vld [vmem:[%s330 + $0x190] sm:$0xff]
      %v4712 = vld [vmem:[%s330 + $0x198] sm:$0xff]
      %v4713 = vld [vmem:[%s330 + $0x1a0] sm:$0xff]
      %v4714 = vld [vmem:[%s330 + $0x1a8] sm:$0xff]
      %v4715 = vld [vmem:[%s330 + $0x1b0] sm:$0xff]
      %v4716 = vld [vmem:[%s330 + $0x1b8] sm:$0xff]
      %v4717 = vld [vmem:[%s330 + $0x1c0] sm:$0xff]
      %v4718 = vld [vmem:[%s330 + $0x1c8] sm:$0xff]
      %v4719 = vld [vmem:[%s330 + $0x1d0] sm:$0xff]
      %v4720 = vld [vmem:[%s330 + $0x1d8] sm:$0xff]
      %v4721 = vld [vmem:[%s330 + $0x1e0] sm:$0xff]
      %v4722 = vld [vmem:[%s330 + $0x1e8] sm:$0xff]
      %v4723 = vld [vmem:[%s330 + $0x1f0] sm:$0xff]
      %v4724 = vld [vmem:[%s330 + $0x1f8] sm:$0xff]
      %v4725 = vadd.f32 %v4597, %v4661
      %v4726 = vadd.f32 %v4598, %v4662
      %v4727 = vadd.f32 %v4599, %v4663
      %v4728 = vadd.f32 %v4600, %v4664
      %v4729 = vadd.f32 %v4601, %v4665
      %v4730 = vadd.f32 %v4602, %v4666
      %v4731 = vadd.f32 %v4603, %v4667
      %v4732 = vadd.f32 %v4604, %v4668
      %v4733 = vadd.f32 %v4605, %v4669
      %v4734 = vadd.f32 %v4606, %v4670
      %v4735 = vadd.f32 %v4607, %v4671
      %v4736 = vadd.f32 %v4608, %v4672
      %v4737 = vadd.f32 %v4609, %v4673
      %v4738 = vadd.f32 %v4610, %v4674
      %v4739 = vadd.f32 %v4611, %v4675
      %v4740 = vadd.f32 %v4612, %v4676
      %v4741 = vadd.f32 %v4613, %v4677
      %v4742 = vadd.f32 %v4614, %v4678
      %v4743 = vadd.f32 %v4615, %v4679
      %v4744 = vadd.f32 %v4616, %v4680
      %v4745 = vadd.f32 %v4617, %v4681
      %v4746 = vadd.f32 %v4618, %v4682
      %v4747 = vadd.f32 %v4619, %v4683
      %v4748 = vadd.f32 %v4620, %v4684
      %v4749 = vadd.f32 %v4621, %v4685
      %v4750 = vadd.f32 %v4622, %v4686
      %v4751 = vadd.f32 %v4623, %v4687
      %v4752 = vadd.f32 %v4624, %v4688
      %v4753 = vadd.f32 %v4625, %v4689
      %v4754 = vadd.f32 %v4626, %v4690
      %v4755 = vadd.f32 %v4627, %v4691
      %v4756 = vadd.f32 %v4628, %v4692
      %v4757 = vadd.f32 %v4629, %v4693
      %v4758 = vadd.f32 %v4630, %v4694
      %v4759 = vadd.f32 %v4631, %v4695
      %v4760 = vadd.f32 %v4632, %v4696
      %v4761 = vadd.f32 %v4633, %v4697
      %v4762 = vadd.f32 %v4634, %v4698
      %v4763 = vadd.f32 %v4635, %v4699
      %v4764 = vadd.f32 %v4636, %v4700
      %v4765 = vadd.f32 %v4637, %v4701
      %v4766 = vadd.f32 %v4638, %v4702
      %v4767 = vadd.f32 %v4639, %v4703
      %v4768 = vadd.f32 %v4640, %v4704
      %v4769 = vadd.f32 %v4641, %v4705
      %v4770 = vadd.f32 %v4642, %v4706
      %v4771 = vadd.f32 %v4643, %v4707
      %v4772 = vadd.f32 %v4644, %v4708
      %v4773 = vadd.f32 %v4645, %v4709
      %v4774 = vadd.f32 %v4646, %v4710
      %v4775 = vadd.f32 %v4647, %v4711
      %v4776 = vadd.f32 %v4648, %v4712
      %v4777 = vadd.f32 %v4649, %v4713
      %v4778 = vadd.f32 %v4650, %v4714
      %v4779 = vadd.f32 %v4651, %v4715
      %v4780 = vadd.f32 %v4652, %v4716
      %v4781 = vadd.f32 %v4653, %v4717
      %v4782 = vadd.f32 %v4654, %v4718
      %v4783 = vadd.f32 %v4655, %v4719
      %v4784 = vadd.f32 %v4656, %v4720
      %v4785 = vadd.f32 %v4657, %v4721
      %v4786 = vadd.f32 %v4658, %v4722
      %v4787 = vadd.f32 %v4659, %v4723
      %v4788 = vadd.f32 %v4660, %v4724
      %v4789 = vmax.f32 %v4725, 0.0
      %v4790 = vmax.f32 %v4726, 0.0
      %v4791 = vmax.f32 %v4727, 0.0
      %v4792 = vmax.f32 %v4728, 0.0
      %v4793 = vmax.f32 %v4729, 0.0
      %v4794 = vmax.f32 %v4730, 0.0
      %v4795 = vmax.f32 %v4731, 0.0
      %v4796 = vmax.f32 %v4732, 0.0
      %v4797 = vmax.f32 %v4733, 0.0
      %v4798 = vmax.f32 %v4734, 0.0
      %v4799 = vmax.f32 %v4735, 0.0
      %v4800 = vmax.f32 %v4736, 0.0
      %v4801 = vmax.f32 %v4737, 0.0
      %v4802 = vmax.f32 %v4738, 0.0
      %v4803 = vmax.f32 %v4739, 0.0
      %v4804 = vmax.f32 %v4740, 0.0
      %v4805 = vmax.f32 %v4741, 0.0
      %v4806 = vmax.f32 %v4742, 0.0
      %v4807 = vmax.f32 %v4743, 0.0
      %v4808 = vmax.f32 %v4744, 0.0
      %v4809 = vmax.f32 %v4745, 0.0
      %v4810 = vmax.f32 %v4746, 0.0
      %v4811 = vmax.f32 %v4747, 0.0
      %v4812 = vmax.f32 %v4748, 0.0
      %v4813 = vmax.f32 %v4749, 0.0
      %v4814 = vmax.f32 %v4750, 0.0
      %v4815 = vmax.f32 %v4751, 0.0
      %v4816 = vmax.f32 %v4752, 0.0
      %v4817 = vmax.f32 %v4753, 0.0
      %v4818 = vmax.f32 %v4754, 0.0
      %v4819 = vmax.f32 %v4755, 0.0
      %v4820 = vmax.f32 %v4756, 0.0
      %v4821 = vmax.f32 %v4757, 0.0
      %v4822 = vmax.f32 %v4758, 0.0
      %v4823 = vmax.f32 %v4759, 0.0
      %v4824 = vmax.f32 %v4760, 0.0
      %v4825 = vmax.f32 %v4761, 0.0
      %v4826 = vmax.f32 %v4762, 0.0
      %v4827 = vmax.f32 %v4763, 0.0
      %v4828 = vmax.f32 %v4764, 0.0
      %v4829 = vmax.f32 %v4765, 0.0
      %v4830 = vmax.f32 %v4766, 0.0
      %v4831 = vmax.f32 %v4767, 0.0
      %v4832 = vmax.f32 %v4768, 0.0
      %v4833 = vmax.f32 %v4769, 0.0
      %v4834 = vmax.f32 %v4770, 0.0
      %v4835 = vmax.f32 %v4771, 0.0
      %v4836 = vmax.f32 %v4772, 0.0
      %v4837 = vmax.f32 %v4773, 0.0
      %v4838 = vmax.f32 %v4774, 0.0
      %v4839 = vmax.f32 %v4775, 0.0
      %v4840 = vmax.f32 %v4776, 0.0
      %v4841 = vmax.f32 %v4777, 0.0
      %v4842 = vmax.f32 %v4778, 0.0
      %v4843 = vmax.f32 %v4779, 0.0
      %v4844 = vmax.f32 %v4780, 0.0
      %v4845 = vmax.f32 %v4781, 0.0
      %v4846 = vmax.f32 %v4782, 0.0
      %v4847 = vmax.f32 %v4783, 0.0
      %v4848 = vmax.f32 %v4784, 0.0
      %v4849 = vmax.f32 %v4785, 0.0
      %v4850 = vmax.f32 %v4786, 0.0
      %v4851 = vmax.f32 %v4787, 0.0
      %v4852 = vmax.f32 %v4788, 0.0
      %4853 = vst.msk [vmem:[%s337] sm:$0xff] %vm731, %v4789
      %4854 = vst.msk [vmem:[%s337 + $0x8] sm:$0xff] %vm731, %v4790
      %4855 = vst.msk [vmem:[%s337 + $0x10] sm:$0xff] %vm731, %v4791
      %4856 = vst.msk [vmem:[%s337 + $0x18] sm:$0xff] %vm731, %v4792
      %4857 = vst.msk [vmem:[%s337 + $0x20] sm:$0xff] %vm731, %v4793
      %4858 = vst.msk [vmem:[%s337 + $0x28] sm:$0xff] %vm731, %v4794
      %4859 = vst.msk [vmem:[%s337 + $0x30] sm:$0xff] %vm731, %v4795
      %4860 = vst.msk [vmem:[%s337 + $0x38] sm:$0xff] %vm731, %v4796
      %4861 = vst.msk [vmem:[%s337 + $0x40] sm:$0xff] %vm731, %v4797
      %4862 = vst.msk [vmem:[%s337 + $0x48] sm:$0xff] %vm731, %v4798
      %4863 = vst.msk [vmem:[%s337 + $0x50] sm:$0xff] %vm731, %v4799
      %4864 = vst.msk [vmem:[%s337 + $0x58] sm:$0xff] %vm731, %v4800
      %4865 = vst.msk [vmem:[%s337 + $0x60] sm:$0xff] %vm731, %v4801
      %4866 = vst.msk [vmem:[%s337 + $0x68] sm:$0xff] %vm731, %v4802
      %4867 = vst.msk [vmem:[%s337 + $0x70] sm:$0xff] %vm731, %v4803
      %4868 = vst.msk [vmem:[%s337 + $0x78] sm:$0xff] %vm731, %v4804
      %4869 = vst.msk [vmem:[%s337 + $0x80] sm:$0xff] %vm731, %v4805
      %4870 = vst.msk [vmem:[%s337 + $0x88] sm:$0xff] %vm731, %v4806
      %4871 = vst.msk [vmem:[%s337 + $0x90] sm:$0xff] %vm731, %v4807
      %4872 = vst.msk [vmem:[%s337 + $0x98] sm:$0xff] %vm731, %v4808
      %4873 = vst.msk [vmem:[%s337 + $0xa0] sm:$0xff] %vm731, %v4809
      %4874 = vst.msk [vmem:[%s337 + $0xa8] sm:$0xff] %vm731, %v4810
      %4875 = vst.msk [vmem:[%s337 + $0xb0] sm:$0xff] %vm731, %v4811
      %4876 = vst.msk [vmem:[%s337 + $0xb8] sm:$0xff] %vm731, %v4812
      %4877 = vst.msk [vmem:[%s337 + $0xc0] sm:$0xff] %vm731, %v4813
      %4878 = vst.msk [vmem:[%s337 + $0xc8] sm:$0xff] %vm731, %v4814
      %4879 = vst.msk [vmem:[%s337 + $0xd0] sm:$0xff] %vm731, %v4815
      %4880 = vst.msk [vmem:[%s337 + $0xd8] sm:$0xff] %vm731, %v4816
      %4881 = vst.msk [vmem:[%s337 + $0xe0] sm:$0xff] %vm731, %v4817
      %4882 = vst.msk [vmem:[%s337 + $0xe8] sm:$0xff] %vm731, %v4818
      %4883 = vst.msk [vmem:[%s337 + $0xf0] sm:$0xff] %vm731, %v4819
      %4884 = vst.msk [vmem:[%s337 + $0xf8] sm:$0xff] %vm731, %v4820
      %4885 = vst.msk [vmem:[%s337 + $0x100] sm:$0xff] %vm731, %v4821
      %4886 = vst.msk [vmem:[%s337 + $0x108] sm:$0xff] %vm731, %v4822
      %4887 = vst.msk [vmem:[%s337 + $0x110] sm:$0xff] %vm731, %v4823
      %4888 = vst.msk [vmem:[%s337 + $0x118] sm:$0xff] %vm731, %v4824
      %4889 = vst.msk [vmem:[%s337 + $0x120] sm:$0xff] %vm731, %v4825
      %4890 = vst.msk [vmem:[%s337 + $0x128] sm:$0xff] %vm731, %v4826
      %4891 = vst.msk [vmem:[%s337 + $0x130] sm:$0xff] %vm731, %v4827
      %4892 = vst.msk [vmem:[%s337 + $0x138] sm:$0xff] %vm731, %v4828
      %4893 = vst.msk [vmem:[%s337 + $0x140] sm:$0xff] %vm731, %v4829
      %4894 = vst.msk [vmem:[%s337 + $0x148] sm:$0xff] %vm731, %v4830
      %4895 = vst.msk [vmem:[%s337 + $0x150] sm:$0xff] %vm731, %v4831
      %4896 = vst.msk [vmem:[%s337 + $0x158] sm:$0xff] %vm731, %v4832
      %4897 = vst.msk [vmem:[%s337 + $0x160] sm:$0xff] %vm731, %v4833
      %4898 = vst.msk [vmem:[%s337 + $0x168] sm:$0xff] %vm731, %v4834
      %4899 = vst.msk [vmem:[%s337 + $0x170] sm:$0xff] %vm731, %v4835
      %4900 = vst.msk [vmem:[%s337 + $0x178] sm:$0xff] %vm731, %v4836
      %4901 = vst.msk [vmem:[%s337 + $0x180] sm:$0xff] %vm731, %v4837
      %4902 = vst.msk [vmem:[%s337 + $0x188] sm:$0xff] %vm731, %v4838
      %4903 = vst.msk [vmem:[%s337 + $0x190] sm:$0xff] %vm731, %v4839
      %4904 = vst.msk [vmem:[%s337 + $0x198] sm:$0xff] %vm731, %v4840
      %4905 = vst.msk [vmem:[%s337 + $0x1a0] sm:$0xff] %vm731, %v4841
      %4906 = vst.msk [vmem:[%s337 + $0x1a8] sm:$0xff] %vm731, %v4842
      %4907 = vst.msk [vmem:[%s337 + $0x1b0] sm:$0xff] %vm731, %v4843
      %4908 = vst.msk [vmem:[%s337 + $0x1b8] sm:$0xff] %vm731, %v4844
      %4909 = vst.msk [vmem:[%s337 + $0x1c0] sm:$0xff] %vm731, %v4845
      %4910 = vst.msk [vmem:[%s337 + $0x1c8] sm:$0xff] %vm731, %v4846
      %4911 = vst.msk [vmem:[%s337 + $0x1d0] sm:$0xff] %vm731, %v4847
      %4912 = vst.msk [vmem:[%s337 + $0x1d8] sm:$0xff] %vm731, %v4848
      %4913 = vst.msk [vmem:[%s337 + $0x1e0] sm:$0xff] %vm731, %v4849
      %4914 = vst.msk [vmem:[%s337 + $0x1e8] sm:$0xff] %vm731, %v4850
      %4915 = vst.msk [vmem:[%s337 + $0x1f0] sm:$0xff] %vm731, %v4851
      %4916 = vst.msk [vmem:[%s337 + $0x1f8] sm:$0xff] %vm731, %v4852
      %s4917 = smul.u32 2, %s19
      %p4918 = scmp.lt.s32.totalorder %s4917, 3
      %s4919 = scalar_select %p4918, %s4917, 3
      %s4920 = smul.addr %s4919, 32
      %s4921 = smul.addr %s4920, 8
      %s4922 = scalar_lea.vmem %s8, %s4921
      // Predicated region
      $region53: #{tpu_custom_call.1} parent=51 // pred_check
        %p4923 = pneg %p215
      $region54: #{tpu_custom_call.1} parent=51 // pred_check_branch
        %4925 = sbr.rel (%p4923) target = $region56
      $region55: #{tpu_custom_call.1} parent=51 // pred_region
        %s4926 = smul.u32 2, %s19
      $region56: #{tpu_custom_call.1} parent=51 // pred_fallthru
        _
    $region52: #{tpu_custom_call.1} parent=5 // pred_fallthru
      _
    %p4927 = scmp.le.s32.totalorder 2, %s14
    // Predicated region
    $region57: #{tpu_custom_call.1} parent=5 // pred_check
      %p4928 = pneg %p4927
    $region58: #{tpu_custom_call.1} parent=5 // pred_check_branch
      %4930 = sbr.rel (%p4928) target = $region60
    $region59: #{tpu_custom_call.1} parent=5 // pred_region
      %s4931 = ssub.s32 %s14, 2
      // Predicated region
      $region61: #{tpu_custom_call.1} parent=59 // pred_check
        %p4932 = pneg %p221
      $region62: #{tpu_custom_call.1} parent=59 // pred_check_branch
        %4934 = sbr.rel (%p4932) target = $region64
      $region63: #{tpu_custom_call.1} parent=59 // pred_region
        %s4935 = smul.u32 2, %s20
        %p4936 = scmp.lt.s32.totalorder %s4935, 3
        %s4937 = scalar_select %p4936, %s4935, 3
        %s4938 = smul.addr %s4937, 32
        %s4939 = smul.addr %s4938, 8
        %s4940 = scalar_lea.vmem %s8, %s4939
      $region64: #{tpu_custom_call.1} parent=59 // pred_fallthru
        _
    $region60: #{tpu_custom_call.1} parent=5 // pred_fallthru
      _
  $region6: #{tpu_custom_call.1} parent=0 // loop_footer
    %s18 = sadd.s32 1, %s14
  $region7: #{tpu_custom_call.1} parent=0 // loop_footer_branch
    %13 = sbr.rel target = $region3
  $region8: #{tpu_custom_call.1} parent=0 // loop_exit
    _

</llo_original>
